<compile_context>
chip_gen: v5e
topology: v5e:2x2
jax: 0.10.0
libtpu: 0.0.40
codegen_flags: <defaults>
</compile_context>

<pallas_src>
import jax
import jax.numpy as jnp
import numpy as np
from jax.experimental import pallas as pl
from jax.experimental.pallas import tpu as pltpu

H = W = 28
IMG = H * W          # 784 — 28x28 input is required so the final flatten yields 16 features
C = 16               # every conv in model_2 has 16 output channels


def _taps(sr, sc):
    """Flat-index offsets of the 9 conv taps at dilation (sr, sc) on the 28-wide slab."""
    return [sr * kh + sc * kw for kh in range(3) for kw in range(3)]


def fused_forward_kernel(x_ref, w1_ref, w2_ref, w3_ref, w4_ref,
                         s1_ref, b1_ref, s2_ref, b2_ref, s4_ref, b4_ref,
                         wfc_ref, bfc_ref, o_ref):
    # x_ref: (1, 1, 784)   w1_ref: (9, 16, 1)   w{2,3,4}_ref: (9, 16, 16)
    # s*/b*: (16, 1)       wfc_ref: (10, 16)    bfc_ref: (10, 1)   o_ref: (1, 10, 1)
    x = x_ref[0]                                                  # (1, 784)

    # ---- block1: conv(1->16) + ReLU + maxpool 2x2 + BN ----------------------
    d = _taps(W, 1)
    n1 = IMG - d[-1]                                              # 726
    z = w1_ref[0] * x[:, 0:n1]                                    # (16,1)*(1,n1) -> (16,n1)
    for j in range(1, 9):
        z = z + w1_ref[j] * x[:, d[j]:d[j] + n1]
    z = jnp.maximum(z, 0.0)
    p1 = n1 - (W + 1)                                             # 697
    z = jnp.maximum(jnp.maximum(z[:, 0:p1], z[:, 1:1 + p1]),
                    jnp.maximum(z[:, W:W + p1], z[:, W + 1:W + 1 + p1]))
    a = z * s1_ref[...] + b1_ref[...]
    # TODO(synk): Dropout(p=0.1) is inference-mode identity; training-mode dropout not modeled.

    # ---- block2: conv(16->16) + ReLU + maxpool 2x2 + BN ---------------------
    d = _taps(2 * W, 2)
    n2 = p1 - d[-1]                                               # 581
    z = jnp.dot(w2_ref[0], a[:, 0:n2], preferred_element_type=jnp.float32)
    for j in range(1, 9):
        z = z + jnp.dot(w2_ref[j], a[:, d[j]:d[j] + n2],
                        preferred_element_type=jnp.float32)
    z = jnp.maximum(z, 0.0)
    p2 = n2 - (2 * W + 2)                                         # 523
    z = jnp.maximum(jnp.maximum(z[:, 0:p2], z[:, 2:2 + p2]),
                    jnp.maximum(z[:, 2 * W:2 * W + p2],
                                z[:, 2 * W + 2:2 * W + 2 + p2]))
    a = z * s2_ref[...] + b2_ref[...]

    # ---- block3: conv(16->16) + ReLU -----------------------------------------
    d = _taps(4 * W, 4)
    n3 = p2 - d[-1]                                               # 291
    z = jnp.dot(w3_ref[0], a[:, 0:n3], preferred_element_type=jnp.float32)
    for j in range(1, 9):
        z = z + jnp.dot(w3_ref[j], a[:, d[j]:d[j] + n3],
                        preferred_element_type=jnp.float32)
    a = jnp.maximum(z, 0.0)

    # ---- block4: conv(16->16) + ReLU + BN -------------------------------------
    n4 = n3 - d[-1]                                               # 59
    z = jnp.dot(w4_ref[0], a[:, 0:n4], preferred_element_type=jnp.float32)
    for j in range(1, 9):
        z = z + jnp.dot(w4_ref[j], a[:, d[j]:d[j] + n4],
                        preferred_element_type=jnp.float32)
    z = jnp.maximum(z, 0.0)
    a = z * s4_ref[...] + b4_ref[...]                             # (16, 59); valid feature = lane 0

    # ---- fc1: Linear(16,10) + ReLU + log_softmax ------------------------------
    logits = jnp.dot(wfc_ref[...], a, preferred_element_type=jnp.float32)   # (10, 59)
    t = jnp.maximum(logits[:, 0:1] + bfc_ref[...], 0.0)           # (10, 1)
    m = jnp.max(t, axis=0, keepdims=True)
    lse = jnp.log(jnp.sum(jnp.exp(t - m), axis=0, keepdims=True)) + m
    o_ref[0] = t - lse


def _cost_estimate(B):
    n1, p1 = IMG - 58, IMG - 58 - 29
    n2, p2 = p1 - 116, p1 - 116 - 58
    n3 = p2 - 232
    n4 = n3 - 232
    flops = B * (2 * 9 * C * n1
                 + 2 * 9 * C * C * (n2 + n3 + n4)
                 + 2 * 10 * C * n4
                 + 8 * C * (p1 + p2))                      # pools + BN affines (approx)
    weight_bytes = (9 * C * 1 + 3 * 9 * C * C + 6 * C + 10 * C + 10) * 4
    bytes_accessed = B * IMG * 4 + weight_bytes + B * 10 * 4
    return pl.CostEstimate(flops=int(flops), transcendentals=int(B * 11),
                           bytes_accessed=int(bytes_accessed))


def model_forward(x_nchw, params):
    B = x_nchw.shape[0]
    x = x_nchw.reshape(B, 1, IMG).astype(jnp.float32)      # free layout change (no data movement)
    out = pl.pallas_call(
        fused_forward_kernel,
        out_shape=jax.ShapeDtypeStruct((B, 10, 1), jnp.float32),
        grid_spec=pl.GridSpec(
            grid=(B,),
            in_specs=[
                pl.BlockSpec((1, 1, IMG), lambda b: (b, 0, 0)),
                pl.BlockSpec((9, C, 1), lambda b: (0, 0, 0)),
                pl.BlockSpec((9, C, C), lambda b: (0, 0, 0)),
                pl.BlockSpec((9, C, C), lambda b: (0, 0, 0)),
                pl.BlockSpec((9, C, C), lambda b: (0, 0, 0)),
                pl.BlockSpec((C, 1), lambda b: (0, 0)),
                pl.BlockSpec((C, 1), lambda b: (0, 0)),
                pl.BlockSpec((C, 1), lambda b: (0, 0)),
                pl.BlockSpec((C, 1), lambda b: (0, 0)),
                pl.BlockSpec((C, 1), lambda b: (0, 0)),
                pl.BlockSpec((C, 1), lambda b: (0, 0)),
                pl.BlockSpec((10, C), lambda b: (0, 0)),
                pl.BlockSpec((10, 1), lambda b: (0, 0)),
            ],
            out_specs=pl.BlockSpec((1, 10, 1), lambda b: (b, 0, 0)),
        ),
        compiler_params=pltpu.CompilerParams(dimension_semantics=("parallel",)),
        cost_estimate=_cost_estimate(B),
    )(x, params['w1t'], params['w2t'], params['w3t'], params['w4t'],
      params['s1'], params['b1'], params['s2'], params['b2'],
      params['s4'], params['b4'], params['wfc'], params['bfc'])
    return out.reshape(B, 10)


# ----------------------------- parameters -------------------------------------
# TODO(synk): BatchNorm is implemented in inference mode (folded per-channel affine from
# deterministic gamma/beta/running stats); PyTorch training-mode batch statistics are not modeled.

def conv_taps(w):          # OIHW (Cout, Cin, 3, 3) -> (9, Cout, Cin), tap j = kh*3 + kw
    cout, cin = w.shape[0], w.shape[1]
    return jnp.transpose(w, (2, 3, 0, 1)).reshape(9, cout, cin)


def make_params():
    ks = jax.random.split(jax.random.PRNGKey(42), 12)

    def conv_w(key, cout, cin):
        return jax.random.normal(key, (cout, cin, 3, 3), jnp.float32) / np.sqrt(cin * 9.0)

    def bn_fold(kg, kb, c):
        gamma = 1.0 + 0.1 * jax.random.normal(kg, (c,), jnp.float32)
        beta = 0.05 * jax.random.normal(kb, (c,), jnp.float32)
        mean = 0.02 * jax.random.normal(jax.random.fold_in(kg, 1), (c,), jnp.float32)
        var = 1.0 + 0.1 * jax.random.uniform(jax.random.fold_in(kb, 1), (c,), jnp.float32)
        scale = gamma / jnp.sqrt(var + 1e-5)
        bias = beta - mean * scale
        return scale, bias

    w1, w2 = conv_w(ks[0], C, 1), conv_w(ks[1], C, C)
    w3, w4 = conv_w(ks[2], C, C), conv_w(ks[3], C, C)
    s1, b1 = bn_fold(ks[4], ks[5], C)
    s2, b2 = bn_fold(ks[6], ks[7], C)
    s4, b4 = bn_fold(ks[8], ks[9], C)
    wfc = jax.random.normal(ks[10], (10, C), jnp.float32) / 4.0
    bfc = 0.1 * jax.random.normal(ks[11], (10,), jnp.float32)

    raw = dict(w1=w1, w2=w2, w3=w3, w4=w4, s1=s1, b1=b1, s2=s2, b2=b2,
               s4=s4, b4=b4, wfc=wfc, bfc=bfc)
    params = dict(
        w1t=conv_taps(w1), w2t=conv_taps(w2), w3t=conv_taps(w3), w4t=conv_taps(w4),
        s1=s1.reshape(C, 1), b1=b1.reshape(C, 1),
        s2=s2.reshape(C, 1), b2=b2.reshape(C, 1),
        s4=s4.reshape(C, 1), b4=b4.reshape(C, 1),
        wfc=wfc, bfc=bfc.reshape(10, 1),
    )
    return params, raw


def ref_forward(x_nchw, raw):
    def conv(x, w):
        return jax.lax.conv_general_dilated(x, w, (1, 1), 'VALID',
                                            dimension_numbers=('NCHW', 'OIHW', 'NCHW'))

    def pool(x):
        return jax.lax.reduce_window(x, -jnp.inf, jax.lax.max,
                                     (1, 1, 2, 2), (1, 1, 2, 2), 'VALID')

    def bn(x, s, b):
        return x * s[None, :, None, None] + b[None, :, None, None]

    y = bn(pool(jax.nn.relu(conv(x_nchw, raw['w1']))), raw['s1'], raw['b1'])
    y = bn(pool(jax.nn.relu(conv(y, raw['w2']))), raw['s2'], raw['b2'])
    y = jax.nn.relu(conv(y, raw['w3']))
    y = bn(jax.nn.relu(conv(y, raw['w4'])), raw['s4'], raw['b4'])
    y = y.reshape(y.shape[0], -1)
    y = jax.nn.relu(y @ raw['wfc'].T + raw['bfc'])
    return jax.nn.log_softmax(y, axis=-1)


if __name__ == "__main__":
    params, raw = make_params()
    # Input must be 28x28 so that the final flatten is (B, 16), matching Linear(16, 10).
    x = jax.random.normal(jax.random.PRNGKey(0), (2, 1, 28, 28), jnp.float32)

    fwd = jax.jit(model_forward)
    out = jax.block_until_ready(fwd(x, params))
    assert out.shape == (2, 10)

    ref = ref_forward(x, raw)
    np.testing.assert_allclose(np.asarray(out), np.asarray(ref), rtol=1e-3, atol=1e-3)
    print("KERNEL_OK")
</pallas_src>

<mosaic_0001>
module attributes {stable_mosaic.version = 11 : i64} {
  func.func @fused_forward_kernel(%arg0: i32, %arg1: memref<1x1x784xf32, #tpu.memory_space<vmem>>, %arg2: memref<9x16x1xf32, #tpu.memory_space<vmem>>, %arg3: memref<9x16x16xf32, #tpu.memory_space<vmem>>, %arg4: memref<9x16x16xf32, #tpu.memory_space<vmem>>, %arg5: memref<9x16x16xf32, #tpu.memory_space<vmem>>, %arg6: memref<16x1xf32, #tpu.memory_space<vmem>>, %arg7: memref<16x1xf32, #tpu.memory_space<vmem>>, %arg8: memref<16x1xf32, #tpu.memory_space<vmem>>, %arg9: memref<16x1xf32, #tpu.memory_space<vmem>>, %arg10: memref<16x1xf32, #tpu.memory_space<vmem>>, %arg11: memref<16x1xf32, #tpu.memory_space<vmem>>, %arg12: memref<10x16xf32, #tpu.memory_space<vmem>>, %arg13: memref<10x1xf32, #tpu.memory_space<vmem>>, %arg14: memref<1x10x1xf32, #tpu.memory_space<vmem>>) attributes {dimension_semantics = [#tpu.dimension_semantics<parallel>], iteration_bounds = array<i64: 2>, scalar_prefetch = 0 : i64, scratch_operands = 0 : i64, tpu.core_type = #tpu.core_type<tc>, window_params = [{transform_indices = @transform_0, window_bounds = array<i64: 1, 1, 784>}, {pipeline_mode = #tpu.pipeline_mode<synchronous>, transform_indices = @transform_1, window_bounds = array<i64: 9, 16, 1>}, {pipeline_mode = #tpu.pipeline_mode<synchronous>, transform_indices = @transform_2, window_bounds = array<i64: 9, 16, 16>}, {pipeline_mode = #tpu.pipeline_mode<synchronous>, transform_indices = @transform_3, window_bounds = array<i64: 9, 16, 16>}, {pipeline_mode = #tpu.pipeline_mode<synchronous>, transform_indices = @transform_4, window_bounds = array<i64: 9, 16, 16>}, {pipeline_mode = #tpu.pipeline_mode<synchronous>, transform_indices = @transform_5, window_bounds = array<i64: 16, 1>}, {pipeline_mode = #tpu.pipeline_mode<synchronous>, transform_indices = @transform_6, window_bounds = array<i64: 16, 1>}, {pipeline_mode = #tpu.pipeline_mode<synchronous>, transform_indices = @transform_7, window_bounds = array<i64: 16, 1>}, {pipeline_mode = #tpu.pipeline_mode<synchronous>, transform_indices = @transform_8, window_bounds = array<i64: 16, 1>}, {pipeline_mode = #tpu.pipeline_mode<synchronous>, transform_indices = @transform_9, window_bounds = array<i64: 16, 1>}, {pipeline_mode = #tpu.pipeline_mode<synchronous>, transform_indices = @transform_10, window_bounds = array<i64: 16, 1>}, {pipeline_mode = #tpu.pipeline_mode<synchronous>, transform_indices = @transform_11, window_bounds = array<i64: 10, 16>}, {pipeline_mode = #tpu.pipeline_mode<synchronous>, transform_indices = @transform_12, window_bounds = array<i64: 10, 1>}, {transform_indices = @transform_13, window_bounds = array<i64: 1, 10, 1>}]} {
    %c0 = arith.constant 0 : index
    %c0_0 = arith.constant 0 : index
    %c0_1 = arith.constant 0 : index
    %0 = vector.load %arg1[%c0, %c0_0, %c0_1] : memref<1x1x784xf32, #tpu.memory_space<vmem>>, vector<1x1x784xf32>
    %1 = vector.shape_cast %0 : vector<1x1x784xf32> to vector<1x784xf32>
    %c0_2 = arith.constant 0 : index
    %c0_3 = arith.constant 0 : index
    %c0_4 = arith.constant 0 : index
    %2 = vector.load %arg2[%c0_2, %c0_3, %c0_4] : memref<9x16x1xf32, #tpu.memory_space<vmem>>, vector<1x16x1xf32>
    %3 = vector.shape_cast %2 : vector<1x16x1xf32> to vector<16x1xf32>
    %4 = vector.extract_strided_slice %1 {offsets = [0, 0], sizes = [1, 726], strides = [1, 1]} : vector<1x784xf32> to vector<1x726xf32>
    %5 = vector.broadcast %3 : vector<16x1xf32> to vector<16x726xf32>
    %6 = vector.broadcast %4 : vector<1x726xf32> to vector<16x726xf32>
    %7 = arith.mulf %5, %6 : vector<16x726xf32>
    %c1 = arith.constant 1 : index
    %c0_5 = arith.constant 0 : index
    %c0_6 = arith.constant 0 : index
    %8 = vector.load %arg2[%c1, %c0_5, %c0_6] : memref<9x16x1xf32, #tpu.memory_space<vmem>>, vector<1x16x1xf32>
    %9 = vector.shape_cast %8 : vector<1x16x1xf32> to vector<16x1xf32>
    %10 = vector.extract_strided_slice %1 {offsets = [0, 1], sizes = [1, 726], strides = [1, 1]} : vector<1x784xf32> to vector<1x726xf32>
    %11 = vector.broadcast %9 : vector<16x1xf32> to vector<16x726xf32>
    %12 = vector.broadcast %10 : vector<1x726xf32> to vector<16x726xf32>
    %13 = arith.mulf %11, %12 : vector<16x726xf32>
    %14 = arith.addf %7, %13 : vector<16x726xf32>
    %c2 = arith.constant 2 : index
    %c0_7 = arith.constant 0 : index
    %c0_8 = arith.constant 0 : index
    %15 = vector.load %arg2[%c2, %c0_7, %c0_8] : memref<9x16x1xf32, #tpu.memory_space<vmem>>, vector<1x16x1xf32>
    %16 = vector.shape_cast %15 : vector<1x16x1xf32> to vector<16x1xf32>
    %17 = vector.extract_strided_slice %1 {offsets = [0, 2], sizes = [1, 726], strides = [1, 1]} : vector<1x784xf32> to vector<1x726xf32>
    %18 = vector.broadcast %16 : vector<16x1xf32> to vector<16x726xf32>
    %19 = vector.broadcast %17 : vector<1x726xf32> to vector<16x726xf32>
    %20 = arith.mulf %18, %19 : vector<16x726xf32>
    %21 = arith.addf %14, %20 : vector<16x726xf32>
    %c3 = arith.constant 3 : index
    %c0_9 = arith.constant 0 : index
    %c0_10 = arith.constant 0 : index
    %22 = vector.load %arg2[%c3, %c0_9, %c0_10] : memref<9x16x1xf32, #tpu.memory_space<vmem>>, vector<1x16x1xf32>
    %23 = vector.shape_cast %22 : vector<1x16x1xf32> to vector<16x1xf32>
    %24 = vector.extract_strided_slice %1 {offsets = [0, 28], sizes = [1, 726], strides = [1, 1]} : vector<1x784xf32> to vector<1x726xf32>
    %25 = vector.broadcast %23 : vector<16x1xf32> to vector<16x726xf32>
    %26 = vector.broadcast %24 : vector<1x726xf32> to vector<16x726xf32>
    %27 = arith.mulf %25, %26 : vector<16x726xf32>
    %28 = arith.addf %21, %27 : vector<16x726xf32>
    %c4 = arith.constant 4 : index
    %c0_11 = arith.constant 0 : index
    %c0_12 = arith.constant 0 : index
    %29 = vector.load %arg2[%c4, %c0_11, %c0_12] : memref<9x16x1xf32, #tpu.memory_space<vmem>>, vector<1x16x1xf32>
    %30 = vector.shape_cast %29 : vector<1x16x1xf32> to vector<16x1xf32>
    %31 = vector.extract_strided_slice %1 {offsets = [0, 29], sizes = [1, 726], strides = [1, 1]} : vector<1x784xf32> to vector<1x726xf32>
    %32 = vector.broadcast %30 : vector<16x1xf32> to vector<16x726xf32>
    %33 = vector.broadcast %31 : vector<1x726xf32> to vector<16x726xf32>
    %34 = arith.mulf %32, %33 : vector<16x726xf32>
    %35 = arith.addf %28, %34 : vector<16x726xf32>
    %c5 = arith.constant 5 : index
    %c0_13 = arith.constant 0 : index
    %c0_14 = arith.constant 0 : index
    %36 = vector.load %arg2[%c5, %c0_13, %c0_14] : memref<9x16x1xf32, #tpu.memory_space<vmem>>, vector<1x16x1xf32>
    %37 = vector.shape_cast %36 : vector<1x16x1xf32> to vector<16x1xf32>
    %38 = vector.extract_strided_slice %1 {offsets = [0, 30], sizes = [1, 726], strides = [1, 1]} : vector<1x784xf32> to vector<1x726xf32>
    %39 = vector.broadcast %37 : vector<16x1xf32> to vector<16x726xf32>
    %40 = vector.broadcast %38 : vector<1x726xf32> to vector<16x726xf32>
    %41 = arith.mulf %39, %40 : vector<16x726xf32>
    %42 = arith.addf %35, %41 : vector<16x726xf32>
    %c6 = arith.constant 6 : index
    %c0_15 = arith.constant 0 : index
    %c0_16 = arith.constant 0 : index
    %43 = vector.load %arg2[%c6, %c0_15, %c0_16] : memref<9x16x1xf32, #tpu.memory_space<vmem>>, vector<1x16x1xf32>
    %44 = vector.shape_cast %43 : vector<1x16x1xf32> to vector<16x1xf32>
    %45 = vector.extract_strided_slice %1 {offsets = [0, 56], sizes = [1, 726], strides = [1, 1]} : vector<1x784xf32> to vector<1x726xf32>
    %46 = vector.broadcast %44 : vector<16x1xf32> to vector<16x726xf32>
    %47 = vector.broadcast %45 : vector<1x726xf32> to vector<16x726xf32>
    %48 = arith.mulf %46, %47 : vector<16x726xf32>
    %49 = arith.addf %42, %48 : vector<16x726xf32>
    %c7 = arith.constant 7 : index
    %c0_17 = arith.constant 0 : index
    %c0_18 = arith.constant 0 : index
    %50 = vector.load %arg2[%c7, %c0_17, %c0_18] : memref<9x16x1xf32, #tpu.memory_space<vmem>>, vector<1x16x1xf32>
    %51 = vector.shape_cast %50 : vector<1x16x1xf32> to vector<16x1xf32>
    %52 = vector.extract_strided_slice %1 {offsets = [0, 57], sizes = [1, 726], strides = [1, 1]} : vector<1x784xf32> to vector<1x726xf32>
    %53 = vector.broadcast %51 : vector<16x1xf32> to vector<16x726xf32>
    %54 = vector.broadcast %52 : vector<1x726xf32> to vector<16x726xf32>
    %55 = arith.mulf %53, %54 : vector<16x726xf32>
    %56 = arith.addf %49, %55 : vector<16x726xf32>
    %c8 = arith.constant 8 : index
    %c0_19 = arith.constant 0 : index
    %c0_20 = arith.constant 0 : index
    %57 = vector.load %arg2[%c8, %c0_19, %c0_20] : memref<9x16x1xf32, #tpu.memory_space<vmem>>, vector<1x16x1xf32>
    %58 = vector.shape_cast %57 : vector<1x16x1xf32> to vector<16x1xf32>
    %59 = vector.extract_strided_slice %1 {offsets = [0, 58], sizes = [1, 726], strides = [1, 1]} : vector<1x784xf32> to vector<1x726xf32>
    %60 = vector.broadcast %58 : vector<16x1xf32> to vector<16x726xf32>
    %61 = vector.broadcast %59 : vector<1x726xf32> to vector<16x726xf32>
    %62 = arith.mulf %60, %61 : vector<16x726xf32>
    %63 = arith.addf %56, %62 : vector<16x726xf32>
    %cst = arith.constant 0.000000e+00 : f32
    %64 = vector.broadcast %cst : f32 to vector<16x726xf32>
    %65 = arith.maximumf %63, %64 : vector<16x726xf32>
    %66 = vector.extract_strided_slice %65 {offsets = [0, 0], sizes = [16, 697], strides = [1, 1]} : vector<16x726xf32> to vector<16x697xf32>
    %67 = vector.extract_strided_slice %65 {offsets = [0, 1], sizes = [16, 697], strides = [1, 1]} : vector<16x726xf32> to vector<16x697xf32>
    %68 = arith.maximumf %66, %67 : vector<16x697xf32>
    %69 = vector.extract_strided_slice %65 {offsets = [0, 28], sizes = [16, 697], strides = [1, 1]} : vector<16x726xf32> to vector<16x697xf32>
    %70 = vector.extract_strided_slice %65 {offsets = [0, 29], sizes = [16, 697], strides = [1, 1]} : vector<16x726xf32> to vector<16x697xf32>
    %71 = arith.maximumf %69, %70 : vector<16x697xf32>
    %72 = arith.maximumf %68, %71 : vector<16x697xf32>
    %c0_21 = arith.constant 0 : index
    %c0_22 = arith.constant 0 : index
    %73 = vector.load %arg6[%c0_21, %c0_22] : memref<16x1xf32, #tpu.memory_space<vmem>>, vector<16x1xf32>
    %74 = vector.broadcast %73 : vector<16x1xf32> to vector<16x697xf32>
    %75 = arith.mulf %72, %74 : vector<16x697xf32>
    %c0_23 = arith.constant 0 : index
    %c0_24 = arith.constant 0 : index
    %76 = vector.load %arg7[%c0_23, %c0_24] : memref<16x1xf32, #tpu.memory_space<vmem>>, vector<16x1xf32>
    %77 = vector.broadcast %76 : vector<16x1xf32> to vector<16x697xf32>
    %78 = arith.addf %75, %77 : vector<16x697xf32>
    %c0_25 = arith.constant 0 : index
    %c0_26 = arith.constant 0 : index
    %c0_27 = arith.constant 0 : index
    %79 = vector.load %arg3[%c0_25, %c0_26, %c0_27] : memref<9x16x16xf32, #tpu.memory_space<vmem>>, vector<1x16x16xf32>
    %80 = vector.shape_cast %79 : vector<1x16x16xf32> to vector<16x16xf32>
    %81 = vector.extract_strided_slice %78 {offsets = [0, 0], sizes = [16, 581], strides = [1, 1]} : vector<16x697xf32> to vector<16x581xf32>
    %cst_28 = arith.constant dense<0.000000e+00> : vector<16x581xf32>
    %82 = tpu.matmul %80, %81, %cst_28 {dimension_numbers = #tpu.dot_dimension_numbers<[1], [0], [0], [1], [0, 0, 1, 1], [], []>} : vector<16x16xf32>, vector<16x581xf32>, vector<16x581xf32> -> vector<16x581xf32>
    %c1_29 = arith.constant 1 : index
    %c0_30 = arith.constant 0 : index
    %c0_31 = arith.constant 0 : index
    %83 = vector.load %arg3[%c1_29, %c0_30, %c0_31] : memref<9x16x16xf32, #tpu.memory_space<vmem>>, vector<1x16x16xf32>
    %84 = vector.shape_cast %83 : vector<1x16x16xf32> to vector<16x16xf32>
    %85 = vector.extract_strided_slice %78 {offsets = [0, 2], sizes = [16, 581], strides = [1, 1]} : vector<16x697xf32> to vector<16x581xf32>
    %cst_32 = arith.constant dense<0.000000e+00> : vector<16x581xf32>
    %86 = tpu.matmul %84, %85, %cst_32 {dimension_numbers = #tpu.dot_dimension_numbers<[1], [0], [0], [1], [0, 0, 1, 1], [], []>} : vector<16x16xf32>, vector<16x581xf32>, vector<16x581xf32> -> vector<16x581xf32>
    %87 = arith.addf %82, %86 : vector<16x581xf32>
    %c2_33 = arith.constant 2 : index
    %c0_34 = arith.constant 0 : index
    %c0_35 = arith.constant 0 : index
    %88 = vector.load %arg3[%c2_33, %c0_34, %c0_35] : memref<9x16x16xf32, #tpu.memory_space<vmem>>, vector<1x16x16xf32>
    %89 = vector.shape_cast %88 : vector<1x16x16xf32> to vector<16x16xf32>
    %90 = vector.extract_strided_slice %78 {offsets = [0, 4], sizes = [16, 581], strides = [1, 1]} : vector<16x697xf32> to vector<16x581xf32>
    %cst_36 = arith.constant dense<0.000000e+00> : vector<16x581xf32>
    %91 = tpu.matmul %89, %90, %cst_36 {dimension_numbers = #tpu.dot_dimension_numbers<[1], [0], [0], [1], [0, 0, 1, 1], [], []>} : vector<16x16xf32>, vector<16x581xf32>, vector<16x581xf32> -> vector<16x581xf32>
    %92 = arith.addf %87, %91 : vector<16x581xf32>
    %c3_37 = arith.constant 3 : index
    %c0_38 = arith.constant 0 : index
    %c0_39 = arith.constant 0 : index
    %93 = vector.load %arg3[%c3_37, %c0_38, %c0_39] : memref<9x16x16xf32, #tpu.memory_space<vmem>>, vector<1x16x16xf32>
    %94 = vector.shape_cast %93 : vector<1x16x16xf32> to vector<16x16xf32>
    %95 = vector.extract_strided_slice %78 {offsets = [0, 56], sizes = [16, 581], strides = [1, 1]} : vector<16x697xf32> to vector<16x581xf32>
    %cst_40 = arith.constant dense<0.000000e+00> : vector<16x581xf32>
    %96 = tpu.matmul %94, %95, %cst_40 {dimension_numbers = #tpu.dot_dimension_numbers<[1], [0], [0], [1], [0, 0, 1, 1], [], []>} : vector<16x16xf32>, vector<16x581xf32>, vector<16x581xf32> -> vector<16x581xf32>
    %97 = arith.addf %92, %96 : vector<16x581xf32>
    %c4_41 = arith.constant 4 : index
    %c0_42 = arith.constant 0 : index
    %c0_43 = arith.constant 0 : index
    %98 = vector.load %arg3[%c4_41, %c0_42, %c0_43] : memref<9x16x16xf32, #tpu.memory_space<vmem>>, vector<1x16x16xf32>
    %99 = vector.shape_cast %98 : vector<1x16x16xf32> to vector<16x16xf32>
    %100 = vector.extract_strided_slice %78 {offsets = [0, 58], sizes = [16, 581], strides = [1, 1]} : vector<16x697xf32> to vector<16x581xf32>
    %cst_44 = arith.constant dense<0.000000e+00> : vector<16x581xf32>
    %101 = tpu.matmul %99, %100, %cst_44 {dimension_numbers = #tpu.dot_dimension_numbers<[1], [0], [0], [1], [0, 0, 1, 1], [], []>} : vector<16x16xf32>, vector<16x581xf32>, vector<16x581xf32> -> vector<16x581xf32>
    %102 = arith.addf %97, %101 : vector<16x581xf32>
    %c5_45 = arith.constant 5 : index
    %c0_46 = arith.constant 0 : index
    %c0_47 = arith.constant 0 : index
    %103 = vector.load %arg3[%c5_45, %c0_46, %c0_47] : memref<9x16x16xf32, #tpu.memory_space<vmem>>, vector<1x16x16xf32>
    %104 = vector.shape_cast %103 : vector<1x16x16xf32> to vector<16x16xf32>
    %105 = vector.extract_strided_slice %78 {offsets = [0, 60], sizes = [16, 581], strides = [1, 1]} : vector<16x697xf32> to vector<16x581xf32>
    %cst_48 = arith.constant dense<0.000000e+00> : vector<16x581xf32>
    %106 = tpu.matmul %104, %105, %cst_48 {dimension_numbers = #tpu.dot_dimension_numbers<[1], [0], [0], [1], [0, 0, 1, 1], [], []>} : vector<16x16xf32>, vector<16x581xf32>, vector<16x581xf32> -> vector<16x581xf32>
    %107 = arith.addf %102, %106 : vector<16x581xf32>
    %c6_49 = arith.constant 6 : index
    %c0_50 = arith.constant 0 : index
    %c0_51 = arith.constant 0 : index
    %108 = vector.load %arg3[%c6_49, %c0_50, %c0_51] : memref<9x16x16xf32, #tpu.memory_space<vmem>>, vector<1x16x16xf32>
    %109 = vector.shape_cast %108 : vector<1x16x16xf32> to vector<16x16xf32>
    %110 = vector.extract_strided_slice %78 {offsets = [0, 112], sizes = [16, 581], strides = [1, 1]} : vector<16x697xf32> to vector<16x581xf32>
    %cst_52 = arith.constant dense<0.000000e+00> : vector<16x581xf32>
    %111 = tpu.matmul %109, %110, %cst_52 {dimension_numbers = #tpu.dot_dimension_numbers<[1], [0], [0], [1], [0, 0, 1, 1], [], []>} : vector<16x16xf32>, vector<16x581xf32>, vector<16x581xf32> -> vector<16x581xf32>
    %112 = arith.addf %107, %111 : vector<16x581xf32>
    %c7_53 = arith.constant 7 : index
    %c0_54 = arith.constant 0 : index
    %c0_55 = arith.constant 0 : index
    %113 = vector.load %arg3[%c7_53, %c0_54, %c0_55] : memref<9x16x16xf32, #tpu.memory_space<vmem>>, vector<1x16x16xf32>
    %114 = vector.shape_cast %113 : vector<1x16x16xf32> to vector<16x16xf32>
    %115 = vector.extract_strided_slice %78 {offsets = [0, 114], sizes = [16, 581], strides = [1, 1]} : vector<16x697xf32> to vector<16x581xf32>
    %cst_56 = arith.constant dense<0.000000e+00> : vector<16x581xf32>
    %116 = tpu.matmul %114, %115, %cst_56 {dimension_numbers = #tpu.dot_dimension_numbers<[1], [0], [0], [1], [0, 0, 1, 1], [], []>} : vector<16x16xf32>, vector<16x581xf32>, vector<16x581xf32> -> vector<16x581xf32>
    %117 = arith.addf %112, %116 : vector<16x581xf32>
    %c8_57 = arith.constant 8 : index
    %c0_58 = arith.constant 0 : index
    %c0_59 = arith.constant 0 : index
    %118 = vector.load %arg3[%c8_57, %c0_58, %c0_59] : memref<9x16x16xf32, #tpu.memory_space<vmem>>, vector<1x16x16xf32>
    %119 = vector.shape_cast %118 : vector<1x16x16xf32> to vector<16x16xf32>
    %120 = vector.extract_strided_slice %78 {offsets = [0, 116], sizes = [16, 581], strides = [1, 1]} : vector<16x697xf32> to vector<16x581xf32>
    %cst_60 = arith.constant dense<0.000000e+00> : vector<16x581xf32>
    %121 = tpu.matmul %119, %120, %cst_60 {dimension_numbers = #tpu.dot_dimension_numbers<[1], [0], [0], [1], [0, 0, 1, 1], [], []>} : vector<16x16xf32>, vector<16x581xf32>, vector<16x581xf32> -> vector<16x581xf32>
    %122 = arith.addf %117, %121 : vector<16x581xf32>
    %cst_61 = arith.constant 0.000000e+00 : f32
    %123 = vector.broadcast %cst_61 : f32 to vector<16x581xf32>
    %124 = arith.maximumf %122, %123 : vector<16x581xf32>
    %125 = vector.extract_strided_slice %124 {offsets = [0, 0], sizes = [16, 523], strides = [1, 1]} : vector<16x581xf32> to vector<16x523xf32>
    %126 = vector.extract_strided_slice %124 {offsets = [0, 2], sizes = [16, 523], strides = [1, 1]} : vector<16x581xf32> to vector<16x523xf32>
    %127 = arith.maximumf %125, %126 : vector<16x523xf32>
    %128 = vector.extract_strided_slice %124 {offsets = [0, 56], sizes = [16, 523], strides = [1, 1]} : vector<16x581xf32> to vector<16x523xf32>
    %129 = vector.extract_strided_slice %124 {offsets = [0, 58], sizes = [16, 523], strides = [1, 1]} : vector<16x581xf32> to vector<16x523xf32>
    %130 = arith.maximumf %128, %129 : vector<16x523xf32>
    %131 = arith.maximumf %127, %130 : vector<16x523xf32>
    %c0_62 = arith.constant 0 : index
    %c0_63 = arith.constant 0 : index
    %132 = vector.load %arg8[%c0_62, %c0_63] : memref<16x1xf32, #tpu.memory_space<vmem>>, vector<16x1xf32>
    %133 = vector.broadcast %132 : vector<16x1xf32> to vector<16x523xf32>
    %134 = arith.mulf %131, %133 : vector<16x523xf32>
    %c0_64 = arith.constant 0 : index
    %c0_65 = arith.constant 0 : index
    %135 = vector.load %arg9[%c0_64, %c0_65] : memref<16x1xf32, #tpu.memory_space<vmem>>, vector<16x1xf32>
    %136 = vector.broadcast %135 : vector<16x1xf32> to vector<16x523xf32>
    %137 = arith.addf %134, %136 : vector<16x523xf32>
    %c0_66 = arith.constant 0 : index
    %c0_67 = arith.constant 0 : index
    %c0_68 = arith.constant 0 : index
    %138 = vector.load %arg4[%c0_66, %c0_67, %c0_68] : memref<9x16x16xf32, #tpu.memory_space<vmem>>, vector<1x16x16xf32>
    %139 = vector.shape_cast %138 : vector<1x16x16xf32> to vector<16x16xf32>
    %140 = vector.extract_strided_slice %137 {offsets = [0, 0], sizes = [16, 291], strides = [1, 1]} : vector<16x523xf32> to vector<16x291xf32>
    %cst_69 = arith.constant dense<0.000000e+00> : vector<16x291xf32>
    %141 = tpu.matmul %139, %140, %cst_69 {dimension_numbers = #tpu.dot_dimension_numbers<[1], [0], [0], [1], [0, 0, 1, 1], [], []>} : vector<16x16xf32>, vector<16x291xf32>, vector<16x291xf32> -> vector<16x291xf32>
    %c1_70 = arith.constant 1 : index
    %c0_71 = arith.constant 0 : index
    %c0_72 = arith.constant 0 : index
    %142 = vector.load %arg4[%c1_70, %c0_71, %c0_72] : memref<9x16x16xf32, #tpu.memory_space<vmem>>, vector<1x16x16xf32>
    %143 = vector.shape_cast %142 : vector<1x16x16xf32> to vector<16x16xf32>
    %144 = vector.extract_strided_slice %137 {offsets = [0, 4], sizes = [16, 291], strides = [1, 1]} : vector<16x523xf32> to vector<16x291xf32>
    %cst_73 = arith.constant dense<0.000000e+00> : vector<16x291xf32>
    %145 = tpu.matmul %143, %144, %cst_73 {dimension_numbers = #tpu.dot_dimension_numbers<[1], [0], [0], [1], [0, 0, 1, 1], [], []>} : vector<16x16xf32>, vector<16x291xf32>, vector<16x291xf32> -> vector<16x291xf32>
    %146 = arith.addf %141, %145 : vector<16x291xf32>
    %c2_74 = arith.constant 2 : index
    %c0_75 = arith.constant 0 : index
    %c0_76 = arith.constant 0 : index
    %147 = vector.load %arg4[%c2_74, %c0_75, %c0_76] : memref<9x16x16xf32, #tpu.memory_space<vmem>>, vector<1x16x16xf32>
    %148 = vector.shape_cast %147 : vector<1x16x16xf32> to vector<16x16xf32>
    %149 = vector.extract_strided_slice %137 {offsets = [0, 8], sizes = [16, 291], strides = [1, 1]} : vector<16x523xf32> to vector<16x291xf32>
    %cst_77 = arith.constant dense<0.000000e+00> : vector<16x291xf32>
    %150 = tpu.matmul %148, %149, %cst_77 {dimension_numbers = #tpu.dot_dimension_numbers<[1], [0], [0], [1], [0, 0, 1, 1], [], []>} : vector<16x16xf32>, vector<16x291xf32>, vector<16x291xf32> -> vector<16x291xf32>
    %151 = arith.addf %146, %150 : vector<16x291xf32>
    %c3_78 = arith.constant 3 : index
    %c0_79 = arith.constant 0 : index
    %c0_80 = arith.constant 0 : index
    %152 = vector.load %arg4[%c3_78, %c0_79, %c0_80] : memref<9x16x16xf32, #tpu.memory_space<vmem>>, vector<1x16x16xf32>
    %153 = vector.shape_cast %152 : vector<1x16x16xf32> to vector<16x16xf32>
    %154 = vector.extract_strided_slice %137 {offsets = [0, 112], sizes = [16, 291], strides = [1, 1]} : vector<16x523xf32> to vector<16x291xf32>
    %cst_81 = arith.constant dense<0.000000e+00> : vector<16x291xf32>
    %155 = tpu.matmul %153, %154, %cst_81 {dimension_numbers = #tpu.dot_dimension_numbers<[1], [0], [0], [1], [0, 0, 1, 1], [], []>} : vector<16x16xf32>, vector<16x291xf32>, vector<16x291xf32> -> vector<16x291xf32>
    %156 = arith.addf %151, %155 : vector<16x291xf32>
    %c4_82 = arith.constant 4 : index
    %c0_83 = arith.constant 0 : index
    %c0_84 = arith.constant 0 : index
    %157 = vector.load %arg4[%c4_82, %c0_83, %c0_84] : memref<9x16x16xf32, #tpu.memory_space<vmem>>, vector<1x16x16xf32>
    %158 = vector.shape_cast %157 : vector<1x16x16xf32> to vector<16x16xf32>
    %159 = vector.extract_strided_slice %137 {offsets = [0, 116], sizes = [16, 291], strides = [1, 1]} : vector<16x523xf32> to vector<16x291xf32>
    %cst_85 = arith.constant dense<0.000000e+00> : vector<16x291xf32>
    %160 = tpu.matmul %158, %159, %cst_85 {dimension_numbers = #tpu.dot_dimension_numbers<[1], [0], [0], [1], [0, 0, 1, 1], [], []>} : vector<16x16xf32>, vector<16x291xf32>, vector<16x291xf32> -> vector<16x291xf32>
    %161 = arith.addf %156, %160 : vector<16x291xf32>
    %c5_86 = arith.constant 5 : index
    %c0_87 = arith.constant 0 : index
    %c0_88 = arith.constant 0 : index
    %162 = vector.load %arg4[%c5_86, %c0_87, %c0_88] : memref<9x16x16xf32, #tpu.memory_space<vmem>>, vector<1x16x16xf32>
    %163 = vector.shape_cast %162 : vector<1x16x16xf32> to vector<16x16xf32>
    %164 = vector.extract_strided_slice %137 {offsets = [0, 120], sizes = [16, 291], strides = [1, 1]} : vector<16x523xf32> to vector<16x291xf32>
    %cst_89 = arith.constant dense<0.000000e+00> : vector<16x291xf32>
    %165 = tpu.matmul %163, %164, %cst_89 {dimension_numbers = #tpu.dot_dimension_numbers<[1], [0], [0], [1], [0, 0, 1, 1], [], []>} : vector<16x16xf32>, vector<16x291xf32>, vector<16x291xf32> -> vector<16x291xf32>
    %166 = arith.addf %161, %165 : vector<16x291xf32>
    %c6_90 = arith.constant 6 : index
    %c0_91 = arith.constant 0 : index
    %c0_92 = arith.constant 0 : index
    %167 = vector.load %arg4[%c6_90, %c0_91, %c0_92] : memref<9x16x16xf32, #tpu.memory_space<vmem>>, vector<1x16x16xf32>
    %168 = vector.shape_cast %167 : vector<1x16x16xf32> to vector<16x16xf32>
    %169 = vector.extract_strided_slice %137 {offsets = [0, 224], sizes = [16, 291], strides = [1, 1]} : vector<16x523xf32> to vector<16x291xf32>
    %cst_93 = arith.constant dense<0.000000e+00> : vector<16x291xf32>
    %170 = tpu.matmul %168, %169, %cst_93 {dimension_numbers = #tpu.dot_dimension_numbers<[1], [0], [0], [1], [0, 0, 1, 1], [], []>} : vector<16x16xf32>, vector<16x291xf32>, vector<16x291xf32> -> vector<16x291xf32>
    %171 = arith.addf %166, %170 : vector<16x291xf32>
    %c7_94 = arith.constant 7 : index
    %c0_95 = arith.constant 0 : index
    %c0_96 = arith.constant 0 : index
    %172 = vector.load %arg4[%c7_94, %c0_95, %c0_96] : memref<9x16x16xf32, #tpu.memory_space<vmem>>, vector<1x16x16xf32>
    %173 = vector.shape_cast %172 : vector<1x16x16xf32> to vector<16x16xf32>
    %174 = vector.extract_strided_slice %137 {offsets = [0, 228], sizes = [16, 291], strides = [1, 1]} : vector<16x523xf32> to vector<16x291xf32>
    %cst_97 = arith.constant dense<0.000000e+00> : vector<16x291xf32>
    %175 = tpu.matmul %173, %174, %cst_97 {dimension_numbers = #tpu.dot_dimension_numbers<[1], [0], [0], [1], [0, 0, 1, 1], [], []>} : vector<16x16xf32>, vector<16x291xf32>, vector<16x291xf32> -> vector<16x291xf32>
    %176 = arith.addf %171, %175 : vector<16x291xf32>
    %c8_98 = arith.constant 8 : index
    %c0_99 = arith.constant 0 : index
    %c0_100 = arith.constant 0 : index
    %177 = vector.load %arg4[%c8_98, %c0_99, %c0_100] : memref<9x16x16xf32, #tpu.memory_space<vmem>>, vector<1x16x16xf32>
    %178 = vector.shape_cast %177 : vector<1x16x16xf32> to vector<16x16xf32>
    %179 = vector.extract_strided_slice %137 {offsets = [0, 232], sizes = [16, 291], strides = [1, 1]} : vector<16x523xf32> to vector<16x291xf32>
    %cst_101 = arith.constant dense<0.000000e+00> : vector<16x291xf32>
    %180 = tpu.matmul %178, %179, %cst_101 {dimension_numbers = #tpu.dot_dimension_numbers<[1], [0], [0], [1], [0, 0, 1, 1], [], []>} : vector<16x16xf32>, vector<16x291xf32>, vector<16x291xf32> -> vector<16x291xf32>
    %181 = arith.addf %176, %180 : vector<16x291xf32>
    %cst_102 = arith.constant 0.000000e+00 : f32
    %182 = vector.broadcast %cst_102 : f32 to vector<16x291xf32>
    %183 = arith.maximumf %181, %182 : vector<16x291xf32>
    %c0_103 = arith.constant 0 : index
    %c0_104 = arith.constant 0 : index
    %c0_105 = arith.constant 0 : index
    %184 = vector.load %arg5[%c0_103, %c0_104, %c0_105] : memref<9x16x16xf32, #tpu.memory_space<vmem>>, vector<1x16x16xf32>
    %185 = vector.shape_cast %184 : vector<1x16x16xf32> to vector<16x16xf32>
    %186 = vector.extract_strided_slice %183 {offsets = [0, 0], sizes = [16, 59], strides = [1, 1]} : vector<16x291xf32> to vector<16x59xf32>
    %cst_106 = arith.constant dense<0.000000e+00> : vector<16x59xf32>
    %187 = tpu.matmul %185, %186, %cst_106 {dimension_numbers = #tpu.dot_dimension_numbers<[1], [0], [0], [1], [0, 0, 1, 1], [], []>} : vector<16x16xf32>, vector<16x59xf32>, vector<16x59xf32> -> vector<16x59xf32>
    %c1_107 = arith.constant 1 : index
    %c0_108 = arith.constant 0 : index
    %c0_109 = arith.constant 0 : index
    %188 = vector.load %arg5[%c1_107, %c0_108, %c0_109] : memref<9x16x16xf32, #tpu.memory_space<vmem>>, vector<1x16x16xf32>
    %189 = vector.shape_cast %188 : vector<1x16x16xf32> to vector<16x16xf32>
    %190 = vector.extract_strided_slice %183 {offsets = [0, 4], sizes = [16, 59], strides = [1, 1]} : vector<16x291xf32> to vector<16x59xf32>
    %cst_110 = arith.constant dense<0.000000e+00> : vector<16x59xf32>
    %191 = tpu.matmul %189, %190, %cst_110 {dimension_numbers = #tpu.dot_dimension_numbers<[1], [0], [0], [1], [0, 0, 1, 1], [], []>} : vector<16x16xf32>, vector<16x59xf32>, vector<16x59xf32> -> vector<16x59xf32>
    %192 = arith.addf %187, %191 : vector<16x59xf32>
    %c2_111 = arith.constant 2 : index
    %c0_112 = arith.constant 0 : index
    %c0_113 = arith.constant 0 : index
    %193 = vector.load %arg5[%c2_111, %c0_112, %c0_113] : memref<9x16x16xf32, #tpu.memory_space<vmem>>, vector<1x16x16xf32>
    %194 = vector.shape_cast %193 : vector<1x16x16xf32> to vector<16x16xf32>
    %195 = vector.extract_strided_slice %183 {offsets = [0, 8], sizes = [16, 59], strides = [1, 1]} : vector<16x291xf32> to vector<16x59xf32>
    %cst_114 = arith.constant dense<0.000000e+00> : vector<16x59xf32>
    %196 = tpu.matmul %194, %195, %cst_114 {dimension_numbers = #tpu.dot_dimension_numbers<[1], [0], [0], [1], [0, 0, 1, 1], [], []>} : vector<16x16xf32>, vector<16x59xf32>, vector<16x59xf32> -> vector<16x59xf32>
    %197 = arith.addf %192, %196 : vector<16x59xf32>
    %c3_115 = arith.constant 3 : index
    %c0_116 = arith.constant 0 : index
    %c0_117 = arith.constant 0 : index
    %198 = vector.load %arg5[%c3_115, %c0_116, %c0_117] : memref<9x16x16xf32, #tpu.memory_space<vmem>>, vector<1x16x16xf32>
    %199 = vector.shape_cast %198 : vector<1x16x16xf32> to vector<16x16xf32>
    %200 = vector.extract_strided_slice %183 {offsets = [0, 112], sizes = [16, 59], strides = [1, 1]} : vector<16x291xf32> to vector<16x59xf32>
    %cst_118 = arith.constant dense<0.000000e+00> : vector<16x59xf32>
    %201 = tpu.matmul %199, %200, %cst_118 {dimension_numbers = #tpu.dot_dimension_numbers<[1], [0], [0], [1], [0, 0, 1, 1], [], []>} : vector<16x16xf32>, vector<16x59xf32>, vector<16x59xf32> -> vector<16x59xf32>
    %202 = arith.addf %197, %201 : vector<16x59xf32>
    %c4_119 = arith.constant 4 : index
    %c0_120 = arith.constant 0 : index
    %c0_121 = arith.constant 0 : index
    %203 = vector.load %arg5[%c4_119, %c0_120, %c0_121] : memref<9x16x16xf32, #tpu.memory_space<vmem>>, vector<1x16x16xf32>
    %204 = vector.shape_cast %203 : vector<1x16x16xf32> to vector<16x16xf32>
    %205 = vector.extract_strided_slice %183 {offsets = [0, 116], sizes = [16, 59], strides = [1, 1]} : vector<16x291xf32> to vector<16x59xf32>
    %cst_122 = arith.constant dense<0.000000e+00> : vector<16x59xf32>
    %206 = tpu.matmul %204, %205, %cst_122 {dimension_numbers = #tpu.dot_dimension_numbers<[1], [0], [0], [1], [0, 0, 1, 1], [], []>} : vector<16x16xf32>, vector<16x59xf32>, vector<16x59xf32> -> vector<16x59xf32>
    %207 = arith.addf %202, %206 : vector<16x59xf32>
    %c5_123 = arith.constant 5 : index
    %c0_124 = arith.constant 0 : index
    %c0_125 = arith.constant 0 : index
    %208 = vector.load %arg5[%c5_123, %c0_124, %c0_125] : memref<9x16x16xf32, #tpu.memory_space<vmem>>, vector<1x16x16xf32>
    %209 = vector.shape_cast %208 : vector<1x16x16xf32> to vector<16x16xf32>
    %210 = vector.extract_strided_slice %183 {offsets = [0, 120], sizes = [16, 59], strides = [1, 1]} : vector<16x291xf32> to vector<16x59xf32>
    %cst_126 = arith.constant dense<0.000000e+00> : vector<16x59xf32>
    %211 = tpu.matmul %209, %210, %cst_126 {dimension_numbers = #tpu.dot_dimension_numbers<[1], [0], [0], [1], [0, 0, 1, 1], [], []>} : vector<16x16xf32>, vector<16x59xf32>, vector<16x59xf32> -> vector<16x59xf32>
    %212 = arith.addf %207, %211 : vector<16x59xf32>
    %c6_127 = arith.constant 6 : index
    %c0_128 = arith.constant 0 : index
    %c0_129 = arith.constant 0 : index
    %213 = vector.load %arg5[%c6_127, %c0_128, %c0_129] : memref<9x16x16xf32, #tpu.memory_space<vmem>>, vector<1x16x16xf32>
    %214 = vector.shape_cast %213 : vector<1x16x16xf32> to vector<16x16xf32>
    %215 = vector.extract_strided_slice %183 {offsets = [0, 224], sizes = [16, 59], strides = [1, 1]} : vector<16x291xf32> to vector<16x59xf32>
    %cst_130 = arith.constant dense<0.000000e+00> : vector<16x59xf32>
    %216 = tpu.matmul %214, %215, %cst_130 {dimension_numbers = #tpu.dot_dimension_numbers<[1], [0], [0], [1], [0, 0, 1, 1], [], []>} : vector<16x16xf32>, vector<16x59xf32>, vector<16x59xf32> -> vector<16x59xf32>
    %217 = arith.addf %212, %216 : vector<16x59xf32>
    %c7_131 = arith.constant 7 : index
    %c0_132 = arith.constant 0 : index
    %c0_133 = arith.constant 0 : index
    %218 = vector.load %arg5[%c7_131, %c0_132, %c0_133] : memref<9x16x16xf32, #tpu.memory_space<vmem>>, vector<1x16x16xf32>
    %219 = vector.shape_cast %218 : vector<1x16x16xf32> to vector<16x16xf32>
    %220 = vector.extract_strided_slice %183 {offsets = [0, 228], sizes = [16, 59], strides = [1, 1]} : vector<16x291xf32> to vector<16x59xf32>
    %cst_134 = arith.constant dense<0.000000e+00> : vector<16x59xf32>
    %221 = tpu.matmul %219, %220, %cst_134 {dimension_numbers = #tpu.dot_dimension_numbers<[1], [0], [0], [1], [0, 0, 1, 1], [], []>} : vector<16x16xf32>, vector<16x59xf32>, vector<16x59xf32> -> vector<16x59xf32>
    %222 = arith.addf %217, %221 : vector<16x59xf32>
    %c8_135 = arith.constant 8 : index
    %c0_136 = arith.constant 0 : index
    %c0_137 = arith.constant 0 : index
    %223 = vector.load %arg5[%c8_135, %c0_136, %c0_137] : memref<9x16x16xf32, #tpu.memory_space<vmem>>, vector<1x16x16xf32>
    %224 = vector.shape_cast %223 : vector<1x16x16xf32> to vector<16x16xf32>
    %225 = vector.extract_strided_slice %183 {offsets = [0, 232], sizes = [16, 59], strides = [1, 1]} : vector<16x291xf32> to vector<16x59xf32>
    %cst_138 = arith.constant dense<0.000000e+00> : vector<16x59xf32>
    %226 = tpu.matmul %224, %225, %cst_138 {dimension_numbers = #tpu.dot_dimension_numbers<[1], [0], [0], [1], [0, 0, 1, 1], [], []>} : vector<16x16xf32>, vector<16x59xf32>, vector<16x59xf32> -> vector<16x59xf32>
    %227 = arith.addf %222, %226 : vector<16x59xf32>
    %cst_139 = arith.constant 0.000000e+00 : f32
    %228 = vector.broadcast %cst_139 : f32 to vector<16x59xf32>
    %229 = arith.maximumf %227, %228 : vector<16x59xf32>
    %c0_140 = arith.constant 0 : index
    %c0_141 = arith.constant 0 : index
    %230 = vector.load %arg10[%c0_140, %c0_141] : memref<16x1xf32, #tpu.memory_space<vmem>>, vector<16x1xf32>
    %231 = vector.broadcast %230 : vector<16x1xf32> to vector<16x59xf32>
    %232 = arith.mulf %229, %231 : vector<16x59xf32>
    %c0_142 = arith.constant 0 : index
    %c0_143 = arith.constant 0 : index
    %233 = vector.load %arg11[%c0_142, %c0_143] : memref<16x1xf32, #tpu.memory_space<vmem>>, vector<16x1xf32>
    %234 = vector.broadcast %233 : vector<16x1xf32> to vector<16x59xf32>
    %235 = arith.addf %232, %234 : vector<16x59xf32>
    %c0_144 = arith.constant 0 : index
    %c0_145 = arith.constant 0 : index
    %236 = vector.load %arg12[%c0_144, %c0_145] : memref<10x16xf32, #tpu.memory_space<vmem>>, vector<10x16xf32>
    %cst_146 = arith.constant dense<0.000000e+00> : vector<10x59xf32>
    %237 = tpu.matmul %236, %235, %cst_146 {dimension_numbers = #tpu.dot_dimension_numbers<[1], [0], [0], [1], [0, 0, 1, 1], [], []>} : vector<10x16xf32>, vector<16x59xf32>, vector<10x59xf32> -> vector<10x59xf32>
    %238 = vector.extract_strided_slice %237 {offsets = [0, 0], sizes = [10, 1], strides = [1, 1]} : vector<10x59xf32> to vector<10x1xf32>
    %c0_147 = arith.constant 0 : index
    %c0_148 = arith.constant 0 : index
    %239 = vector.load %arg13[%c0_147, %c0_148] : memref<10x1xf32, #tpu.memory_space<vmem>>, vector<10x1xf32>
    %240 = arith.addf %238, %239 : vector<10x1xf32>
    %cst_149 = arith.constant 0.000000e+00 : f32
    %241 = vector.broadcast %cst_149 : f32 to vector<10x1xf32>
    %242 = arith.maximumf %240, %241 : vector<10x1xf32>
    %cst_150 = arith.constant dense<0xFF800000> : vector<1xf32>
    %243 = vector.multi_reduction <maximumf>, %242, %cst_150 [0] : vector<10x1xf32> to vector<1xf32>
    %244 = vector.shape_cast %243 : vector<1xf32> to vector<1x1xf32>
    %245 = vector.broadcast %244 : vector<1x1xf32> to vector<10x1xf32>
    %246 = arith.subf %242, %245 : vector<10x1xf32>
    %247 = math.exp %246 : vector<10x1xf32>
    %cst_151 = arith.constant dense<0.000000e+00> : vector<1xf32>
    %248 = vector.multi_reduction <add>, %247, %cst_151 [0] : vector<10x1xf32> to vector<1xf32>
    %249 = vector.shape_cast %248 : vector<1xf32> to vector<1x1xf32>
    %250 = math.log %249 : vector<1x1xf32>
    %251 = arith.addf %250, %244 : vector<1x1xf32>
    %252 = vector.broadcast %251 : vector<1x1xf32> to vector<10x1xf32>
    %253 = arith.subf %242, %252 : vector<10x1xf32>
    %c0_152 = arith.constant 0 : index
    %c0_153 = arith.constant 0 : index
    %c0_154 = arith.constant 0 : index
    %254 = vector.load %arg14[%c0_152, %c0_153, %c0_154] : memref<1x10x1xf32, #tpu.memory_space<vmem>>, vector<1x10x1xf32>
    %255 = vector.shape_cast %254 : vector<1x10x1xf32> to vector<10x1xf32>
    %256 = vector.shape_cast %253 : vector<10x1xf32> to vector<1x10x1xf32>
    tpu.vector_store %arg14[%c0_152, %c0_153, %c0_154], %256 {strides = array<i32>} : memref<1x10x1xf32, #tpu.memory_space<vmem>>, vector<1x10x1xf32>,
    return
  }
  func.func @transform_0(%arg0: i32) -> (i32, i32, i32) {
    %c0_i32 = arith.constant 0 : i32
    %c0_i32_0 = arith.constant 0 : i32
    %c0_i32_1 = arith.constant 0 : i32
    return %arg0, %c0_i32, %c0_i32_0 : i32, i32, i32
  }
  func.func @transform_1(%arg0: i32) -> (i32, i32, i32) {
    %c0_i32 = arith.constant 0 : i32
    %c0_i32_0 = arith.constant 0 : i32
    %c0_i32_1 = arith.constant 0 : i32
    %c0_i32_2 = arith.constant 0 : i32
    return %c0_i32, %c0_i32_0, %c0_i32_1 : i32, i32, i32
  }
  func.func @transform_2(%arg0: i32) -> (i32, i32, i32) {
    %c0_i32 = arith.constant 0 : i32
    %c0_i32_0 = arith.constant 0 : i32
    %c0_i32_1 = arith.constant 0 : i32
    %c0_i32_2 = arith.constant 0 : i32
    return %c0_i32, %c0_i32_0, %c0_i32_1 : i32, i32, i32
  }
  func.func @transform_3(%arg0: i32) -> (i32, i32, i32) {
    %c0_i32 = arith.constant 0 : i32
    %c0_i32_0 = arith.constant 0 : i32
    %c0_i32_1 = arith.constant 0 : i32
    %c0_i32_2 = arith.constant 0 : i32
    return %c0_i32, %c0_i32_0, %c0_i32_1 : i32, i32, i32
  }
  func.func @transform_4(%arg0: i32) -> (i32, i32, i32) {
    %c0_i32 = arith.constant 0 : i32
    %c0_i32_0 = arith.constant 0 : i32
    %c0_i32_1 = arith.constant 0 : i32
    %c0_i32_2 = arith.constant 0 : i32
    return %c0_i32, %c0_i32_0, %c0_i32_1 : i32, i32, i32
  }
  func.func @transform_5(%arg0: i32) -> (i32, i32) {
    %c0_i32 = arith.constant 0 : i32
    %c0_i32_0 = arith.constant 0 : i32
    %c0_i32_1 = arith.constant 0 : i32
    return %c0_i32, %c0_i32_0 : i32, i32
  }
  func.func @transform_6(%arg0: i32) -> (i32, i32) {
    %c0_i32 = arith.constant 0 : i32
    %c0_i32_0 = arith.constant 0 : i32
    %c0_i32_1 = arith.constant 0 : i32
    return %c0_i32, %c0_i32_0 : i32, i32
  }
  func.func @transform_7(%arg0: i32) -> (i32, i32) {
    %c0_i32 = arith.constant 0 : i32
    %c0_i32_0 = arith.constant 0 : i32
    %c0_i32_1 = arith.constant 0 : i32
    return %c0_i32, %c0_i32_0 : i32, i32
  }
  func.func @transform_8(%arg0: i32) -> (i32, i32) {
    %c0_i32 = arith.constant 0 : i32
    %c0_i32_0 = arith.constant 0 : i32
    %c0_i32_1 = arith.constant 0 : i32
    return %c0_i32, %c0_i32_0 : i32, i32
  }
  func.func @transform_9(%arg0: i32) -> (i32, i32) {
    %c0_i32 = arith.constant 0 : i32
    %c0_i32_0 = arith.constant 0 : i32
    %c0_i32_1 = arith.constant 0 : i32
    return %c0_i32, %c0_i32_0 : i32, i32
  }
  func.func @transform_10(%arg0: i32) -> (i32, i32) {
    %c0_i32 = arith.constant 0 : i32
    %c0_i32_0 = arith.constant 0 : i32
    %c0_i32_1 = arith.constant 0 : i32
    return %c0_i32, %c0_i32_0 : i32, i32
  }
  func.func @transform_11(%arg0: i32) -> (i32, i32) {
    %c0_i32 = arith.constant 0 : i32
    %c0_i32_0 = arith.constant 0 : i32
    %c0_i32_1 = arith.constant 0 : i32
    return %c0_i32, %c0_i32_0 : i32, i32
  }
  func.func @transform_12(%arg0: i32) -> (i32, i32) {
    %c0_i32 = arith.constant 0 : i32
    %c0_i32_0 = arith.constant 0 : i32
    %c0_i32_1 = arith.constant 0 : i32
    return %c0_i32, %c0_i32_0 : i32, i32
  }
  func.func @transform_13(%arg0: i32) -> (i32, i32, i32) {
    %c0_i32 = arith.constant 0 : i32
    %c0_i32_0 = arith.constant 0 : i32
    %c0_i32_1 = arith.constant 0 : i32
    return %arg0, %c0_i32, %c0_i32_0 : i32, i32, i32
  }
}

</mosaic_0001>

<llo_original>
// kernel: model_forward.1
$region0: #{model_forward.1}
  #allocation0 [shape = 'u32[]', space=smem, size = 0x4, offset = 0x4, fixed_abs, tag = 'smem constant byte address 0x4 - core index']
  #allocation1 [shape = 'u32[72,128]{1,0:T(1,128)}', space=vmem, size = 0x9000, scoped, tag = 'internal scratch']
  %s0 = inlined_call_operand.vmem [shape: f32[2,1,784], index: 0, kind: input, shape index: {}]
  %s1 = inlined_call_operand.vmem [shape: f32[9,16,1], index: 1, kind: input, shape index: {}]
  %s2 = inlined_call_operand.vmem [shape: f32[9,16,16], index: 2, kind: input, shape index: {}]
  %s3 = inlined_call_operand.vmem [shape: f32[9,16,16], index: 3, kind: input, shape index: {}]
  %s4 = inlined_call_operand.vmem [shape: f32[9,16,16], index: 4, kind: input, shape index: {}]
  %s5 = inlined_call_operand.vmem [shape: f32[16,1], index: 5, kind: input, shape index: {}]
  %s6 = inlined_call_operand.vmem [shape: f32[16,1], index: 6, kind: input, shape index: {}]
  %s7 = inlined_call_operand.vmem [shape: f32[16,1], index: 7, kind: input, shape index: {}]
  %s8 = inlined_call_operand.vmem [shape: f32[16,1], index: 8, kind: input, shape index: {}]
  %s9 = inlined_call_operand.vmem [shape: f32[16,1], index: 9, kind: input, shape index: {}]
  %s10 = inlined_call_operand.vmem [shape: f32[16,1], index: 10, kind: input, shape index: {}]
  %s11 = inlined_call_operand.vmem [shape: f32[10,16], index: 11, kind: input, shape index: {}]
  %s12 = inlined_call_operand.vmem [shape: f32[10,1], index: 12, kind: input, shape index: {}]
  %s13 = inlined_call_operand.vmem [shape: f32[2,10,1], index: 13, kind: output, shape index: {}]
  %s14 = sld [smem:[#allocation0]]
  $region85: #{model_forward.1} parent=0
    _
  %s16 = ssub.s32 1, %s14
  %s17 = scalar_select 0, %s16, %s14
  loop: start=0, step=1, limit=4
  $region2: #{model_forward.1} parent=0 // loop_pre_header
    _
  $region3: #{model_forward.1} parent=0 // loop_header
    %s19 = sphi 0, %s23
    %p20 = scmp.ge.s32.totalorder %s19, 4
    %s29 = sphi 0, %s31
    %s32 = sphi 0, %s29
    %s33 = sphi 0, %s32
    %s49 = sphi 0, %s33
    %s53 = sphi 0, %s53
    %s55 = sphi 0, %s53
    %s56 = sphi 0, %s55
    %s70 = sphi 0, %s56
    %s74 = sphi 0, %s74
    %s76 = sphi 0, %s74
    %s77 = sphi 0, %s76
    %s91 = sphi 0, %s77
    %s95 = sphi 0, %s95
    %s97 = sphi 0, %s95
    %s98 = sphi 0, %s97
    %s112 = sphi 0, %s98
    %s116 = sphi 0, %s116
    %s118 = sphi 0, %s116
    %s119 = sphi 0, %s118
    %s133 = sphi 0, %s119
    %s137 = sphi 0, %s137
    %s139 = sphi 0, %s137
    %s140 = sphi 0, %s139
    %s154 = sphi 0, %s140
    %s158 = sphi 0, %s158
    %s160 = sphi 0, %s158
    %s161 = sphi 0, %s160
    %s175 = sphi 0, %s161
    %s179 = sphi 0, %s179
    %s181 = sphi 0, %s179
    %s182 = sphi 0, %s181
    %s196 = sphi 0, %s182
    %s200 = sphi 0, %s200
    %s202 = sphi 0, %s200
    %s203 = sphi 0, %s202
    %s217 = sphi 0, %s203
    %s221 = sphi 0, %s221
    %s223 = sphi 0, %s221
    %s224 = sphi 0, %s223
    %s238 = sphi 0, %s224
    %s242 = sphi 0, %s242
    %s244 = sphi 0, %s242
    %s245 = sphi 0, %s244
    %s259 = sphi 0, %s245
    %s263 = sphi 0, %s263
    %s265 = sphi 0, %s263
    %s266 = sphi 0, %s265
    %s280 = sphi 0, %s266
    %s284 = sphi 0, %s284
    %s286 = sphi 0, %s284
    %s287 = sphi 0, %s286
    %s301 = sphi 0, %s287
    %s307 = sphi 0, %s309
    %s310 = sphi 0, %s307
    %s311 = sphi 0, %s310
    %s327 = sphi 0, %s311
  $region4: #{model_forward.1} parent=0 // loop_header_branch
    %22 = sbr.rel (%p20) target = $region8
  $region5: #{model_forward.1} parent=0 // loop_body
    %s24 = ssub.s32 %s19, 1
    %s25 = ssub.s32 %s19, 2
    %s26 = sadd.s32 %s19, 1
    %s27 = ssub.s32 %s19, %s26
    %p28 = scmp.eq.s32.totalorder %s27, 0
    %s30 = sadd.s32 %s29, 1
    %s31 = scalar_select %p28, %s29, %s30
    %p34 = pneg %p28
    %p35 = scmp.eq.s32.totalorder %s19, 1
    %p36 = por %p34, %p35
    %p37 = scmp.ne.s32.totalorder %s29, %s32
    %p38 = scmp.eq.s32.totalorder %s19, 0
    %p39 = por %p37, %p38
    %p40 = scmp.ne.s32.totalorder %s29, %s32
    %p41 = scmp.eq.s32.totalorder %s24, 1
    %p42 = por %p40, %p41
    %p43 = scmp.ne.s32.totalorder %s32, %s33
    %p44 = scmp.eq.s32.totalorder %s24, 0
    %p45 = por %p43, %p44
    %p46 = scmp.ne.s32.totalorder %s32, %s33
    %p47 = scmp.eq.s32.totalorder %s25, 1
    %p48 = por %p46, %p47
    %p50 = scmp.ne.s32.totalorder %s33, %s49
    %p51 = scmp.eq.s32.totalorder %s25, 0
    %p52 = por %p50, %p51
    %s54 = sadd.s32 %s53, 1
    %p57 = scmp.eq.s32.totalorder %s19, 1
    %p58 = scmp.ne.s32.totalorder %s53, %s55
    %p59 = scmp.eq.s32.totalorder %s19, 0
    %p60 = por %p58, %p59
    %p61 = scmp.ne.s32.totalorder %s53, %s55
    %p62 = scmp.eq.s32.totalorder %s24, 1
    %p63 = por %p61, %p62
    %p64 = scmp.ne.s32.totalorder %s55, %s56
    %p65 = scmp.eq.s32.totalorder %s24, 0
    %p66 = por %p64, %p65
    %p67 = scmp.ne.s32.totalorder %s55, %s56
    %p68 = scmp.eq.s32.totalorder %s25, 1
    %p69 = por %p67, %p68
    %p71 = scmp.ne.s32.totalorder %s56, %s70
    %p72 = scmp.eq.s32.totalorder %s25, 0
    %p73 = por %p71, %p72
    %s75 = sadd.s32 %s74, 1
    %p78 = scmp.eq.s32.totalorder %s19, 1
    %p79 = scmp.ne.s32.totalorder %s74, %s76
    %p80 = scmp.eq.s32.totalorder %s19, 0
    %p81 = por %p79, %p80
    %p82 = scmp.ne.s32.totalorder %s74, %s76
    %p83 = scmp.eq.s32.totalorder %s24, 1
    %p84 = por %p82, %p83
    %p85 = scmp.ne.s32.totalorder %s76, %s77
    %p86 = scmp.eq.s32.totalorder %s24, 0
    %p87 = por %p85, %p86
    %p88 = scmp.ne.s32.totalorder %s76, %s77
    %p89 = scmp.eq.s32.totalorder %s25, 1
    %p90 = por %p88, %p89
    %p92 = scmp.ne.s32.totalorder %s77, %s91
    %p93 = scmp.eq.s32.totalorder %s25, 0
    %p94 = por %p92, %p93
    %s96 = sadd.s32 %s95, 1
    %p99 = scmp.eq.s32.totalorder %s19, 1
    %p100 = scmp.ne.s32.totalorder %s95, %s97
    %p101 = scmp.eq.s32.totalorder %s19, 0
    %p102 = por %p100, %p101
    %p103 = scmp.ne.s32.totalorder %s95, %s97
    %p104 = scmp.eq.s32.totalorder %s24, 1
    %p105 = por %p103, %p104
    %p106 = scmp.ne.s32.totalorder %s97, %s98
    %p107 = scmp.eq.s32.totalorder %s24, 0
    %p108 = por %p106, %p107
    %p109 = scmp.ne.s32.totalorder %s97, %s98
    %p110 = scmp.eq.s32.totalorder %s25, 1
    %p111 = por %p109, %p110
    %p113 = scmp.ne.s32.totalorder %s98, %s112
    %p114 = scmp.eq.s32.totalorder %s25, 0
    %p115 = por %p113, %p114
    %s117 = sadd.s32 %s116, 1
    %p120 = scmp.eq.s32.totalorder %s19, 1
    %p121 = scmp.ne.s32.totalorder %s116, %s118
    %p122 = scmp.eq.s32.totalorder %s19, 0
    %p123 = por %p121, %p122
    %p124 = scmp.ne.s32.totalorder %s116, %s118
    %p125 = scmp.eq.s32.totalorder %s24, 1
    %p126 = por %p124, %p125
    %p127 = scmp.ne.s32.totalorder %s118, %s119
    %p128 = scmp.eq.s32.totalorder %s24, 0
    %p129 = por %p127, %p128
    %p130 = scmp.ne.s32.totalorder %s118, %s119
    %p131 = scmp.eq.s32.totalorder %s25, 1
    %p132 = por %p130, %p131
    %p134 = scmp.ne.s32.totalorder %s119, %s133
    %p135 = scmp.eq.s32.totalorder %s25, 0
    %p136 = por %p134, %p135
    %s138 = sadd.s32 %s137, 1
    %p141 = scmp.eq.s32.totalorder %s19, 1
    %p142 = scmp.ne.s32.totalorder %s137, %s139
    %p143 = scmp.eq.s32.totalorder %s19, 0
    %p144 = por %p142, %p143
    %p145 = scmp.ne.s32.totalorder %s137, %s139
    %p146 = scmp.eq.s32.totalorder %s24, 1
    %p147 = por %p145, %p146
    %p148 = scmp.ne.s32.totalorder %s139, %s140
    %p149 = scmp.eq.s32.totalorder %s24, 0
    %p150 = por %p148, %p149
    %p151 = scmp.ne.s32.totalorder %s139, %s140
    %p152 = scmp.eq.s32.totalorder %s25, 1
    %p153 = por %p151, %p152
    %p155 = scmp.ne.s32.totalorder %s140, %s154
    %p156 = scmp.eq.s32.totalorder %s25, 0
    %p157 = por %p155, %p156
    %s159 = sadd.s32 %s158, 1
    %p162 = scmp.eq.s32.totalorder %s19, 1
    %p163 = scmp.ne.s32.totalorder %s158, %s160
    %p164 = scmp.eq.s32.totalorder %s19, 0
    %p165 = por %p163, %p164
    %p166 = scmp.ne.s32.totalorder %s158, %s160
    %p167 = scmp.eq.s32.totalorder %s24, 1
    %p168 = por %p166, %p167
    %p169 = scmp.ne.s32.totalorder %s160, %s161
    %p170 = scmp.eq.s32.totalorder %s24, 0
    %p171 = por %p169, %p170
    %p172 = scmp.ne.s32.totalorder %s160, %s161
    %p173 = scmp.eq.s32.totalorder %s25, 1
    %p174 = por %p172, %p173
    %p176 = scmp.ne.s32.totalorder %s161, %s175
    %p177 = scmp.eq.s32.totalorder %s25, 0
    %p178 = por %p176, %p177
    %s180 = sadd.s32 %s179, 1
    %p183 = scmp.eq.s32.totalorder %s19, 1
    %p184 = scmp.ne.s32.totalorder %s179, %s181
    %p185 = scmp.eq.s32.totalorder %s19, 0
    %p186 = por %p184, %p185
    %p187 = scmp.ne.s32.totalorder %s179, %s181
    %p188 = scmp.eq.s32.totalorder %s24, 1
    %p189 = por %p187, %p188
    %p190 = scmp.ne.s32.totalorder %s181, %s182
    %p191 = scmp.eq.s32.totalorder %s24, 0
    %p192 = por %p190, %p191
    %p193 = scmp.ne.s32.totalorder %s181, %s182
    %p194 = scmp.eq.s32.totalorder %s25, 1
    %p195 = por %p193, %p194
    %p197 = scmp.ne.s32.totalorder %s182, %s196
    %p198 = scmp.eq.s32.totalorder %s25, 0
    %p199 = por %p197, %p198
    %s201 = sadd.s32 %s200, 1
    %p204 = scmp.eq.s32.totalorder %s19, 1
    %p205 = scmp.ne.s32.totalorder %s200, %s202
    %p206 = scmp.eq.s32.totalorder %s19, 0
    %p207 = por %p205, %p206
    %p208 = scmp.ne.s32.totalorder %s200, %s202
    %p209 = scmp.eq.s32.totalorder %s24, 1
    %p210 = por %p208, %p209
    %p211 = scmp.ne.s32.totalorder %s202, %s203
    %p212 = scmp.eq.s32.totalorder %s24, 0
    %p213 = por %p211, %p212
    %p214 = scmp.ne.s32.totalorder %s202, %s203
    %p215 = scmp.eq.s32.totalorder %s25, 1
    %p216 = por %p214, %p215
    %p218 = scmp.ne.s32.totalorder %s203, %s217
    %p219 = scmp.eq.s32.totalorder %s25, 0
    %p220 = por %p218, %p219
    %s222 = sadd.s32 %s221, 1
    %p225 = scmp.eq.s32.totalorder %s19, 1
    %p226 = scmp.ne.s32.totalorder %s221, %s223
    %p227 = scmp.eq.s32.totalorder %s19, 0
    %p228 = por %p226, %p227
    %p229 = scmp.ne.s32.totalorder %s221, %s223
    %p230 = scmp.eq.s32.totalorder %s24, 1
    %p231 = por %p229, %p230
    %p232 = scmp.ne.s32.totalorder %s223, %s224
    %p233 = scmp.eq.s32.totalorder %s24, 0
    %p234 = por %p232, %p233
    %p235 = scmp.ne.s32.totalorder %s223, %s224
    %p236 = scmp.eq.s32.totalorder %s25, 1
    %p237 = por %p235, %p236
    %p239 = scmp.ne.s32.totalorder %s224, %s238
    %p240 = scmp.eq.s32.totalorder %s25, 0
    %p241 = por %p239, %p240
    %s243 = sadd.s32 %s242, 1
    %p246 = scmp.eq.s32.totalorder %s19, 1
    %p247 = scmp.ne.s32.totalorder %s242, %s244
    %p248 = scmp.eq.s32.totalorder %s19, 0
    %p249 = por %p247, %p248
    %p250 = scmp.ne.s32.totalorder %s242, %s244
    %p251 = scmp.eq.s32.totalorder %s24, 1
    %p252 = por %p250, %p251
    %p253 = scmp.ne.s32.totalorder %s244, %s245
    %p254 = scmp.eq.s32.totalorder %s24, 0
    %p255 = por %p253, %p254
    %p256 = scmp.ne.s32.totalorder %s244, %s245
    %p257 = scmp.eq.s32.totalorder %s25, 1
    %p258 = por %p256, %p257
    %p260 = scmp.ne.s32.totalorder %s245, %s259
    %p261 = scmp.eq.s32.totalorder %s25, 0
    %p262 = por %p260, %p261
    %s264 = sadd.s32 %s263, 1
    %p267 = scmp.eq.s32.totalorder %s19, 1
    %p268 = scmp.ne.s32.totalorder %s263, %s265
    %p269 = scmp.eq.s32.totalorder %s19, 0
    %p270 = por %p268, %p269
    %p271 = scmp.ne.s32.totalorder %s263, %s265
    %p272 = scmp.eq.s32.totalorder %s24, 1
    %p273 = por %p271, %p272
    %p274 = scmp.ne.s32.totalorder %s265, %s266
    %p275 = scmp.eq.s32.totalorder %s24, 0
    %p276 = por %p274, %p275
    %p277 = scmp.ne.s32.totalorder %s265, %s266
    %p278 = scmp.eq.s32.totalorder %s25, 1
    %p279 = por %p277, %p278
    %p281 = scmp.ne.s32.totalorder %s266, %s280
    %p282 = scmp.eq.s32.totalorder %s25, 0
    %p283 = por %p281, %p282
    %s285 = sadd.s32 %s284, 1
    %p288 = scmp.eq.s32.totalorder %s19, 1
    %p289 = scmp.ne.s32.totalorder %s284, %s286
    %p290 = scmp.eq.s32.totalorder %s19, 0
    %p291 = por %p289, %p290
    %p292 = scmp.ne.s32.totalorder %s284, %s286
    %p293 = scmp.eq.s32.totalorder %s24, 1
    %p294 = por %p292, %p293
    %p295 = scmp.ne.s32.totalorder %s286, %s287
    %p296 = scmp.eq.s32.totalorder %s24, 0
    %p297 = por %p295, %p296
    %p298 = scmp.ne.s32.totalorder %s286, %s287
    %p299 = scmp.eq.s32.totalorder %s25, 1
    %p300 = por %p298, %p299
    %p302 = scmp.ne.s32.totalorder %s287, %s301
    %p303 = scmp.eq.s32.totalorder %s25, 0
    %p304 = por %p302, %p303
    %s305 = ssub.s32 %s19, %s26
    %p306 = scmp.eq.s32.totalorder %s305, 0
    %s308 = sadd.s32 %s307, 1
    %s309 = scalar_select %p306, %s307, %s308
    %p312 = pneg %p306
    %p313 = scmp.eq.s32.totalorder %s19, 1
    %p314 = por %p312, %p313
    %p315 = scmp.ne.s32.totalorder %s307, %s310
    %p316 = scmp.eq.s32.totalorder %s19, 0
    %p317 = por %p315, %p316
    %p318 = scmp.ne.s32.totalorder %s307, %s310
    %p319 = scmp.eq.s32.totalorder %s24, 1
    %p320 = por %p318, %p319
    %p321 = scmp.ne.s32.totalorder %s310, %s311
    %p322 = scmp.eq.s32.totalorder %s24, 0
    %p323 = por %p321, %p322
    %p324 = scmp.ne.s32.totalorder %s310, %s311
    %p325 = scmp.eq.s32.totalorder %s25, 1
    %p326 = por %p324, %p325
    %p328 = scmp.ne.s32.totalorder %s311, %s327
    %p329 = scmp.eq.s32.totalorder %s25, 0
    %p330 = por %p328, %p329
    %p331 = scmp.le.s32.totalorder 1, %s19
    %p332 = scmp.lt.s32.totalorder %s19, 3
    %p333 = pnand %p331, %p332
    %p334 = pneg %p333
    // Predicated region
    $region9: #{model_forward.1} parent=5 // pred_check
      _
    $region10: #{model_forward.1} parent=5 // pred_check_branch
      %336 = sbr.rel (%p333) target = $region12
    $region11: #{model_forward.1} parent=5 // pred_region
      %s337 = ssub.s32 %s19, 1
      // Predicated region
      $region13: #{model_forward.1} parent=11 // pred_check
        %p338 = pneg %p66
      $region14: #{model_forward.1} parent=11 // pred_check_branch
        %340 = sbr.rel (%p338) target = $region16
      $region15: #{model_forward.1} parent=11 // pred_region
        _
      $region16: #{model_forward.1} parent=11 // pred_fallthru
        _
      // Predicated region
      $region17: #{model_forward.1} parent=11 // pred_check
        %p341 = pneg %p87
      $region18: #{model_forward.1} parent=11 // pred_check_branch
        %343 = sbr.rel (%p341) target = $region20
      $region19: #{model_forward.1} parent=11 // pred_region
        _
      $region20: #{model_forward.1} parent=11 // pred_fallthru
        _
      // Predicated region
      $region21: #{model_forward.1} parent=11 // pred_check
        %p344 = pneg %p108
      $region22: #{model_forward.1} parent=11 // pred_check_branch
        %346 = sbr.rel (%p344) target = $region24
      $region23: #{model_forward.1} parent=11 // pred_region
        _
      $region24: #{model_forward.1} parent=11 // pred_fallthru
        _
      // Predicated region
      $region25: #{model_forward.1} parent=11 // pred_check
        %p347 = pneg %p129
      $region26: #{model_forward.1} parent=11 // pred_check_branch
        %349 = sbr.rel (%p347) target = $region28
      $region27: #{model_forward.1} parent=11 // pred_region
        _
      $region28: #{model_forward.1} parent=11 // pred_fallthru
        _
      // Predicated region
      $region29: #{model_forward.1} parent=11 // pred_check
        %p350 = pneg %p150
      $region30: #{model_forward.1} parent=11 // pred_check_branch
        %352 = sbr.rel (%p350) target = $region32
      $region31: #{model_forward.1} parent=11 // pred_region
        _
      $region32: #{model_forward.1} parent=11 // pred_fallthru
        _
      // Predicated region
      $region33: #{model_forward.1} parent=11 // pred_check
        %p353 = pneg %p171
      $region34: #{model_forward.1} parent=11 // pred_check_branch
        %355 = sbr.rel (%p353) target = $region36
      $region35: #{model_forward.1} parent=11 // pred_region
        _
      $region36: #{model_forward.1} parent=11 // pred_fallthru
        _
      // Predicated region
      $region37: #{model_forward.1} parent=11 // pred_check
        %p356 = pneg %p192
      $region38: #{model_forward.1} parent=11 // pred_check_branch
        %358 = sbr.rel (%p356) target = $region40
      $region39: #{model_forward.1} parent=11 // pred_region
        _
      $region40: #{model_forward.1} parent=11 // pred_fallthru
        _
      // Predicated region
      $region41: #{model_forward.1} parent=11 // pred_check
        %p359 = pneg %p213
      $region42: #{model_forward.1} parent=11 // pred_check_branch
        %361 = sbr.rel (%p359) target = $region44
      $region43: #{model_forward.1} parent=11 // pred_region
        _
      $region44: #{model_forward.1} parent=11 // pred_fallthru
        _
      // Predicated region
      $region45: #{model_forward.1} parent=11 // pred_check
        %p362 = pneg %p234
      $region46: #{model_forward.1} parent=11 // pred_check_branch
        %364 = sbr.rel (%p362) target = $region48
      $region47: #{model_forward.1} parent=11 // pred_region
        _
      $region48: #{model_forward.1} parent=11 // pred_fallthru
        _
      // Predicated region
      $region49: #{model_forward.1} parent=11 // pred_check
        %p365 = pneg %p255
      $region50: #{model_forward.1} parent=11 // pred_check_branch
        %367 = sbr.rel (%p365) target = $region52
      $region51: #{model_forward.1} parent=11 // pred_region
        _
      $region52: #{model_forward.1} parent=11 // pred_fallthru
        _
      // Predicated region
      $region53: #{model_forward.1} parent=11 // pred_check
        %p368 = pneg %p276
      $region54: #{model_forward.1} parent=11 // pred_check_branch
        %370 = sbr.rel (%p368) target = $region56
      $region55: #{model_forward.1} parent=11 // pred_region
        _
      $region56: #{model_forward.1} parent=11 // pred_fallthru
        _
      // Predicated region
      $region57: #{model_forward.1} parent=11 // pred_check
        %p371 = pneg %p297
      $region58: #{model_forward.1} parent=11 // pred_check_branch
        %373 = sbr.rel (%p371) target = $region60
      $region59: #{model_forward.1} parent=11 // pred_region
        _
      $region60: #{model_forward.1} parent=11 // pred_fallthru
        _
    $region12: #{model_forward.1} parent=5 // pred_fallthru
      _
    %p374 = scmp.lt.s32.totalorder %s19, 2
    // Predicated region
    $region61: #{model_forward.1} parent=5 // pred_check
      %p375 = pneg %p374
    $region62: #{model_forward.1} parent=5 // pred_check_branch
      %377 = sbr.rel (%p375) target = $region64
    $region63: #{model_forward.1} parent=5 // pred_region
      // Predicated region
      $region65: #{model_forward.1} parent=63 // pred_check
        %p378 = pneg %p39
      $region66: #{model_forward.1} parent=63 // pred_check_branch
        %380 = sbr.rel (%p378) target = $region68
      $region67: #{model_forward.1} parent=63 // pred_region
        %p381 = scmp.lt.s32.totalorder %s19, 1
        %s382 = scalar_select %p381, %s19, 1
        %s383 = smul.addr %s382, 7
        %s384 = scalar_lea.vmem %s0, %s383
      $region68: #{model_forward.1} parent=63 // pred_fallthru
        _
    $region64: #{model_forward.1} parent=5 // pred_fallthru
      _
    %p385 = scmp.le.s32.totalorder 1, %s19
    %p386 = scmp.lt.s32.totalorder %s19, 3
    %p387 = pnand %p385, %p386
    %p388 = pneg %p387
    // Predicated region
    $region69: #{model_forward.1} parent=5 // pred_check
      _
    $region70: #{model_forward.1} parent=5 // pred_check_branch
      %390 = sbr.rel (%p387) target = $region72
    $region71: #{model_forward.1} parent=5 // pred_region
      %s391 = ssub.s32 %s19, 1
      %p392 = scmp.lt.s32.totalorder %s24, 1
      %s393 = scalar_select %p392, %s24, 1
      %s394 = smul.addr %s393, 7
      %s395 = scalar_lea.vmem %s0, %s394
      %p396 = pneg %p45
      %p397 = pneg %p42
      %p398 = pneg %p66
      %p399 = pneg %p63
      %p400 = pneg %p87
      %p401 = pneg %p84
      %p402 = pneg %p108
      %p403 = pneg %p105
      %p404 = pneg %p129
      %p405 = pneg %p126
      %p406 = pneg %p150
      %p407 = pneg %p147
      %p408 = pneg %p171
      %p409 = pneg %p168
      %p410 = pneg %p192
      %p411 = pneg %p189
      %p412 = pneg %p213
      %p413 = pneg %p210
      %p414 = pneg %p234
      %p415 = pneg %p231
      %p416 = pneg %p255
      %p417 = pneg %p252
      %p418 = pneg %p276
      %p419 = pneg %p273
      %p420 = pneg %p297
      %p421 = pneg %p294
      %p422 = pneg %p323
      %p423 = pneg %p320
      %p424 = scmp.lt.s32.totalorder %s24, 1
      %s425 = scalar_select %p424, %s24, 1
      %s426 = smul.addr %s425, 2
      %s427 = smul.addr %s426, 8
      %s428 = scalar_lea.vmem %s13, %s427
      %p429 = scmp.lt.s32.totalorder %s24, 1
      %s430 = scalar_select %p429, %s24, 1
      %s431 = smul.addr %s430, 7
      %s432 = scalar_lea.vmem %s0, %s431
      %p433 = scmp.lt.s32.totalorder %s24, 1
      %s434 = scalar_select %p433, %s24, 1
      %s435 = smul.addr %s434, 2
      %s436 = smul.addr %s435, 8
      %s437 = scalar_lea.vmem %s13, %s436
      %v438 = vld [vmem:[%s432] sm:$0x7f]
      %v439 = vld [vmem:[%s1] sm:$0xff]
      %v440 = vld [vmem:[%s1 + $0x8] sm:$0xff]
      %442 = vset.pattern.permute.xlu0 0
      %443 = vperm.xlu0 %442, %v439
      %v444 = vpop.permute.xlu0 %443
      %447 = vset.pattern.permute.xlu0 0
      %448 = vperm.xlu0 %447, %v440
      %v449 = vpop.permute.xlu0 %448
      %v452 = vperm.slane %v438, 0
      %v453 = vperm.slane %v438, 1
      %v454 = vperm.slane %v438, 2
      %v455 = vperm.slane %v438, 3
      %v456 = vperm.slane %v438, 4
      %v457 = vperm.slane %v438, 5
      %v464 = vmul.f32 %v444, %v452
      %v465 = vmul.f32 %v444, %v453
      %v466 = vmul.f32 %v444, %v454
      %v467 = vmul.f32 %v444, %v455
      %v468 = vmul.f32 %v444, %v456
      %v469 = vmul.f32 %v444, %v457
      %v470 = vmul.f32 %v449, %v452
      %v471 = vmul.f32 %v449, %v453
      %v472 = vmul.f32 %v449, %v454
      %v473 = vmul.f32 %v449, %v455
      %v474 = vmul.f32 %v449, %v456
      %v475 = vmul.f32 %v449, %v457
      %s476 = scalar_lea.vmem %s1, 16
      %v477 = vld [vmem:[%s476] sm:$0xff]
      %v478 = vld [vmem:[%s476 + $0x8] sm:$0xff]
      %480 = vset.pattern.permute.xlu0 0
      %481 = vperm.xlu0 %480, %v477
      %v482 = vpop.permute.xlu0 %481
      %485 = vset.pattern.permute.xlu0 0
      %486 = vperm.xlu0 %485, %v478
      %v487 = vpop.permute.xlu0 %486
      %v489 = vmul.f32 %v482, %v452
      %v490 = vmul.f32 %v482, %v453
      %v491 = vmul.f32 %v482, %v454
      %v492 = vmul.f32 %v482, %v455
      %v493 = vmul.f32 %v482, %v456
      %v494 = vmul.f32 %v482, %v457
      %v495 = vmul.f32 %v487, %v452
      %v496 = vmul.f32 %v487, %v453
      %v497 = vmul.f32 %v487, %v454
      %v498 = vmul.f32 %v487, %v455
      %v499 = vmul.f32 %v487, %v456
      %v500 = vmul.f32 %v487, %v457
      %513 = vrot.lane.b32.xlu0 %v489, 127
      %v514 = vpop.permute.xlu0 %513
      %515 = vrot.lane.b32.xlu0 %v490, 127
      %v516 = vpop.permute.xlu0 %515
      %517 = vrot.lane.b32.xlu0 %v491, 127
      %v518 = vpop.permute.xlu0 %517
      %519 = vrot.lane.b32.xlu0 %v492, 127
      %v520 = vpop.permute.xlu0 %519
      %521 = vrot.lane.b32.xlu0 %v493, 127
      %v522 = vpop.permute.xlu0 %521
      %523 = vrot.lane.b32.xlu0 %v494, 127
      %v524 = vpop.permute.xlu0 %523
      %525 = vrot.lane.b32.xlu0 %v495, 127
      %v526 = vpop.permute.xlu0 %525
      %527 = vrot.lane.b32.xlu0 %v496, 127
      %v528 = vpop.permute.xlu0 %527
      %529 = vrot.lane.b32.xlu0 %v497, 127
      %v530 = vpop.permute.xlu0 %529
      %531 = vrot.lane.b32.xlu0 %v498, 127
      %v532 = vpop.permute.xlu0 %531
      %533 = vrot.lane.b32.xlu0 %v499, 127
      %v534 = vpop.permute.xlu0 %533
      %535 = vrot.lane.b32.xlu0 %v500, 127
      %v536 = vpop.permute.xlu0 %535
      %vm537 = vcmask 1039360
      %v538 = vsel %vm537, %v514, %v516
      %v539 = vsel %vm537, %v516, %v518
      %v540 = vsel %vm537, %v518, %v520
      %v541 = vsel %vm537, %v520, %v522
      %v542 = vsel %vm537, %v522, %v524
      %v543 = vsel %vm537, %v526, %v528
      %v544 = vsel %vm537, %v528, %v530
      %v545 = vsel %vm537, %v530, %v532
      %v546 = vsel %vm537, %v532, %v534
      %v547 = vsel %vm537, %v534, %v536
      %v560 = vadd.f32 %v464, %v538
      %v561 = vadd.f32 %v465, %v539
      %v562 = vadd.f32 %v466, %v540
      %v563 = vadd.f32 %v467, %v541
      %v564 = vadd.f32 %v468, %v542
      %v565 = vadd.f32 %v469, %v524
      %v566 = vadd.f32 %v470, %v543
      %v567 = vadd.f32 %v471, %v544
      %v568 = vadd.f32 %v472, %v545
      %v569 = vadd.f32 %v473, %v546
      %v570 = vadd.f32 %v474, %v547
      %v571 = vadd.f32 %v475, %v536
      %s572 = scalar_lea.vmem %s1, 32
      %v573 = vld [vmem:[%s572] sm:$0xff]
      %v574 = vld [vmem:[%s572 + $0x8] sm:$0xff]
      %576 = vset.pattern.permute.xlu0 0
      %577 = vperm.xlu0 %576, %v573
      %v578 = vpop.permute.xlu0 %577
      %581 = vset.pattern.permute.xlu0 0
      %582 = vperm.xlu0 %581, %v574
      %v583 = vpop.permute.xlu0 %582
      %v585 = vmul.f32 %v578, %v452
      %v586 = vmul.f32 %v578, %v453
      %v587 = vmul.f32 %v578, %v454
      %v588 = vmul.f32 %v578, %v455
      %v589 = vmul.f32 %v578, %v456
      %v590 = vmul.f32 %v578, %v457
      %v591 = vmul.f32 %v583, %v452
      %v592 = vmul.f32 %v583, %v453
      %v593 = vmul.f32 %v583, %v454
      %v594 = vmul.f32 %v583, %v455
      %v595 = vmul.f32 %v583, %v456
      %v596 = vmul.f32 %v583, %v457
      %609 = vrot.lane.b32.xlu0 %v585, 126
      %v610 = vpop.permute.xlu0 %609
      %611 = vrot.lane.b32.xlu0 %v586, 126
      %v612 = vpop.permute.xlu0 %611
      %613 = vrot.lane.b32.xlu0 %v587, 126
      %v614 = vpop.permute.xlu0 %613
      %615 = vrot.lane.b32.xlu0 %v588, 126
      %v616 = vpop.permute.xlu0 %615
      %617 = vrot.lane.b32.xlu0 %v589, 126
      %v618 = vpop.permute.xlu0 %617
      %619 = vrot.lane.b32.xlu0 %v590, 126
      %v620 = vpop.permute.xlu0 %619
      %621 = vrot.lane.b32.xlu0 %v591, 126
      %v622 = vpop.permute.xlu0 %621
      %623 = vrot.lane.b32.xlu0 %v592, 126
      %v624 = vpop.permute.xlu0 %623
      %625 = vrot.lane.b32.xlu0 %v593, 126
      %v626 = vpop.permute.xlu0 %625
      %627 = vrot.lane.b32.xlu0 %v594, 126
      %v628 = vpop.permute.xlu0 %627
      %629 = vrot.lane.b32.xlu0 %v595, 126
      %v630 = vpop.permute.xlu0 %629
      %631 = vrot.lane.b32.xlu0 %v596, 126
      %v632 = vpop.permute.xlu0 %631
      %vm633 = vcmask 1031168
      %v634 = vsel %vm633, %v610, %v612
      %v635 = vsel %vm633, %v612, %v614
      %v636 = vsel %vm633, %v614, %v616
      %v637 = vsel %vm633, %v616, %v618
      %v638 = vsel %vm633, %v618, %v620
      %v639 = vsel %vm633, %v622, %v624
      %v640 = vsel %vm633, %v624, %v626
      %v641 = vsel %vm633, %v626, %v628
      %v642 = vsel %vm633, %v628, %v630
      %v643 = vsel %vm633, %v630, %v632
      %v656 = vadd.f32 %v560, %v634
      %v657 = vadd.f32 %v561, %v635
      %v658 = vadd.f32 %v562, %v636
      %v659 = vadd.f32 %v563, %v637
      %v660 = vadd.f32 %v564, %v638
      %v661 = vadd.f32 %v565, %v620
      %v662 = vadd.f32 %v566, %v639
      %v663 = vadd.f32 %v567, %v640
      %v664 = vadd.f32 %v568, %v641
      %v665 = vadd.f32 %v569, %v642
      %v666 = vadd.f32 %v570, %v643
      %v667 = vadd.f32 %v571, %v632
      %s668 = scalar_lea.vmem %s1, 48
      %v669 = vld [vmem:[%s668] sm:$0xff]
      %v670 = vld [vmem:[%s668 + $0x8] sm:$0xff]
      %672 = vset.pattern.permute.xlu0 0
      %673 = vperm.xlu0 %672, %v669
      %v674 = vpop.permute.xlu0 %673
      %677 = vset.pattern.permute.xlu0 0
      %678 = vperm.xlu0 %677, %v670
      %v679 = vpop.permute.xlu0 %678
      %v681 = vmul.f32 %v674, %v452
      %v682 = vmul.f32 %v674, %v453
      %v683 = vmul.f32 %v674, %v454
      %v684 = vmul.f32 %v674, %v455
      %v685 = vmul.f32 %v674, %v456
      %v686 = vmul.f32 %v674, %v457
      %v687 = vmul.f32 %v679, %v452
      %v688 = vmul.f32 %v679, %v453
      %v689 = vmul.f32 %v679, %v454
      %v690 = vmul.f32 %v679, %v455
      %v691 = vmul.f32 %v679, %v456
      %v692 = vmul.f32 %v679, %v457
      %705 = vrot.lane.b32.xlu0 %v681, 100
      %v706 = vpop.permute.xlu0 %705
      %707 = vrot.lane.b32.xlu0 %v682, 100
      %v708 = vpop.permute.xlu0 %707
      %709 = vrot.lane.b32.xlu0 %v683, 100
      %v710 = vpop.permute.xlu0 %709
      %711 = vrot.lane.b32.xlu0 %v684, 100
      %v712 = vpop.permute.xlu0 %711
      %713 = vrot.lane.b32.xlu0 %v685, 100
      %v714 = vpop.permute.xlu0 %713
      %715 = vrot.lane.b32.xlu0 %v686, 100
      %v716 = vpop.permute.xlu0 %715
      %717 = vrot.lane.b32.xlu0 %v687, 100
      %v718 = vpop.permute.xlu0 %717
      %719 = vrot.lane.b32.xlu0 %v688, 100
      %v720 = vpop.permute.xlu0 %719
      %721 = vrot.lane.b32.xlu0 %v689, 100
      %v722 = vpop.permute.xlu0 %721
      %723 = vrot.lane.b32.xlu0 %v690, 100
      %v724 = vpop.permute.xlu0 %723
      %725 = vrot.lane.b32.xlu0 %v691, 100
      %v726 = vpop.permute.xlu0 %725
      %727 = vrot.lane.b32.xlu0 %v692, 100
      %v728 = vpop.permute.xlu0 %727
      %vm729 = vcmask 818176
      %v730 = vsel %vm729, %v706, %v708
      %v731 = vsel %vm729, %v708, %v710
      %v732 = vsel %vm729, %v710, %v712
      %v733 = vsel %vm729, %v712, %v714
      %v734 = vsel %vm729, %v714, %v716
      %v735 = vsel %vm729, %v718, %v720
      %v736 = vsel %vm729, %v720, %v722
      %v737 = vsel %vm729, %v722, %v724
      %v738 = vsel %vm729, %v724, %v726
      %v739 = vsel %vm729, %v726, %v728
      %v752 = vadd.f32 %v656, %v730
      %v753 = vadd.f32 %v657, %v731
      %v754 = vadd.f32 %v658, %v732
      %v755 = vadd.f32 %v659, %v733
      %v756 = vadd.f32 %v660, %v734
      %v757 = vadd.f32 %v661, %v716
      %v758 = vadd.f32 %v662, %v735
      %v759 = vadd.f32 %v663, %v736
      %v760 = vadd.f32 %v664, %v737
      %v761 = vadd.f32 %v665, %v738
      %v762 = vadd.f32 %v666, %v739
      %v763 = vadd.f32 %v667, %v728
      %s764 = scalar_lea.vmem %s1, 64
      %v765 = vld [vmem:[%s764] sm:$0xff]
      %v766 = vld [vmem:[%s764 + $0x8] sm:$0xff]
      %768 = vset.pattern.permute.xlu0 0
      %769 = vperm.xlu0 %768, %v765
      %v770 = vpop.permute.xlu0 %769
      %773 = vset.pattern.permute.xlu0 0
      %774 = vperm.xlu0 %773, %v766
      %v775 = vpop.permute.xlu0 %774
      %v777 = vmul.f32 %v770, %v452
      %v778 = vmul.f32 %v770, %v453
      %v779 = vmul.f32 %v770, %v454
      %v780 = vmul.f32 %v770, %v455
      %v781 = vmul.f32 %v770, %v456
      %v782 = vmul.f32 %v770, %v457
      %v783 = vmul.f32 %v775, %v452
      %v784 = vmul.f32 %v775, %v453
      %v785 = vmul.f32 %v775, %v454
      %v786 = vmul.f32 %v775, %v455
      %v787 = vmul.f32 %v775, %v456
      %v788 = vmul.f32 %v775, %v457
      %801 = vrot.lane.b32.xlu0 %v777, 99
      %v802 = vpop.permute.xlu0 %801
      %803 = vrot.lane.b32.xlu0 %v778, 99
      %v804 = vpop.permute.xlu0 %803
      %805 = vrot.lane.b32.xlu0 %v779, 99
      %v806 = vpop.permute.xlu0 %805
      %807 = vrot.lane.b32.xlu0 %v780, 99
      %v808 = vpop.permute.xlu0 %807
      %809 = vrot.lane.b32.xlu0 %v781, 99
      %v810 = vpop.permute.xlu0 %809
      %811 = vrot.lane.b32.xlu0 %v782, 99
      %v812 = vpop.permute.xlu0 %811
      %813 = vrot.lane.b32.xlu0 %v783, 99
      %v814 = vpop.permute.xlu0 %813
      %815 = vrot.lane.b32.xlu0 %v784, 99
      %v816 = vpop.permute.xlu0 %815
      %817 = vrot.lane.b32.xlu0 %v785, 99
      %v818 = vpop.permute.xlu0 %817
      %819 = vrot.lane.b32.xlu0 %v786, 99
      %v820 = vpop.permute.xlu0 %819
      %821 = vrot.lane.b32.xlu0 %v787, 99
      %v822 = vpop.permute.xlu0 %821
      %823 = vrot.lane.b32.xlu0 %v788, 99
      %v824 = vpop.permute.xlu0 %823
      %vm825 = vcmask 809984
      %v826 = vsel %vm825, %v802, %v804
      %v827 = vsel %vm825, %v804, %v806
      %v828 = vsel %vm825, %v806, %v808
      %v829 = vsel %vm825, %v808, %v810
      %v830 = vsel %vm825, %v810, %v812
      %v831 = vsel %vm825, %v814, %v816
      %v832 = vsel %vm825, %v816, %v818
      %v833 = vsel %vm825, %v818, %v820
      %v834 = vsel %vm825, %v820, %v822
      %v835 = vsel %vm825, %v822, %v824
      %v848 = vadd.f32 %v752, %v826
      %v849 = vadd.f32 %v753, %v827
      %v850 = vadd.f32 %v754, %v828
      %v851 = vadd.f32 %v755, %v829
      %v852 = vadd.f32 %v756, %v830
      %v853 = vadd.f32 %v757, %v812
      %v854 = vadd.f32 %v758, %v831
      %v855 = vadd.f32 %v759, %v832
      %v856 = vadd.f32 %v760, %v833
      %v857 = vadd.f32 %v761, %v834
      %v858 = vadd.f32 %v762, %v835
      %v859 = vadd.f32 %v763, %v824
      %s860 = scalar_lea.vmem %s1, 80
      %v861 = vld [vmem:[%s860] sm:$0xff]
      %v862 = vld [vmem:[%s860 + $0x8] sm:$0xff]
      %864 = vset.pattern.permute.xlu0 0
      %865 = vperm.xlu0 %864, %v861
      %v866 = vpop.permute.xlu0 %865
      %869 = vset.pattern.permute.xlu0 0
      %870 = vperm.xlu0 %869, %v862
      %v871 = vpop.permute.xlu0 %870
      %v873 = vmul.f32 %v866, %v452
      %v874 = vmul.f32 %v866, %v453
      %v875 = vmul.f32 %v866, %v454
      %v876 = vmul.f32 %v866, %v455
      %v877 = vmul.f32 %v866, %v456
      %v878 = vmul.f32 %v866, %v457
      %v879 = vmul.f32 %v871, %v452
      %v880 = vmul.f32 %v871, %v453
      %v881 = vmul.f32 %v871, %v454
      %v882 = vmul.f32 %v871, %v455
      %v883 = vmul.f32 %v871, %v456
      %v884 = vmul.f32 %v871, %v457
      %897 = vrot.lane.b32.xlu0 %v873, 98
      %v898 = vpop.permute.xlu0 %897
      %899 = vrot.lane.b32.xlu0 %v874, 98
      %v900 = vpop.permute.xlu0 %899
      %901 = vrot.lane.b32.xlu0 %v875, 98
      %v902 = vpop.permute.xlu0 %901
      %903 = vrot.lane.b32.xlu0 %v876, 98
      %v904 = vpop.permute.xlu0 %903
      %905 = vrot.lane.b32.xlu0 %v877, 98
      %v906 = vpop.permute.xlu0 %905
      %907 = vrot.lane.b32.xlu0 %v878, 98
      %v908 = vpop.permute.xlu0 %907
      %909 = vrot.lane.b32.xlu0 %v879, 98
      %v910 = vpop.permute.xlu0 %909
      %911 = vrot.lane.b32.xlu0 %v880, 98
      %v912 = vpop.permute.xlu0 %911
      %913 = vrot.lane.b32.xlu0 %v881, 98
      %v914 = vpop.permute.xlu0 %913
      %915 = vrot.lane.b32.xlu0 %v882, 98
      %v916 = vpop.permute.xlu0 %915
      %917 = vrot.lane.b32.xlu0 %v883, 98
      %v918 = vpop.permute.xlu0 %917
      %919 = vrot.lane.b32.xlu0 %v884, 98
      %v920 = vpop.permute.xlu0 %919
      %vm921 = vcmask 801792
      %v922 = vsel %vm921, %v898, %v900
      %v923 = vsel %vm921, %v900, %v902
      %v924 = vsel %vm921, %v902, %v904
      %v925 = vsel %vm921, %v904, %v906
      %v926 = vsel %vm921, %v906, %v908
      %v927 = vsel %vm921, %v910, %v912
      %v928 = vsel %vm921, %v912, %v914
      %v929 = vsel %vm921, %v914, %v916
      %v930 = vsel %vm921, %v916, %v918
      %v931 = vsel %vm921, %v918, %v920
      %v944 = vadd.f32 %v848, %v922
      %v945 = vadd.f32 %v849, %v923
      %v946 = vadd.f32 %v850, %v924
      %v947 = vadd.f32 %v851, %v925
      %v948 = vadd.f32 %v852, %v926
      %v949 = vadd.f32 %v853, %v908
      %v950 = vadd.f32 %v854, %v927
      %v951 = vadd.f32 %v855, %v928
      %v952 = vadd.f32 %v856, %v929
      %v953 = vadd.f32 %v857, %v930
      %v954 = vadd.f32 %v858, %v931
      %v955 = vadd.f32 %v859, %v920
      %s956 = scalar_lea.vmem %s1, 96
      %v957 = vld [vmem:[%s956] sm:$0xff]
      %v958 = vld [vmem:[%s956 + $0x8] sm:$0xff]
      %960 = vset.pattern.permute.xlu0 0
      %961 = vperm.xlu0 %960, %v957
      %v962 = vpop.permute.xlu0 %961
      %965 = vset.pattern.permute.xlu0 0
      %966 = vperm.xlu0 %965, %v958
      %v967 = vpop.permute.xlu0 %966
      %v969 = vperm.slane %v438, 6
      %v971 = vmul.f32 %v962, %v452
      %v972 = vmul.f32 %v962, %v453
      %v973 = vmul.f32 %v962, %v454
      %v974 = vmul.f32 %v962, %v455
      %v975 = vmul.f32 %v962, %v456
      %v976 = vmul.f32 %v962, %v457
      %v977 = vmul.f32 %v962, %v969
      %v978 = vmul.f32 %v967, %v452
      %v979 = vmul.f32 %v967, %v453
      %v980 = vmul.f32 %v967, %v454
      %v981 = vmul.f32 %v967, %v455
      %v982 = vmul.f32 %v967, %v456
      %v983 = vmul.f32 %v967, %v457
      %v984 = vmul.f32 %v967, %v969
      %999 = vrot.lane.b32.xlu0 %v971, 72
      %v1000 = vpop.permute.xlu0 %999
      %1001 = vrot.lane.b32.xlu0 %v972, 72
      %v1002 = vpop.permute.xlu0 %1001
      %1003 = vrot.lane.b32.xlu0 %v973, 72
      %v1004 = vpop.permute.xlu0 %1003
      %1005 = vrot.lane.b32.xlu0 %v974, 72
      %v1006 = vpop.permute.xlu0 %1005
      %1007 = vrot.lane.b32.xlu0 %v975, 72
      %v1008 = vpop.permute.xlu0 %1007
      %1009 = vrot.lane.b32.xlu0 %v976, 72
      %v1010 = vpop.permute.xlu0 %1009
      %1011 = vrot.lane.b32.xlu0 %v977, 72
      %v1012 = vpop.permute.xlu0 %1011
      %1013 = vrot.lane.b32.xlu0 %v978, 72
      %v1014 = vpop.permute.xlu0 %1013
      %1015 = vrot.lane.b32.xlu0 %v979, 72
      %v1016 = vpop.permute.xlu0 %1015
      %1017 = vrot.lane.b32.xlu0 %v980, 72
      %v1018 = vpop.permute.xlu0 %1017
      %1019 = vrot.lane.b32.xlu0 %v981, 72
      %v1020 = vpop.permute.xlu0 %1019
      %1021 = vrot.lane.b32.xlu0 %v982, 72
      %v1022 = vpop.permute.xlu0 %1021
      %1023 = vrot.lane.b32.xlu0 %v983, 72
      %v1024 = vpop.permute.xlu0 %1023
      %1025 = vrot.lane.b32.xlu0 %v984, 72
      %v1026 = vpop.permute.xlu0 %1025
      %vm1027 = vcmask 588800
      %v1028 = vsel %vm1027, %v1000, %v1002
      %v1029 = vsel %vm1027, %v1002, %v1004
      %v1030 = vsel %vm1027, %v1004, %v1006
      %v1031 = vsel %vm1027, %v1006, %v1008
      %v1032 = vsel %vm1027, %v1008, %v1010
      %v1033 = vsel %vm1027, %v1010, %v1012
      %v1034 = vsel %vm1027, %v1014, %v1016
      %v1035 = vsel %vm1027, %v1016, %v1018
      %v1036 = vsel %vm1027, %v1018, %v1020
      %v1037 = vsel %vm1027, %v1020, %v1022
      %v1038 = vsel %vm1027, %v1022, %v1024
      %v1039 = vsel %vm1027, %v1024, %v1026
      %v1052 = vadd.f32 %v944, %v1028
      %v1053 = vadd.f32 %v945, %v1029
      %v1054 = vadd.f32 %v946, %v1030
      %v1055 = vadd.f32 %v947, %v1031
      %v1056 = vadd.f32 %v948, %v1032
      %v1057 = vadd.f32 %v949, %v1033
      %v1058 = vadd.f32 %v950, %v1034
      %v1059 = vadd.f32 %v951, %v1035
      %v1060 = vadd.f32 %v952, %v1036
      %v1061 = vadd.f32 %v953, %v1037
      %v1062 = vadd.f32 %v954, %v1038
      %v1063 = vadd.f32 %v955, %v1039
      %s1064 = scalar_lea.vmem %s1, 112
      %v1065 = vld [vmem:[%s1064] sm:$0xff]
      %v1066 = vld [vmem:[%s1064 + $0x8] sm:$0xff]
      %1068 = vset.pattern.permute.xlu0 0
      %1069 = vperm.xlu0 %1068, %v1065
      %v1070 = vpop.permute.xlu0 %1069
      %1073 = vset.pattern.permute.xlu0 0
      %1074 = vperm.xlu0 %1073, %v1066
      %v1075 = vpop.permute.xlu0 %1074
      %v1077 = vmul.f32 %v1070, %v452
      %v1078 = vmul.f32 %v1070, %v453
      %v1079 = vmul.f32 %v1070, %v454
      %v1080 = vmul.f32 %v1070, %v455
      %v1081 = vmul.f32 %v1070, %v456
      %v1082 = vmul.f32 %v1070, %v457
      %v1083 = vmul.f32 %v1070, %v969
      %v1084 = vmul.f32 %v1075, %v452
      %v1085 = vmul.f32 %v1075, %v453
      %v1086 = vmul.f32 %v1075, %v454
      %v1087 = vmul.f32 %v1075, %v455
      %v1088 = vmul.f32 %v1075, %v456
      %v1089 = vmul.f32 %v1075, %v457
      %v1090 = vmul.f32 %v1075, %v969
      %1105 = vrot.lane.b32.xlu0 %v1077, 71
      %v1106 = vpop.permute.xlu0 %1105
      %1107 = vrot.lane.b32.xlu0 %v1078, 71
      %v1108 = vpop.permute.xlu0 %1107
      %1109 = vrot.lane.b32.xlu0 %v1079, 71
      %v1110 = vpop.permute.xlu0 %1109
      %1111 = vrot.lane.b32.xlu0 %v1080, 71
      %v1112 = vpop.permute.xlu0 %1111
      %1113 = vrot.lane.b32.xlu0 %v1081, 71
      %v1114 = vpop.permute.xlu0 %1113
      %1115 = vrot.lane.b32.xlu0 %v1082, 71
      %v1116 = vpop.permute.xlu0 %1115
      %1117 = vrot.lane.b32.xlu0 %v1083, 71
      %v1118 = vpop.permute.xlu0 %1117
      %1119 = vrot.lane.b32.xlu0 %v1084, 71
      %v1120 = vpop.permute.xlu0 %1119
      %1121 = vrot.lane.b32.xlu0 %v1085, 71
      %v1122 = vpop.permute.xlu0 %1121
      %1123 = vrot.lane.b32.xlu0 %v1086, 71
      %v1124 = vpop.permute.xlu0 %1123
      %1125 = vrot.lane.b32.xlu0 %v1087, 71
      %v1126 = vpop.permute.xlu0 %1125
      %1127 = vrot.lane.b32.xlu0 %v1088, 71
      %v1128 = vpop.permute.xlu0 %1127
      %1129 = vrot.lane.b32.xlu0 %v1089, 71
      %v1130 = vpop.permute.xlu0 %1129
      %1131 = vrot.lane.b32.xlu0 %v1090, 71
      %v1132 = vpop.permute.xlu0 %1131
      %vm1133 = vcmask 580608
      %v1134 = vsel %vm1133, %v1106, %v1108
      %v1135 = vsel %vm1133, %v1108, %v1110
      %v1136 = vsel %vm1133, %v1110, %v1112
      %v1137 = vsel %vm1133, %v1112, %v1114
      %v1138 = vsel %vm1133, %v1114, %v1116
      %v1139 = vsel %vm1133, %v1116, %v1118
      %v1140 = vsel %vm1133, %v1120, %v1122
      %v1141 = vsel %vm1133, %v1122, %v1124
      %v1142 = vsel %vm1133, %v1124, %v1126
      %v1143 = vsel %vm1133, %v1126, %v1128
      %v1144 = vsel %vm1133, %v1128, %v1130
      %v1145 = vsel %vm1133, %v1130, %v1132
      %v1158 = vadd.f32 %v1052, %v1134
      %v1159 = vadd.f32 %v1053, %v1135
      %v1160 = vadd.f32 %v1054, %v1136
      %v1161 = vadd.f32 %v1055, %v1137
      %v1162 = vadd.f32 %v1056, %v1138
      %v1163 = vadd.f32 %v1057, %v1139
      %v1164 = vadd.f32 %v1058, %v1140
      %v1165 = vadd.f32 %v1059, %v1141
      %v1166 = vadd.f32 %v1060, %v1142
      %v1167 = vadd.f32 %v1061, %v1143
      %v1168 = vadd.f32 %v1062, %v1144
      %v1169 = vadd.f32 %v1063, %v1145
      %s1170 = scalar_lea.vmem %s1, 128
      %v1171 = vld [vmem:[%s1170] sm:$0xff]
      %v1172 = vld [vmem:[%s1170 + $0x8] sm:$0xff]
      %1174 = vset.pattern.permute.xlu0 0
      %1175 = vperm.xlu0 %1174, %v1171
      %v1176 = vpop.permute.xlu0 %1175
      %1179 = vset.pattern.permute.xlu0 0
      %1180 = vperm.xlu0 %1179, %v1172
      %v1181 = vpop.permute.xlu0 %1180
      %v1183 = vmul.f32 %v1176, %v452
      %v1184 = vmul.f32 %v1176, %v453
      %v1185 = vmul.f32 %v1176, %v454
      %v1186 = vmul.f32 %v1176, %v455
      %v1187 = vmul.f32 %v1176, %v456
      %v1188 = vmul.f32 %v1176, %v457
      %v1189 = vmul.f32 %v1176, %v969
      %v1190 = vmul.f32 %v1181, %v452
      %v1191 = vmul.f32 %v1181, %v453
      %v1192 = vmul.f32 %v1181, %v454
      %v1193 = vmul.f32 %v1181, %v455
      %v1194 = vmul.f32 %v1181, %v456
      %v1195 = vmul.f32 %v1181, %v457
      %v1196 = vmul.f32 %v1181, %v969
      %1211 = vrot.lane.b32.xlu0 %v1183, 70
      %v1212 = vpop.permute.xlu0 %1211
      %1213 = vrot.lane.b32.xlu0 %v1184, 70
      %v1214 = vpop.permute.xlu0 %1213
      %1215 = vrot.lane.b32.xlu0 %v1185, 70
      %v1216 = vpop.permute.xlu0 %1215
      %1217 = vrot.lane.b32.xlu0 %v1186, 70
      %v1218 = vpop.permute.xlu0 %1217
      %1219 = vrot.lane.b32.xlu0 %v1187, 70
      %v1220 = vpop.permute.xlu0 %1219
      %1221 = vrot.lane.b32.xlu0 %v1188, 70
      %v1222 = vpop.permute.xlu0 %1221
      %1223 = vrot.lane.b32.xlu0 %v1189, 70
      %v1224 = vpop.permute.xlu0 %1223
      %1225 = vrot.lane.b32.xlu0 %v1190, 70
      %v1226 = vpop.permute.xlu0 %1225
      %1227 = vrot.lane.b32.xlu0 %v1191, 70
      %v1228 = vpop.permute.xlu0 %1227
      %1229 = vrot.lane.b32.xlu0 %v1192, 70
      %v1230 = vpop.permute.xlu0 %1229
      %1231 = vrot.lane.b32.xlu0 %v1193, 70
      %v1232 = vpop.permute.xlu0 %1231
      %1233 = vrot.lane.b32.xlu0 %v1194, 70
      %v1234 = vpop.permute.xlu0 %1233
      %1235 = vrot.lane.b32.xlu0 %v1195, 70
      %v1236 = vpop.permute.xlu0 %1235
      %1237 = vrot.lane.b32.xlu0 %v1196, 70
      %v1238 = vpop.permute.xlu0 %1237
      %vm1239 = vcmask 572416
      %v1240 = vsel %vm1239, %v1212, %v1214
      %v1241 = vsel %vm1239, %v1214, %v1216
      %v1242 = vsel %vm1239, %v1216, %v1218
      %v1243 = vsel %vm1239, %v1218, %v1220
      %v1244 = vsel %vm1239, %v1220, %v1222
      %v1245 = vsel %vm1239, %v1222, %v1224
      %v1246 = vsel %vm1239, %v1226, %v1228
      %v1247 = vsel %vm1239, %v1228, %v1230
      %v1248 = vsel %vm1239, %v1230, %v1232
      %v1249 = vsel %vm1239, %v1232, %v1234
      %v1250 = vsel %vm1239, %v1234, %v1236
      %v1251 = vsel %vm1239, %v1236, %v1238
      %v1264 = vadd.f32 %v1158, %v1240
      %v1265 = vadd.f32 %v1159, %v1241
      %v1266 = vadd.f32 %v1160, %v1242
      %v1267 = vadd.f32 %v1161, %v1243
      %v1268 = vadd.f32 %v1162, %v1244
      %v1269 = vadd.f32 %v1163, %v1245
      %v1270 = vadd.f32 %v1164, %v1246
      %v1271 = vadd.f32 %v1165, %v1247
      %v1272 = vadd.f32 %v1166, %v1248
      %v1273 = vadd.f32 %v1167, %v1249
      %v1274 = vadd.f32 %v1168, %v1250
      %v1275 = vadd.f32 %v1169, %v1251
      %v1276 = vmax.f32 %v1264, 0.0
      %v1277 = vmax.f32 %v1265, 0.0
      %v1278 = vmax.f32 %v1266, 0.0
      %v1279 = vmax.f32 %v1267, 0.0
      %v1280 = vmax.f32 %v1268, 0.0
      %v1281 = vmax.f32 %v1269, 0.0
      %v1282 = vmax.f32 %v1270, 0.0
      %v1283 = vmax.f32 %v1271, 0.0
      %v1284 = vmax.f32 %v1272, 0.0
      %v1285 = vmax.f32 %v1273, 0.0
      %v1286 = vmax.f32 %v1274, 0.0
      %v1287 = vmax.f32 %v1275, 0.0
      %1300 = vrot.lane.b32.xlu0 %v1276, 127
      %v1301 = vpop.permute.xlu0 %1300
      %1302 = vrot.lane.b32.xlu0 %v1277, 127
      %v1303 = vpop.permute.xlu0 %1302
      %1304 = vrot.lane.b32.xlu0 %v1278, 127
      %v1305 = vpop.permute.xlu0 %1304
      %1306 = vrot.lane.b32.xlu0 %v1279, 127
      %v1307 = vpop.permute.xlu0 %1306
      %1308 = vrot.lane.b32.xlu0 %v1280, 127
      %v1309 = vpop.permute.xlu0 %1308
      %1310 = vrot.lane.b32.xlu0 %v1281, 127
      %v1311 = vpop.permute.xlu0 %1310
      %1312 = vrot.lane.b32.xlu0 %v1282, 127
      %v1313 = vpop.permute.xlu0 %1312
      %1314 = vrot.lane.b32.xlu0 %v1283, 127
      %v1315 = vpop.permute.xlu0 %1314
      %1316 = vrot.lane.b32.xlu0 %v1284, 127
      %v1317 = vpop.permute.xlu0 %1316
      %1318 = vrot.lane.b32.xlu0 %v1285, 127
      %v1319 = vpop.permute.xlu0 %1318
      %1320 = vrot.lane.b32.xlu0 %v1286, 127
      %v1321 = vpop.permute.xlu0 %1320
      %1322 = vrot.lane.b32.xlu0 %v1287, 127
      %v1323 = vpop.permute.xlu0 %1322
      %v1324 = vsel %vm537, %v1301, %v1303
      %v1325 = vsel %vm537, %v1303, %v1305
      %v1326 = vsel %vm537, %v1305, %v1307
      %v1327 = vsel %vm537, %v1307, %v1309
      %v1328 = vsel %vm537, %v1309, %v1311
      %v1329 = vsel %vm537, %v1313, %v1315
      %v1330 = vsel %vm537, %v1315, %v1317
      %v1331 = vsel %vm537, %v1317, %v1319
      %v1332 = vsel %vm537, %v1319, %v1321
      %v1333 = vsel %vm537, %v1321, %v1323
      %v1346 = vmax.f32 %v1276, %v1324
      %v1347 = vmax.f32 %v1277, %v1325
      %v1348 = vmax.f32 %v1278, %v1326
      %v1349 = vmax.f32 %v1279, %v1327
      %v1350 = vmax.f32 %v1280, %v1328
      %v1351 = vmax.f32 %v1281, %v1311
      %v1352 = vmax.f32 %v1282, %v1329
      %v1353 = vmax.f32 %v1283, %v1330
      %v1354 = vmax.f32 %v1284, %v1331
      %v1355 = vmax.f32 %v1285, %v1332
      %v1356 = vmax.f32 %v1286, %v1333
      %v1357 = vmax.f32 %v1287, %v1323
      %1370 = vrot.lane.b32.xlu0 %v1346, 100
      %v1371 = vpop.permute.xlu0 %1370
      %1372 = vrot.lane.b32.xlu0 %v1347, 100
      %v1373 = vpop.permute.xlu0 %1372
      %1374 = vrot.lane.b32.xlu0 %v1348, 100
      %v1375 = vpop.permute.xlu0 %1374
      %1376 = vrot.lane.b32.xlu0 %v1349, 100
      %v1377 = vpop.permute.xlu0 %1376
      %1378 = vrot.lane.b32.xlu0 %v1350, 100
      %v1379 = vpop.permute.xlu0 %1378
      %1380 = vrot.lane.b32.xlu0 %v1351, 100
      %v1381 = vpop.permute.xlu0 %1380
      %1382 = vrot.lane.b32.xlu0 %v1352, 100
      %v1383 = vpop.permute.xlu0 %1382
      %1384 = vrot.lane.b32.xlu0 %v1353, 100
      %v1385 = vpop.permute.xlu0 %1384
      %1386 = vrot.lane.b32.xlu0 %v1354, 100
      %v1387 = vpop.permute.xlu0 %1386
      %1388 = vrot.lane.b32.xlu0 %v1355, 100
      %v1389 = vpop.permute.xlu0 %1388
      %1390 = vrot.lane.b32.xlu0 %v1356, 100
      %v1391 = vpop.permute.xlu0 %1390
      %1392 = vrot.lane.b32.xlu0 %v1357, 100
      %v1393 = vpop.permute.xlu0 %1392
      %v1394 = vsel %vm729, %v1371, %v1373
      %v1395 = vsel %vm729, %v1373, %v1375
      %v1396 = vsel %vm729, %v1375, %v1377
      %v1397 = vsel %vm729, %v1377, %v1379
      %v1398 = vsel %vm729, %v1379, %v1381
      %v1399 = vsel %vm729, %v1383, %v1385
      %v1400 = vsel %vm729, %v1385, %v1387
      %v1401 = vsel %vm729, %v1387, %v1389
      %v1402 = vsel %vm729, %v1389, %v1391
      %v1403 = vsel %vm729, %v1391, %v1393
      %v1416 = vmax.f32 %v1346, %v1394
      %v1417 = vmax.f32 %v1347, %v1395
      %v1418 = vmax.f32 %v1348, %v1396
      %v1419 = vmax.f32 %v1349, %v1397
      %v1420 = vmax.f32 %v1350, %v1398
      %v1421 = vmax.f32 %v1351, %v1381
      %v1422 = vmax.f32 %v1352, %v1399
      %v1423 = vmax.f32 %v1353, %v1400
      %v1424 = vmax.f32 %v1354, %v1401
      %v1425 = vmax.f32 %v1355, %v1402
      %v1426 = vmax.f32 %v1356, %v1403
      %v1427 = vmax.f32 %v1357, %v1393
      %v1428 = vld [vmem:[%s5] sm:$0xff]
      %v1429 = vld [vmem:[%s5 + $0x8] sm:$0xff]
      %1431 = vset.pattern.permute.xlu0 0
      %1432 = vperm.xlu0 %1431, %v1428
      %v1433 = vpop.permute.xlu0 %1432
      %1436 = vset.pattern.permute.xlu0 0
      %1437 = vperm.xlu0 %1436, %v1429
      %v1438 = vpop.permute.xlu0 %1437
      %v1440 = vmul.f32 %v1416, %v1433
      %v1441 = vmul.f32 %v1417, %v1433
      %v1442 = vmul.f32 %v1418, %v1433
      %v1443 = vmul.f32 %v1419, %v1433
      %v1444 = vmul.f32 %v1420, %v1433
      %v1445 = vmul.f32 %v1421, %v1433
      %v1446 = vmul.f32 %v1422, %v1438
      %v1447 = vmul.f32 %v1423, %v1438
      %v1448 = vmul.f32 %v1424, %v1438
      %v1449 = vmul.f32 %v1425, %v1438
      %v1450 = vmul.f32 %v1426, %v1438
      %v1451 = vmul.f32 %v1427, %v1438
      %v1452 = vld [vmem:[%s6] sm:$0xff]
      %v1453 = vld [vmem:[%s6 + $0x8] sm:$0xff]
      %1455 = vset.pattern.permute.xlu0 0
      %1456 = vperm.xlu0 %1455, %v1452
      %v1457 = vpop.permute.xlu0 %1456
      %1460 = vset.pattern.permute.xlu0 0
      %1461 = vperm.xlu0 %1460, %v1453
      %v1462 = vpop.permute.xlu0 %1461
      %v1464 = vadd.f32 %v1440, %v1457
      %v1465 = vadd.f32 %v1441, %v1457
      %v1466 = vadd.f32 %v1442, %v1457
      %v1467 = vadd.f32 %v1443, %v1457
      %v1468 = vadd.f32 %v1444, %v1457
      %v1469 = vadd.f32 %v1445, %v1457
      %v1470 = vadd.f32 %v1446, %v1462
      %v1471 = vadd.f32 %v1447, %v1462
      %v1472 = vadd.f32 %v1448, %v1462
      %v1473 = vadd.f32 %v1449, %v1462
      %v1474 = vadd.f32 %v1450, %v1462
      %v1475 = vadd.f32 %v1451, %v1462
      %v1476 = vld [vmem:[%s2] sm:$0xff]
      %v1477 = vld [vmem:[%s2 + $0x8] sm:$0xff]
      %s1478 = scalar_lea.vmem %s2, 16
      %v1479 = vld [vmem:[%s1478] sm:$0xff]
      %v1480 = vld [vmem:[%s1478 + $0x8] sm:$0xff]
      %1491 = vrot.lane.b32.xlu0 %v1464, 126
      %v1492 = vpop.permute.xlu0 %1491
      %1493 = vrot.lane.b32.xlu0 %v1465, 126
      %v1494 = vpop.permute.xlu0 %1493
      %1495 = vrot.lane.b32.xlu0 %v1466, 126
      %v1496 = vpop.permute.xlu0 %1495
      %1497 = vrot.lane.b32.xlu0 %v1467, 126
      %v1498 = vpop.permute.xlu0 %1497
      %1499 = vrot.lane.b32.xlu0 %v1468, 126
      %v1500 = vpop.permute.xlu0 %1499
      %1501 = vrot.lane.b32.xlu0 %v1470, 126
      %v1502 = vpop.permute.xlu0 %1501
      %1503 = vrot.lane.b32.xlu0 %v1471, 126
      %v1504 = vpop.permute.xlu0 %1503
      %1505 = vrot.lane.b32.xlu0 %v1472, 126
      %v1506 = vpop.permute.xlu0 %1505
      %1507 = vrot.lane.b32.xlu0 %v1473, 126
      %v1508 = vpop.permute.xlu0 %1507
      %1509 = vrot.lane.b32.xlu0 %v1474, 126
      %v1510 = vpop.permute.xlu0 %1509
      %v1511 = vsel %vm633, %v1492, %v1494
      %v1512 = vsel %vm633, %v1494, %v1496
      %v1513 = vsel %vm633, %v1496, %v1498
      %v1514 = vsel %vm633, %v1498, %v1500
      %v1515 = vsel %vm633, %v1502, %v1504
      %v1516 = vsel %vm633, %v1504, %v1506
      %v1517 = vsel %vm633, %v1506, %v1508
      %v1518 = vsel %vm633, %v1508, %v1510
      %vm1529 = vcmask 130048
      %v1531 = vsel %vm1529, %v1479, 0
      %v1534 = vsel %vm1529, %v1480, 0
      %1536 = vmatpush.msra.mxu0 0.0
      %1537 = vmatpush.msra.mxu0 0.0
      %1538 = vmatpush.msra.mxu0 0.0
      %1539 = vmatpush.msra.mxu0 0.0
      %1540 = vmatpush.msra.mxu0 0.0
      %1541 = vmatpush.msra.mxu0 0.0
      %1542 = vmatpush.msra.mxu0 0.0
      %1543 = vmatpush.msra.mxu0 0.0
      %1544 = vmatpush.msra.mxu0 0.0
      %1545 = vmatpush.msra.mxu0 0.0
      %1546 = vmatpush.msra.mxu0 0.0
      %1547 = vmatpush.msra.mxu0 0.0
      %1548 = vmatpush.msra.mxu0 0.0
      %1549 = vmatpush.msra.mxu0 0.0
      %1550 = vmatpush.msra.mxu0 %v1515
      %1551 = vmatpush.msra.mxu0 %v1511
      %1552 = vmatmul.f32.gmra.mxu0 %v1531
      %v1553 = vpop.f32.mrf.mxu0
      %v1554 = vadd.f32 0.0, %v1553
      %1555 = vmatmul.f32.gmra.mxu0 %v1534
      %v1556 = vpop.f32.mrf.mxu0
      %v1557 = vadd.f32 0.0, %v1556
      %1558 = vdwg.mxu0
      %1559 = vmatpush.msra.mxu0 0.0
      %1560 = vmatpush.msra.mxu0 0.0
      %1561 = vmatpush.msra.mxu0 0.0
      %1562 = vmatpush.msra.mxu0 0.0
      %1563 = vmatpush.msra.mxu0 0.0
      %1564 = vmatpush.msra.mxu0 0.0
      %1565 = vmatpush.msra.mxu0 0.0
      %1566 = vmatpush.msra.mxu0 0.0
      %1567 = vmatpush.msra.mxu0 0.0
      %1568 = vmatpush.msra.mxu0 0.0
      %1569 = vmatpush.msra.mxu0 0.0
      %1570 = vmatpush.msra.mxu0 0.0
      %1571 = vmatpush.msra.mxu0 0.0
      %1572 = vmatpush.msra.mxu0 0.0
      %1573 = vmatpush.msra.mxu0 %v1516
      %1574 = vmatpush.msra.mxu0 %v1512
      %1575 = vmatmul.f32.gmra.mxu0 %v1531
      %v1576 = vpop.f32.mrf.mxu0
      %v1577 = vadd.f32 0.0, %v1576
      %1578 = vmatmul.f32.gmra.mxu0 %v1534
      %v1579 = vpop.f32.mrf.mxu0
      %v1580 = vadd.f32 0.0, %v1579
      %1581 = vdwg.mxu0
      %1582 = vmatpush.msra.mxu0 0.0
      %1583 = vmatpush.msra.mxu0 0.0
      %1584 = vmatpush.msra.mxu0 0.0
      %1585 = vmatpush.msra.mxu0 0.0
      %1586 = vmatpush.msra.mxu0 0.0
      %1587 = vmatpush.msra.mxu0 0.0
      %1588 = vmatpush.msra.mxu0 0.0
      %1589 = vmatpush.msra.mxu0 0.0
      %1590 = vmatpush.msra.mxu0 0.0
      %1591 = vmatpush.msra.mxu0 0.0
      %1592 = vmatpush.msra.mxu0 0.0
      %1593 = vmatpush.msra.mxu0 0.0
      %1594 = vmatpush.msra.mxu0 0.0
      %1595 = vmatpush.msra.mxu0 0.0
      %1596 = vmatpush.msra.mxu0 %v1517
      %1597 = vmatpush.msra.mxu0 %v1513
      %1598 = vmatmul.f32.gmra.mxu0 %v1531
      %v1599 = vpop.f32.mrf.mxu0
      %v1600 = vadd.f32 0.0, %v1599
      %1601 = vmatmul.f32.gmra.mxu0 %v1534
      %v1602 = vpop.f32.mrf.mxu0
      %v1603 = vadd.f32 0.0, %v1602
      %1604 = vdwg.mxu0
      %1605 = vmatpush.msra.mxu0 0.0
      %1606 = vmatpush.msra.mxu0 0.0
      %1607 = vmatpush.msra.mxu0 0.0
      %1608 = vmatpush.msra.mxu0 0.0
      %1609 = vmatpush.msra.mxu0 0.0
      %1610 = vmatpush.msra.mxu0 0.0
      %1611 = vmatpush.msra.mxu0 0.0
      %1612 = vmatpush.msra.mxu0 0.0
      %1613 = vmatpush.msra.mxu0 0.0
      %1614 = vmatpush.msra.mxu0 0.0
      %1615 = vmatpush.msra.mxu0 0.0
      %1616 = vmatpush.msra.mxu0 0.0
      %1617 = vmatpush.msra.mxu0 0.0
      %1618 = vmatpush.msra.mxu0 0.0
      %1619 = vmatpush.msra.mxu0 %v1518
      %1620 = vmatpush.msra.mxu0 %v1514
      %1621 = vmatmul.f32.gmra.mxu0 %v1531
      %v1622 = vpop.f32.mrf.mxu0
      %v1623 = vadd.f32 0.0, %v1622
      %1624 = vmatmul.f32.gmra.mxu0 %v1534
      %v1625 = vpop.f32.mrf.mxu0
      %v1626 = vadd.f32 0.0, %v1625
      %1627 = vdwg.mxu0
      %1628 = vmatpush.msra.mxu0 0.0
      %1629 = vmatpush.msra.mxu0 0.0
      %1630 = vmatpush.msra.mxu0 0.0
      %1631 = vmatpush.msra.mxu0 0.0
      %1632 = vmatpush.msra.mxu0 0.0
      %1633 = vmatpush.msra.mxu0 0.0
      %1634 = vmatpush.msra.mxu0 0.0
      %1635 = vmatpush.msra.mxu0 0.0
      %1636 = vmatpush.msra.mxu0 0.0
      %1637 = vmatpush.msra.mxu0 0.0
      %1638 = vmatpush.msra.mxu0 0.0
      %1639 = vmatpush.msra.mxu0 0.0
      %1640 = vmatpush.msra.mxu0 0.0
      %1641 = vmatpush.msra.mxu0 0.0
      %1642 = vmatpush.msra.mxu0 %v1510
      %1643 = vmatpush.msra.mxu0 %v1500
      %1644 = vmatmul.f32.gmra.mxu0 %v1531
      %v1645 = vpop.f32.mrf.mxu0
      %v1646 = vadd.f32 0.0, %v1645
      %1647 = vmatmul.f32.gmra.mxu0 %v1534
      %v1648 = vpop.f32.mrf.mxu0
      %v1649 = vadd.f32 0.0, %v1648
      %1650 = vdwg.mxu0
      %v1652 = vsel %vm1529, %v1476, 0
      %v1655 = vsel %vm1529, %v1477, 0
      %1657 = vmatpush.msra.mxu0 0.0
      %1658 = vmatpush.msra.mxu0 0.0
      %1659 = vmatpush.msra.mxu0 0.0
      %1660 = vmatpush.msra.mxu0 0.0
      %1661 = vmatpush.msra.mxu0 0.0
      %1662 = vmatpush.msra.mxu0 0.0
      %1663 = vmatpush.msra.mxu0 0.0
      %1664 = vmatpush.msra.mxu0 0.0
      %1665 = vmatpush.msra.mxu0 0.0
      %1666 = vmatpush.msra.mxu0 0.0
      %1667 = vmatpush.msra.mxu0 0.0
      %1668 = vmatpush.msra.mxu0 0.0
      %1669 = vmatpush.msra.mxu0 0.0
      %1670 = vmatpush.msra.mxu0 0.0
      %1671 = vmatpush.msra.mxu0 %v1470
      %1672 = vmatpush.msra.mxu0 %v1464
      %1673 = vmatmul.f32.gmra.mxu0 %v1652
      %v1674 = vpop.f32.mrf.mxu0
      %v1675 = vadd.f32 %v1554, %v1674
      %1676 = vmatmul.f32.gmra.mxu0 %v1655
      %v1677 = vpop.f32.mrf.mxu0
      %v1678 = vadd.f32 %v1557, %v1677
      %1679 = vdwg.mxu0
      %1680 = vmatpush.msra.mxu0 0.0
      %1681 = vmatpush.msra.mxu0 0.0
      %1682 = vmatpush.msra.mxu0 0.0
      %1683 = vmatpush.msra.mxu0 0.0
      %1684 = vmatpush.msra.mxu0 0.0
      %1685 = vmatpush.msra.mxu0 0.0
      %1686 = vmatpush.msra.mxu0 0.0
      %1687 = vmatpush.msra.mxu0 0.0
      %1688 = vmatpush.msra.mxu0 0.0
      %1689 = vmatpush.msra.mxu0 0.0
      %1690 = vmatpush.msra.mxu0 0.0
      %1691 = vmatpush.msra.mxu0 0.0
      %1692 = vmatpush.msra.mxu0 0.0
      %1693 = vmatpush.msra.mxu0 0.0
      %1694 = vmatpush.msra.mxu0 %v1471
      %1695 = vmatpush.msra.mxu0 %v1465
      %1696 = vmatmul.f32.gmra.mxu0 %v1652
      %v1697 = vpop.f32.mrf.mxu0
      %v1698 = vadd.f32 %v1577, %v1697
      %1699 = vmatmul.f32.gmra.mxu0 %v1655
      %v1700 = vpop.f32.mrf.mxu0
      %v1701 = vadd.f32 %v1580, %v1700
      %1702 = vdwg.mxu0
      %1703 = vmatpush.msra.mxu0 0.0
      %1704 = vmatpush.msra.mxu0 0.0
      %1705 = vmatpush.msra.mxu0 0.0
      %1706 = vmatpush.msra.mxu0 0.0
      %1707 = vmatpush.msra.mxu0 0.0
      %1708 = vmatpush.msra.mxu0 0.0
      %1709 = vmatpush.msra.mxu0 0.0
      %1710 = vmatpush.msra.mxu0 0.0
      %1711 = vmatpush.msra.mxu0 0.0
      %1712 = vmatpush.msra.mxu0 0.0
      %1713 = vmatpush.msra.mxu0 0.0
      %1714 = vmatpush.msra.mxu0 0.0
      %1715 = vmatpush.msra.mxu0 0.0
      %1716 = vmatpush.msra.mxu0 0.0
      %1717 = vmatpush.msra.mxu0 %v1472
      %1718 = vmatpush.msra.mxu0 %v1466
      %1719 = vmatmul.f32.gmra.mxu0 %v1652
      %v1720 = vpop.f32.mrf.mxu0
      %v1721 = vadd.f32 %v1600, %v1720
      %1722 = vmatmul.f32.gmra.mxu0 %v1655
      %v1723 = vpop.f32.mrf.mxu0
      %v1724 = vadd.f32 %v1603, %v1723
      %1725 = vdwg.mxu0
      %1726 = vmatpush.msra.mxu0 0.0
      %1727 = vmatpush.msra.mxu0 0.0
      %1728 = vmatpush.msra.mxu0 0.0
      %1729 = vmatpush.msra.mxu0 0.0
      %1730 = vmatpush.msra.mxu0 0.0
      %1731 = vmatpush.msra.mxu0 0.0
      %1732 = vmatpush.msra.mxu0 0.0
      %1733 = vmatpush.msra.mxu0 0.0
      %1734 = vmatpush.msra.mxu0 0.0
      %1735 = vmatpush.msra.mxu0 0.0
      %1736 = vmatpush.msra.mxu0 0.0
      %1737 = vmatpush.msra.mxu0 0.0
      %1738 = vmatpush.msra.mxu0 0.0
      %1739 = vmatpush.msra.mxu0 0.0
      %1740 = vmatpush.msra.mxu0 %v1473
      %1741 = vmatpush.msra.mxu0 %v1467
      %1742 = vmatmul.f32.gmra.mxu0 %v1652
      %v1743 = vpop.f32.mrf.mxu0
      %v1744 = vadd.f32 %v1623, %v1743
      %1745 = vmatmul.f32.gmra.mxu0 %v1655
      %v1746 = vpop.f32.mrf.mxu0
      %v1747 = vadd.f32 %v1626, %v1746
      %1748 = vdwg.mxu0
      %1749 = vmatpush.msra.mxu0 0.0
      %1750 = vmatpush.msra.mxu0 0.0
      %1751 = vmatpush.msra.mxu0 0.0
      %1752 = vmatpush.msra.mxu0 0.0
      %1753 = vmatpush.msra.mxu0 0.0
      %1754 = vmatpush.msra.mxu0 0.0
      %1755 = vmatpush.msra.mxu0 0.0
      %1756 = vmatpush.msra.mxu0 0.0
      %1757 = vmatpush.msra.mxu0 0.0
      %1758 = vmatpush.msra.mxu0 0.0
      %1759 = vmatpush.msra.mxu0 0.0
      %1760 = vmatpush.msra.mxu0 0.0
      %1761 = vmatpush.msra.mxu0 0.0
      %1762 = vmatpush.msra.mxu0 0.0
      %1763 = vmatpush.msra.mxu0 %v1474
      %1764 = vmatpush.msra.mxu0 %v1468
      %1765 = vmatmul.f32.gmra.mxu0 %v1652
      %v1766 = vpop.f32.mrf.mxu0
      %v1767 = vadd.f32 %v1646, %v1766
      %1768 = vmatmul.f32.gmra.mxu0 %v1655
      %v1769 = vpop.f32.mrf.mxu0
      %v1770 = vadd.f32 %v1649, %v1769
      %1771 = vdwg.mxu0
      %s1772 = scalar_lea.vmem %s2, 32
      %v1773 = vld [vmem:[%s1772] sm:$0xff]
      %v1774 = vld [vmem:[%s1772 + $0x8] sm:$0xff]
      %1775 = vrot.lane.b32.xlu0 %v1464, 124
      %v1776 = vpop.permute.xlu0 %1775
      %1777 = vrot.lane.b32.xlu0 %v1465, 124
      %v1778 = vpop.permute.xlu0 %1777
      %1779 = vrot.lane.b32.xlu0 %v1466, 124
      %v1780 = vpop.permute.xlu0 %1779
      %1781 = vrot.lane.b32.xlu0 %v1467, 124
      %v1782 = vpop.permute.xlu0 %1781
      %1783 = vrot.lane.b32.xlu0 %v1468, 124
      %v1784 = vpop.permute.xlu0 %1783
      %1785 = vrot.lane.b32.xlu0 %v1470, 124
      %v1786 = vpop.permute.xlu0 %1785
      %1787 = vrot.lane.b32.xlu0 %v1471, 124
      %v1788 = vpop.permute.xlu0 %1787
      %1789 = vrot.lane.b32.xlu0 %v1472, 124
      %v1790 = vpop.permute.xlu0 %1789
      %1791 = vrot.lane.b32.xlu0 %v1473, 124
      %v1792 = vpop.permute.xlu0 %1791
      %1793 = vrot.lane.b32.xlu0 %v1474, 124
      %v1794 = vpop.permute.xlu0 %1793
      %vm1795 = vcmask 1014784
      %v1796 = vsel %vm1795, %v1776, %v1778
      %v1797 = vsel %vm1795, %v1778, %v1780
      %v1798 = vsel %vm1795, %v1780, %v1782
      %v1799 = vsel %vm1795, %v1782, %v1784
      %v1800 = vsel %vm1795, %v1786, %v1788
      %v1801 = vsel %vm1795, %v1788, %v1790
      %v1802 = vsel %vm1795, %v1790, %v1792
      %v1803 = vsel %vm1795, %v1792, %v1794
      %v1815 = vsel %vm1529, %v1773, 0
      %v1818 = vsel %vm1529, %v1774, 0
      %1820 = vmatpush.msra.mxu0 0.0
      %1821 = vmatpush.msra.mxu0 0.0
      %1822 = vmatpush.msra.mxu0 0.0
      %1823 = vmatpush.msra.mxu0 0.0
      %1824 = vmatpush.msra.mxu0 0.0
      %1825 = vmatpush.msra.mxu0 0.0
      %1826 = vmatpush.msra.mxu0 0.0
      %1827 = vmatpush.msra.mxu0 0.0
      %1828 = vmatpush.msra.mxu0 0.0
      %1829 = vmatpush.msra.mxu0 0.0
      %1830 = vmatpush.msra.mxu0 0.0
      %1831 = vmatpush.msra.mxu0 0.0
      %1832 = vmatpush.msra.mxu0 0.0
      %1833 = vmatpush.msra.mxu0 0.0
      %1834 = vmatpush.msra.mxu0 %v1800
      %1835 = vmatpush.msra.mxu0 %v1796
      %1836 = vmatmul.f32.gmra.mxu0 %v1815
      %v1837 = vpop.f32.mrf.mxu0
      %v1838 = vadd.f32 0.0, %v1837
      %1839 = vmatmul.f32.gmra.mxu0 %v1818
      %v1840 = vpop.f32.mrf.mxu0
      %v1841 = vadd.f32 0.0, %v1840
      %1842 = vdwg.mxu0
      %1843 = vmatpush.msra.mxu0 0.0
      %1844 = vmatpush.msra.mxu0 0.0
      %1845 = vmatpush.msra.mxu0 0.0
      %1846 = vmatpush.msra.mxu0 0.0
      %1847 = vmatpush.msra.mxu0 0.0
      %1848 = vmatpush.msra.mxu0 0.0
      %1849 = vmatpush.msra.mxu0 0.0
      %1850 = vmatpush.msra.mxu0 0.0
      %1851 = vmatpush.msra.mxu0 0.0
      %1852 = vmatpush.msra.mxu0 0.0
      %1853 = vmatpush.msra.mxu0 0.0
      %1854 = vmatpush.msra.mxu0 0.0
      %1855 = vmatpush.msra.mxu0 0.0
      %1856 = vmatpush.msra.mxu0 0.0
      %1857 = vmatpush.msra.mxu0 %v1801
      %1858 = vmatpush.msra.mxu0 %v1797
      %1859 = vmatmul.f32.gmra.mxu0 %v1815
      %v1860 = vpop.f32.mrf.mxu0
      %v1861 = vadd.f32 0.0, %v1860
      %1862 = vmatmul.f32.gmra.mxu0 %v1818
      %v1863 = vpop.f32.mrf.mxu0
      %v1864 = vadd.f32 0.0, %v1863
      %1865 = vdwg.mxu0
      %1866 = vmatpush.msra.mxu0 0.0
      %1867 = vmatpush.msra.mxu0 0.0
      %1868 = vmatpush.msra.mxu0 0.0
      %1869 = vmatpush.msra.mxu0 0.0
      %1870 = vmatpush.msra.mxu0 0.0
      %1871 = vmatpush.msra.mxu0 0.0
      %1872 = vmatpush.msra.mxu0 0.0
      %1873 = vmatpush.msra.mxu0 0.0
      %1874 = vmatpush.msra.mxu0 0.0
      %1875 = vmatpush.msra.mxu0 0.0
      %1876 = vmatpush.msra.mxu0 0.0
      %1877 = vmatpush.msra.mxu0 0.0
      %1878 = vmatpush.msra.mxu0 0.0
      %1879 = vmatpush.msra.mxu0 0.0
      %1880 = vmatpush.msra.mxu0 %v1802
      %1881 = vmatpush.msra.mxu0 %v1798
      %1882 = vmatmul.f32.gmra.mxu0 %v1815
      %v1883 = vpop.f32.mrf.mxu0
      %v1884 = vadd.f32 0.0, %v1883
      %1885 = vmatmul.f32.gmra.mxu0 %v1818
      %v1886 = vpop.f32.mrf.mxu0
      %v1887 = vadd.f32 0.0, %v1886
      %1888 = vdwg.mxu0
      %1889 = vmatpush.msra.mxu0 0.0
      %1890 = vmatpush.msra.mxu0 0.0
      %1891 = vmatpush.msra.mxu0 0.0
      %1892 = vmatpush.msra.mxu0 0.0
      %1893 = vmatpush.msra.mxu0 0.0
      %1894 = vmatpush.msra.mxu0 0.0
      %1895 = vmatpush.msra.mxu0 0.0
      %1896 = vmatpush.msra.mxu0 0.0
      %1897 = vmatpush.msra.mxu0 0.0
      %1898 = vmatpush.msra.mxu0 0.0
      %1899 = vmatpush.msra.mxu0 0.0
      %1900 = vmatpush.msra.mxu0 0.0
      %1901 = vmatpush.msra.mxu0 0.0
      %1902 = vmatpush.msra.mxu0 0.0
      %1903 = vmatpush.msra.mxu0 %v1803
      %1904 = vmatpush.msra.mxu0 %v1799
      %1905 = vmatmul.f32.gmra.mxu0 %v1815
      %v1906 = vpop.f32.mrf.mxu0
      %v1907 = vadd.f32 0.0, %v1906
      %1908 = vmatmul.f32.gmra.mxu0 %v1818
      %v1909 = vpop.f32.mrf.mxu0
      %v1910 = vadd.f32 0.0, %v1909
      %1911 = vdwg.mxu0
      %1912 = vmatpush.msra.mxu0 0.0
      %1913 = vmatpush.msra.mxu0 0.0
      %1914 = vmatpush.msra.mxu0 0.0
      %1915 = vmatpush.msra.mxu0 0.0
      %1916 = vmatpush.msra.mxu0 0.0
      %1917 = vmatpush.msra.mxu0 0.0
      %1918 = vmatpush.msra.mxu0 0.0
      %1919 = vmatpush.msra.mxu0 0.0
      %1920 = vmatpush.msra.mxu0 0.0
      %1921 = vmatpush.msra.mxu0 0.0
      %1922 = vmatpush.msra.mxu0 0.0
      %1923 = vmatpush.msra.mxu0 0.0
      %1924 = vmatpush.msra.mxu0 0.0
      %1925 = vmatpush.msra.mxu0 0.0
      %1926 = vmatpush.msra.mxu0 %v1794
      %1927 = vmatpush.msra.mxu0 %v1784
      %1928 = vmatmul.f32.gmra.mxu0 %v1815
      %v1929 = vpop.f32.mrf.mxu0
      %v1930 = vadd.f32 0.0, %v1929
      %1931 = vmatmul.f32.gmra.mxu0 %v1818
      %v1932 = vpop.f32.mrf.mxu0
      %v1933 = vadd.f32 0.0, %v1932
      %1934 = vdwg.mxu0
      %v1935 = vadd.f32 %v1675, %v1838
      %v1936 = vadd.f32 %v1698, %v1861
      %v1937 = vadd.f32 %v1721, %v1884
      %v1938 = vadd.f32 %v1744, %v1907
      %v1939 = vadd.f32 %v1767, %v1930
      %v1940 = vadd.f32 %v1678, %v1841
      %v1941 = vadd.f32 %v1701, %v1864
      %v1942 = vadd.f32 %v1724, %v1887
      %v1943 = vadd.f32 %v1747, %v1910
      %v1944 = vadd.f32 %v1770, %v1933
      %s1945 = scalar_lea.vmem %s2, 48
      %v1946 = vld [vmem:[%s1945] sm:$0xff]
      %v1947 = vld [vmem:[%s1945 + $0x8] sm:$0xff]
      %1948 = vrot.lane.b32.xlu0 %v1464, 72
      %v1949 = vpop.permute.xlu0 %1948
      %1950 = vrot.lane.b32.xlu0 %v1465, 72
      %v1951 = vpop.permute.xlu0 %1950
      %1952 = vrot.lane.b32.xlu0 %v1466, 72
      %v1953 = vpop.permute.xlu0 %1952
      %1954 = vrot.lane.b32.xlu0 %v1467, 72
      %v1955 = vpop.permute.xlu0 %1954
      %1956 = vrot.lane.b32.xlu0 %v1468, 72
      %v1957 = vpop.permute.xlu0 %1956
      %1958 = vrot.lane.b32.xlu0 %v1470, 72
      %v1959 = vpop.permute.xlu0 %1958
      %1960 = vrot.lane.b32.xlu0 %v1471, 72
      %v1961 = vpop.permute.xlu0 %1960
      %1962 = vrot.lane.b32.xlu0 %v1472, 72
      %v1963 = vpop.permute.xlu0 %1962
      %1964 = vrot.lane.b32.xlu0 %v1473, 72
      %v1965 = vpop.permute.xlu0 %1964
      %1966 = vrot.lane.b32.xlu0 %v1474, 72
      %v1967 = vpop.permute.xlu0 %1966
      %v1968 = vsel %vm1027, %v1949, %v1951
      %v1969 = vsel %vm1027, %v1951, %v1953
      %v1970 = vsel %vm1027, %v1953, %v1955
      %v1971 = vsel %vm1027, %v1955, %v1957
      %v1972 = vsel %vm1027, %v1959, %v1961
      %v1973 = vsel %vm1027, %v1961, %v1963
      %v1974 = vsel %vm1027, %v1963, %v1965
      %v1975 = vsel %vm1027, %v1965, %v1967
      %v1987 = vsel %vm1529, %v1946, 0
      %v1990 = vsel %vm1529, %v1947, 0
      %1992 = vmatpush.msra.mxu0 0.0
      %1993 = vmatpush.msra.mxu0 0.0
      %1994 = vmatpush.msra.mxu0 0.0
      %1995 = vmatpush.msra.mxu0 0.0
      %1996 = vmatpush.msra.mxu0 0.0
      %1997 = vmatpush.msra.mxu0 0.0
      %1998 = vmatpush.msra.mxu0 0.0
      %1999 = vmatpush.msra.mxu0 0.0
      %2000 = vmatpush.msra.mxu0 0.0
      %2001 = vmatpush.msra.mxu0 0.0
      %2002 = vmatpush.msra.mxu0 0.0
      %2003 = vmatpush.msra.mxu0 0.0
      %2004 = vmatpush.msra.mxu0 0.0
      %2005 = vmatpush.msra.mxu0 0.0
      %2006 = vmatpush.msra.mxu0 %v1972
      %2007 = vmatpush.msra.mxu0 %v1968
      %2008 = vmatmul.f32.gmra.mxu0 %v1987
      %v2009 = vpop.f32.mrf.mxu0
      %v2010 = vadd.f32 0.0, %v2009
      %2011 = vmatmul.f32.gmra.mxu0 %v1990
      %v2012 = vpop.f32.mrf.mxu0
      %v2013 = vadd.f32 0.0, %v2012
      %2014 = vdwg.mxu0
      %2015 = vmatpush.msra.mxu0 0.0
      %2016 = vmatpush.msra.mxu0 0.0
      %2017 = vmatpush.msra.mxu0 0.0
      %2018 = vmatpush.msra.mxu0 0.0
      %2019 = vmatpush.msra.mxu0 0.0
      %2020 = vmatpush.msra.mxu0 0.0
      %2021 = vmatpush.msra.mxu0 0.0
      %2022 = vmatpush.msra.mxu0 0.0
      %2023 = vmatpush.msra.mxu0 0.0
      %2024 = vmatpush.msra.mxu0 0.0
      %2025 = vmatpush.msra.mxu0 0.0
      %2026 = vmatpush.msra.mxu0 0.0
      %2027 = vmatpush.msra.mxu0 0.0
      %2028 = vmatpush.msra.mxu0 0.0
      %2029 = vmatpush.msra.mxu0 %v1973
      %2030 = vmatpush.msra.mxu0 %v1969
      %2031 = vmatmul.f32.gmra.mxu0 %v1987
      %v2032 = vpop.f32.mrf.mxu0
      %v2033 = vadd.f32 0.0, %v2032
      %2034 = vmatmul.f32.gmra.mxu0 %v1990
      %v2035 = vpop.f32.mrf.mxu0
      %v2036 = vadd.f32 0.0, %v2035
      %2037 = vdwg.mxu0
      %2038 = vmatpush.msra.mxu0 0.0
      %2039 = vmatpush.msra.mxu0 0.0
      %2040 = vmatpush.msra.mxu0 0.0
      %2041 = vmatpush.msra.mxu0 0.0
      %2042 = vmatpush.msra.mxu0 0.0
      %2043 = vmatpush.msra.mxu0 0.0
      %2044 = vmatpush.msra.mxu0 0.0
      %2045 = vmatpush.msra.mxu0 0.0
      %2046 = vmatpush.msra.mxu0 0.0
      %2047 = vmatpush.msra.mxu0 0.0
      %2048 = vmatpush.msra.mxu0 0.0
      %2049 = vmatpush.msra.mxu0 0.0
      %2050 = vmatpush.msra.mxu0 0.0
      %2051 = vmatpush.msra.mxu0 0.0
      %2052 = vmatpush.msra.mxu0 %v1974
      %2053 = vmatpush.msra.mxu0 %v1970
      %2054 = vmatmul.f32.gmra.mxu0 %v1987
      %v2055 = vpop.f32.mrf.mxu0
      %v2056 = vadd.f32 0.0, %v2055
      %2057 = vmatmul.f32.gmra.mxu0 %v1990
      %v2058 = vpop.f32.mrf.mxu0
      %v2059 = vadd.f32 0.0, %v2058
      %2060 = vdwg.mxu0
      %2061 = vmatpush.msra.mxu0 0.0
      %2062 = vmatpush.msra.mxu0 0.0
      %2063 = vmatpush.msra.mxu0 0.0
      %2064 = vmatpush.msra.mxu0 0.0
      %2065 = vmatpush.msra.mxu0 0.0
      %2066 = vmatpush.msra.mxu0 0.0
      %2067 = vmatpush.msra.mxu0 0.0
      %2068 = vmatpush.msra.mxu0 0.0
      %2069 = vmatpush.msra.mxu0 0.0
      %2070 = vmatpush.msra.mxu0 0.0
      %2071 = vmatpush.msra.mxu0 0.0
      %2072 = vmatpush.msra.mxu0 0.0
      %2073 = vmatpush.msra.mxu0 0.0
      %2074 = vmatpush.msra.mxu0 0.0
      %2075 = vmatpush.msra.mxu0 %v1975
      %2076 = vmatpush.msra.mxu0 %v1971
      %2077 = vmatmul.f32.gmra.mxu0 %v1987
      %v2078 = vpop.f32.mrf.mxu0
      %v2079 = vadd.f32 0.0, %v2078
      %2080 = vmatmul.f32.gmra.mxu0 %v1990
      %v2081 = vpop.f32.mrf.mxu0
      %v2082 = vadd.f32 0.0, %v2081
      %2083 = vdwg.mxu0
      %2084 = vmatpush.msra.mxu0 0.0
      %2085 = vmatpush.msra.mxu0 0.0
      %2086 = vmatpush.msra.mxu0 0.0
      %2087 = vmatpush.msra.mxu0 0.0
      %2088 = vmatpush.msra.mxu0 0.0
      %2089 = vmatpush.msra.mxu0 0.0
      %2090 = vmatpush.msra.mxu0 0.0
      %2091 = vmatpush.msra.mxu0 0.0
      %2092 = vmatpush.msra.mxu0 0.0
      %2093 = vmatpush.msra.mxu0 0.0
      %2094 = vmatpush.msra.mxu0 0.0
      %2095 = vmatpush.msra.mxu0 0.0
      %2096 = vmatpush.msra.mxu0 0.0
      %2097 = vmatpush.msra.mxu0 0.0
      %2098 = vmatpush.msra.mxu0 %v1967
      %2099 = vmatpush.msra.mxu0 %v1957
      %2100 = vmatmul.f32.gmra.mxu0 %v1987
      %v2101 = vpop.f32.mrf.mxu0
      %v2102 = vadd.f32 0.0, %v2101
      %2103 = vmatmul.f32.gmra.mxu0 %v1990
      %v2104 = vpop.f32.mrf.mxu0
      %v2105 = vadd.f32 0.0, %v2104
      %2106 = vdwg.mxu0
      %v2107 = vadd.f32 %v1935, %v2010
      %v2108 = vadd.f32 %v1936, %v2033
      %v2109 = vadd.f32 %v1937, %v2056
      %v2110 = vadd.f32 %v1938, %v2079
      %v2111 = vadd.f32 %v1939, %v2102
      %v2112 = vadd.f32 %v1940, %v2013
      %v2113 = vadd.f32 %v1941, %v2036
      %v2114 = vadd.f32 %v1942, %v2059
      %v2115 = vadd.f32 %v1943, %v2082
      %v2116 = vadd.f32 %v1944, %v2105
      %s2117 = scalar_lea.vmem %s2, 64
      %v2118 = vld [vmem:[%s2117] sm:$0xff]
      %v2119 = vld [vmem:[%s2117 + $0x8] sm:$0xff]
      %2120 = vrot.lane.b32.xlu0 %v1464, 70
      %v2121 = vpop.permute.xlu0 %2120
      %2122 = vrot.lane.b32.xlu0 %v1465, 70
      %v2123 = vpop.permute.xlu0 %2122
      %2124 = vrot.lane.b32.xlu0 %v1466, 70
      %v2125 = vpop.permute.xlu0 %2124
      %2126 = vrot.lane.b32.xlu0 %v1467, 70
      %v2127 = vpop.permute.xlu0 %2126
      %2128 = vrot.lane.b32.xlu0 %v1468, 70
      %v2129 = vpop.permute.xlu0 %2128
      %2130 = vrot.lane.b32.xlu0 %v1470, 70
      %v2131 = vpop.permute.xlu0 %2130
      %2132 = vrot.lane.b32.xlu0 %v1471, 70
      %v2133 = vpop.permute.xlu0 %2132
      %2134 = vrot.lane.b32.xlu0 %v1472, 70
      %v2135 = vpop.permute.xlu0 %2134
      %2136 = vrot.lane.b32.xlu0 %v1473, 70
      %v2137 = vpop.permute.xlu0 %2136
      %2138 = vrot.lane.b32.xlu0 %v1474, 70
      %v2139 = vpop.permute.xlu0 %2138
      %v2140 = vsel %vm1239, %v2121, %v2123
      %v2141 = vsel %vm1239, %v2123, %v2125
      %v2142 = vsel %vm1239, %v2125, %v2127
      %v2143 = vsel %vm1239, %v2127, %v2129
      %v2144 = vsel %vm1239, %v2131, %v2133
      %v2145 = vsel %vm1239, %v2133, %v2135
      %v2146 = vsel %vm1239, %v2135, %v2137
      %v2147 = vsel %vm1239, %v2137, %v2139
      %v2159 = vsel %vm1529, %v2118, 0
      %v2162 = vsel %vm1529, %v2119, 0
      %2164 = vmatpush.msra.mxu0 0.0
      %2165 = vmatpush.msra.mxu0 0.0
      %2166 = vmatpush.msra.mxu0 0.0
      %2167 = vmatpush.msra.mxu0 0.0
      %2168 = vmatpush.msra.mxu0 0.0
      %2169 = vmatpush.msra.mxu0 0.0
      %2170 = vmatpush.msra.mxu0 0.0
      %2171 = vmatpush.msra.mxu0 0.0
      %2172 = vmatpush.msra.mxu0 0.0
      %2173 = vmatpush.msra.mxu0 0.0
      %2174 = vmatpush.msra.mxu0 0.0
      %2175 = vmatpush.msra.mxu0 0.0
      %2176 = vmatpush.msra.mxu0 0.0
      %2177 = vmatpush.msra.mxu0 0.0
      %2178 = vmatpush.msra.mxu0 %v2144
      %2179 = vmatpush.msra.mxu0 %v2140
      %2180 = vmatmul.f32.gmra.mxu0 %v2159
      %v2181 = vpop.f32.mrf.mxu0
      %v2182 = vadd.f32 0.0, %v2181
      %2183 = vmatmul.f32.gmra.mxu0 %v2162
      %v2184 = vpop.f32.mrf.mxu0
      %v2185 = vadd.f32 0.0, %v2184
      %2186 = vdwg.mxu0
      %2187 = vmatpush.msra.mxu0 0.0
      %2188 = vmatpush.msra.mxu0 0.0
      %2189 = vmatpush.msra.mxu0 0.0
      %2190 = vmatpush.msra.mxu0 0.0
      %2191 = vmatpush.msra.mxu0 0.0
      %2192 = vmatpush.msra.mxu0 0.0
      %2193 = vmatpush.msra.mxu0 0.0
      %2194 = vmatpush.msra.mxu0 0.0
      %2195 = vmatpush.msra.mxu0 0.0
      %2196 = vmatpush.msra.mxu0 0.0
      %2197 = vmatpush.msra.mxu0 0.0
      %2198 = vmatpush.msra.mxu0 0.0
      %2199 = vmatpush.msra.mxu0 0.0
      %2200 = vmatpush.msra.mxu0 0.0
      %2201 = vmatpush.msra.mxu0 %v2145
      %2202 = vmatpush.msra.mxu0 %v2141
      %2203 = vmatmul.f32.gmra.mxu0 %v2159
      %v2204 = vpop.f32.mrf.mxu0
      %v2205 = vadd.f32 0.0, %v2204
      %2206 = vmatmul.f32.gmra.mxu0 %v2162
      %v2207 = vpop.f32.mrf.mxu0
      %v2208 = vadd.f32 0.0, %v2207
      %2209 = vdwg.mxu0
      %2210 = vmatpush.msra.mxu0 0.0
      %2211 = vmatpush.msra.mxu0 0.0
      %2212 = vmatpush.msra.mxu0 0.0
      %2213 = vmatpush.msra.mxu0 0.0
      %2214 = vmatpush.msra.mxu0 0.0
      %2215 = vmatpush.msra.mxu0 0.0
      %2216 = vmatpush.msra.mxu0 0.0
      %2217 = vmatpush.msra.mxu0 0.0
      %2218 = vmatpush.msra.mxu0 0.0
      %2219 = vmatpush.msra.mxu0 0.0
      %2220 = vmatpush.msra.mxu0 0.0
      %2221 = vmatpush.msra.mxu0 0.0
      %2222 = vmatpush.msra.mxu0 0.0
      %2223 = vmatpush.msra.mxu0 0.0
      %2224 = vmatpush.msra.mxu0 %v2146
      %2225 = vmatpush.msra.mxu0 %v2142
      %2226 = vmatmul.f32.gmra.mxu0 %v2159
      %v2227 = vpop.f32.mrf.mxu0
      %v2228 = vadd.f32 0.0, %v2227
      %2229 = vmatmul.f32.gmra.mxu0 %v2162
      %v2230 = vpop.f32.mrf.mxu0
      %v2231 = vadd.f32 0.0, %v2230
      %2232 = vdwg.mxu0
      %2233 = vmatpush.msra.mxu0 0.0
      %2234 = vmatpush.msra.mxu0 0.0
      %2235 = vmatpush.msra.mxu0 0.0
      %2236 = vmatpush.msra.mxu0 0.0
      %2237 = vmatpush.msra.mxu0 0.0
      %2238 = vmatpush.msra.mxu0 0.0
      %2239 = vmatpush.msra.mxu0 0.0
      %2240 = vmatpush.msra.mxu0 0.0
      %2241 = vmatpush.msra.mxu0 0.0
      %2242 = vmatpush.msra.mxu0 0.0
      %2243 = vmatpush.msra.mxu0 0.0
      %2244 = vmatpush.msra.mxu0 0.0
      %2245 = vmatpush.msra.mxu0 0.0
      %2246 = vmatpush.msra.mxu0 0.0
      %2247 = vmatpush.msra.mxu0 %v2147
      %2248 = vmatpush.msra.mxu0 %v2143
      %2249 = vmatmul.f32.gmra.mxu0 %v2159
      %v2250 = vpop.f32.mrf.mxu0
      %v2251 = vadd.f32 0.0, %v2250
      %2252 = vmatmul.f32.gmra.mxu0 %v2162
      %v2253 = vpop.f32.mrf.mxu0
      %v2254 = vadd.f32 0.0, %v2253
      %2255 = vdwg.mxu0
      %2256 = vmatpush.msra.mxu0 0.0
      %2257 = vmatpush.msra.mxu0 0.0
      %2258 = vmatpush.msra.mxu0 0.0
      %2259 = vmatpush.msra.mxu0 0.0
      %2260 = vmatpush.msra.mxu0 0.0
      %2261 = vmatpush.msra.mxu0 0.0
      %2262 = vmatpush.msra.mxu0 0.0
      %2263 = vmatpush.msra.mxu0 0.0
      %2264 = vmatpush.msra.mxu0 0.0
      %2265 = vmatpush.msra.mxu0 0.0
      %2266 = vmatpush.msra.mxu0 0.0
      %2267 = vmatpush.msra.mxu0 0.0
      %2268 = vmatpush.msra.mxu0 0.0
      %2269 = vmatpush.msra.mxu0 0.0
      %2270 = vmatpush.msra.mxu0 %v2139
      %2271 = vmatpush.msra.mxu0 %v2129
      %2272 = vmatmul.f32.gmra.mxu0 %v2159
      %v2273 = vpop.f32.mrf.mxu0
      %v2274 = vadd.f32 0.0, %v2273
      %2275 = vmatmul.f32.gmra.mxu0 %v2162
      %v2276 = vpop.f32.mrf.mxu0
      %v2277 = vadd.f32 0.0, %v2276
      %2278 = vdwg.mxu0
      %v2279 = vadd.f32 %v2107, %v2182
      %v2280 = vadd.f32 %v2108, %v2205
      %v2281 = vadd.f32 %v2109, %v2228
      %v2282 = vadd.f32 %v2110, %v2251
      %v2283 = vadd.f32 %v2111, %v2274
      %v2284 = vadd.f32 %v2112, %v2185
      %v2285 = vadd.f32 %v2113, %v2208
      %v2286 = vadd.f32 %v2114, %v2231
      %v2287 = vadd.f32 %v2115, %v2254
      %v2288 = vadd.f32 %v2116, %v2277
      %s2289 = scalar_lea.vmem %s2, 80
      %v2290 = vld [vmem:[%s2289] sm:$0xff]
      %v2291 = vld [vmem:[%s2289 + $0x8] sm:$0xff]
      %2294 = vrot.lane.b32.xlu0 %v1464, 68
      %v2295 = vpop.permute.xlu0 %2294
      %2296 = vrot.lane.b32.xlu0 %v1465, 68
      %v2297 = vpop.permute.xlu0 %2296
      %2298 = vrot.lane.b32.xlu0 %v1466, 68
      %v2299 = vpop.permute.xlu0 %2298
      %2300 = vrot.lane.b32.xlu0 %v1467, 68
      %v2301 = vpop.permute.xlu0 %2300
      %2302 = vrot.lane.b32.xlu0 %v1468, 68
      %v2303 = vpop.permute.xlu0 %2302
      %2304 = vrot.lane.b32.xlu0 %v1469, 68
      %v2305 = vpop.permute.xlu0 %2304
      %2306 = vrot.lane.b32.xlu0 %v1470, 68
      %v2307 = vpop.permute.xlu0 %2306
      %2308 = vrot.lane.b32.xlu0 %v1471, 68
      %v2309 = vpop.permute.xlu0 %2308
      %2310 = vrot.lane.b32.xlu0 %v1472, 68
      %v2311 = vpop.permute.xlu0 %2310
      %2312 = vrot.lane.b32.xlu0 %v1473, 68
      %v2313 = vpop.permute.xlu0 %2312
      %2314 = vrot.lane.b32.xlu0 %v1474, 68
      %v2315 = vpop.permute.xlu0 %2314
      %2316 = vrot.lane.b32.xlu0 %v1475, 68
      %v2317 = vpop.permute.xlu0 %2316
      %vm2318 = vcmask 556032
      %v2319 = vsel %vm2318, %v2295, %v2297
      %v2320 = vsel %vm2318, %v2297, %v2299
      %v2321 = vsel %vm2318, %v2299, %v2301
      %v2322 = vsel %vm2318, %v2301, %v2303
      %v2323 = vsel %vm2318, %v2303, %v2305
      %v2324 = vsel %vm2318, %v2307, %v2309
      %v2325 = vsel %vm2318, %v2309, %v2311
      %v2326 = vsel %vm2318, %v2311, %v2313
      %v2327 = vsel %vm2318, %v2313, %v2315
      %v2328 = vsel %vm2318, %v2315, %v2317
      %v2340 = vsel %vm1529, %v2290, 0
      %v2343 = vsel %vm1529, %v2291, 0
      %2345 = vmatpush.msra.mxu0 0.0
      %2346 = vmatpush.msra.mxu0 0.0
      %2347 = vmatpush.msra.mxu0 0.0
      %2348 = vmatpush.msra.mxu0 0.0
      %2349 = vmatpush.msra.mxu0 0.0
      %2350 = vmatpush.msra.mxu0 0.0
      %2351 = vmatpush.msra.mxu0 0.0
      %2352 = vmatpush.msra.mxu0 0.0
      %2353 = vmatpush.msra.mxu0 0.0
      %2354 = vmatpush.msra.mxu0 0.0
      %2355 = vmatpush.msra.mxu0 0.0
      %2356 = vmatpush.msra.mxu0 0.0
      %2357 = vmatpush.msra.mxu0 0.0
      %2358 = vmatpush.msra.mxu0 0.0
      %2359 = vmatpush.msra.mxu0 %v2324
      %2360 = vmatpush.msra.mxu0 %v2319
      %2361 = vmatmul.f32.gmra.mxu0 %v2340
      %v2362 = vpop.f32.mrf.mxu0
      %v2363 = vadd.f32 0.0, %v2362
      %2364 = vmatmul.f32.gmra.mxu0 %v2343
      %v2365 = vpop.f32.mrf.mxu0
      %v2366 = vadd.f32 0.0, %v2365
      %2367 = vdwg.mxu0
      %2368 = vmatpush.msra.mxu0 0.0
      %2369 = vmatpush.msra.mxu0 0.0
      %2370 = vmatpush.msra.mxu0 0.0
      %2371 = vmatpush.msra.mxu0 0.0
      %2372 = vmatpush.msra.mxu0 0.0
      %2373 = vmatpush.msra.mxu0 0.0
      %2374 = vmatpush.msra.mxu0 0.0
      %2375 = vmatpush.msra.mxu0 0.0
      %2376 = vmatpush.msra.mxu0 0.0
      %2377 = vmatpush.msra.mxu0 0.0
      %2378 = vmatpush.msra.mxu0 0.0
      %2379 = vmatpush.msra.mxu0 0.0
      %2380 = vmatpush.msra.mxu0 0.0
      %2381 = vmatpush.msra.mxu0 0.0
      %2382 = vmatpush.msra.mxu0 %v2325
      %2383 = vmatpush.msra.mxu0 %v2320
      %2384 = vmatmul.f32.gmra.mxu0 %v2340
      %v2385 = vpop.f32.mrf.mxu0
      %v2386 = vadd.f32 0.0, %v2385
      %2387 = vmatmul.f32.gmra.mxu0 %v2343
      %v2388 = vpop.f32.mrf.mxu0
      %v2389 = vadd.f32 0.0, %v2388
      %2390 = vdwg.mxu0
      %2391 = vmatpush.msra.mxu0 0.0
      %2392 = vmatpush.msra.mxu0 0.0
      %2393 = vmatpush.msra.mxu0 0.0
      %2394 = vmatpush.msra.mxu0 0.0
      %2395 = vmatpush.msra.mxu0 0.0
      %2396 = vmatpush.msra.mxu0 0.0
      %2397 = vmatpush.msra.mxu0 0.0
      %2398 = vmatpush.msra.mxu0 0.0
      %2399 = vmatpush.msra.mxu0 0.0
      %2400 = vmatpush.msra.mxu0 0.0
      %2401 = vmatpush.msra.mxu0 0.0
      %2402 = vmatpush.msra.mxu0 0.0
      %2403 = vmatpush.msra.mxu0 0.0
      %2404 = vmatpush.msra.mxu0 0.0
      %2405 = vmatpush.msra.mxu0 %v2326
      %2406 = vmatpush.msra.mxu0 %v2321
      %2407 = vmatmul.f32.gmra.mxu0 %v2340
      %v2408 = vpop.f32.mrf.mxu0
      %v2409 = vadd.f32 0.0, %v2408
      %2410 = vmatmul.f32.gmra.mxu0 %v2343
      %v2411 = vpop.f32.mrf.mxu0
      %v2412 = vadd.f32 0.0, %v2411
      %2413 = vdwg.mxu0
      %2414 = vmatpush.msra.mxu0 0.0
      %2415 = vmatpush.msra.mxu0 0.0
      %2416 = vmatpush.msra.mxu0 0.0
      %2417 = vmatpush.msra.mxu0 0.0
      %2418 = vmatpush.msra.mxu0 0.0
      %2419 = vmatpush.msra.mxu0 0.0
      %2420 = vmatpush.msra.mxu0 0.0
      %2421 = vmatpush.msra.mxu0 0.0
      %2422 = vmatpush.msra.mxu0 0.0
      %2423 = vmatpush.msra.mxu0 0.0
      %2424 = vmatpush.msra.mxu0 0.0
      %2425 = vmatpush.msra.mxu0 0.0
      %2426 = vmatpush.msra.mxu0 0.0
      %2427 = vmatpush.msra.mxu0 0.0
      %2428 = vmatpush.msra.mxu0 %v2327
      %2429 = vmatpush.msra.mxu0 %v2322
      %2430 = vmatmul.f32.gmra.mxu0 %v2340
      %v2431 = vpop.f32.mrf.mxu0
      %v2432 = vadd.f32 0.0, %v2431
      %2433 = vmatmul.f32.gmra.mxu0 %v2343
      %v2434 = vpop.f32.mrf.mxu0
      %v2435 = vadd.f32 0.0, %v2434
      %2436 = vdwg.mxu0
      %2437 = vmatpush.msra.mxu0 0.0
      %2438 = vmatpush.msra.mxu0 0.0
      %2439 = vmatpush.msra.mxu0 0.0
      %2440 = vmatpush.msra.mxu0 0.0
      %2441 = vmatpush.msra.mxu0 0.0
      %2442 = vmatpush.msra.mxu0 0.0
      %2443 = vmatpush.msra.mxu0 0.0
      %2444 = vmatpush.msra.mxu0 0.0
      %2445 = vmatpush.msra.mxu0 0.0
      %2446 = vmatpush.msra.mxu0 0.0
      %2447 = vmatpush.msra.mxu0 0.0
      %2448 = vmatpush.msra.mxu0 0.0
      %2449 = vmatpush.msra.mxu0 0.0
      %2450 = vmatpush.msra.mxu0 0.0
      %2451 = vmatpush.msra.mxu0 %v2328
      %2452 = vmatpush.msra.mxu0 %v2323
      %2453 = vmatmul.f32.gmra.mxu0 %v2340
      %v2454 = vpop.f32.mrf.mxu0
      %v2455 = vadd.f32 0.0, %v2454
      %2456 = vmatmul.f32.gmra.mxu0 %v2343
      %v2457 = vpop.f32.mrf.mxu0
      %v2458 = vadd.f32 0.0, %v2457
      %2459 = vdwg.mxu0
      %v2460 = vadd.f32 %v2279, %v2363
      %v2461 = vadd.f32 %v2280, %v2386
      %v2462 = vadd.f32 %v2281, %v2409
      %v2463 = vadd.f32 %v2282, %v2432
      %v2464 = vadd.f32 %v2283, %v2455
      %v2465 = vadd.f32 %v2284, %v2366
      %v2466 = vadd.f32 %v2285, %v2389
      %v2467 = vadd.f32 %v2286, %v2412
      %v2468 = vadd.f32 %v2287, %v2435
      %v2469 = vadd.f32 %v2288, %v2458
      %s2470 = scalar_lea.vmem %s2, 96
      %v2471 = vld [vmem:[%s2470] sm:$0xff]
      %v2472 = vld [vmem:[%s2470 + $0x8] sm:$0xff]
      %2473 = vrot.lane.b32.xlu0 %v1464, 16
      %v2474 = vpop.permute.xlu0 %2473
      %2475 = vrot.lane.b32.xlu0 %v1465, 16
      %v2476 = vpop.permute.xlu0 %2475
      %2477 = vrot.lane.b32.xlu0 %v1466, 16
      %v2478 = vpop.permute.xlu0 %2477
      %2479 = vrot.lane.b32.xlu0 %v1467, 16
      %v2480 = vpop.permute.xlu0 %2479
      %2481 = vrot.lane.b32.xlu0 %v1468, 16
      %v2482 = vpop.permute.xlu0 %2481
      %2483 = vrot.lane.b32.xlu0 %v1469, 16
      %v2484 = vpop.permute.xlu0 %2483
      %2485 = vrot.lane.b32.xlu0 %v1470, 16
      %v2486 = vpop.permute.xlu0 %2485
      %2487 = vrot.lane.b32.xlu0 %v1471, 16
      %v2488 = vpop.permute.xlu0 %2487
      %2489 = vrot.lane.b32.xlu0 %v1472, 16
      %v2490 = vpop.permute.xlu0 %2489
      %2491 = vrot.lane.b32.xlu0 %v1473, 16
      %v2492 = vpop.permute.xlu0 %2491
      %2493 = vrot.lane.b32.xlu0 %v1474, 16
      %v2494 = vpop.permute.xlu0 %2493
      %2495 = vrot.lane.b32.xlu0 %v1475, 16
      %v2496 = vpop.permute.xlu0 %2495
      %v2497 = vsel %vm1529, %v2474, %v2476
      %v2498 = vsel %vm1529, %v2476, %v2478
      %v2499 = vsel %vm1529, %v2478, %v2480
      %v2500 = vsel %vm1529, %v2480, %v2482
      %v2501 = vsel %vm1529, %v2482, %v2484
      %v2502 = vsel %vm1529, %v2486, %v2488
      %v2503 = vsel %vm1529, %v2488, %v2490
      %v2504 = vsel %vm1529, %v2490, %v2492
      %v2505 = vsel %vm1529, %v2492, %v2494
      %v2506 = vsel %vm1529, %v2494, %v2496
      %v2518 = vsel %vm1529, %v2471, 0
      %v2521 = vsel %vm1529, %v2472, 0
      %2523 = vmatpush.msra.mxu0 0.0
      %2524 = vmatpush.msra.mxu0 0.0
      %2525 = vmatpush.msra.mxu0 0.0
      %2526 = vmatpush.msra.mxu0 0.0
      %2527 = vmatpush.msra.mxu0 0.0
      %2528 = vmatpush.msra.mxu0 0.0
      %2529 = vmatpush.msra.mxu0 0.0
      %2530 = vmatpush.msra.mxu0 0.0
      %2531 = vmatpush.msra.mxu0 0.0
      %2532 = vmatpush.msra.mxu0 0.0
      %2533 = vmatpush.msra.mxu0 0.0
      %2534 = vmatpush.msra.mxu0 0.0
      %2535 = vmatpush.msra.mxu0 0.0
      %2536 = vmatpush.msra.mxu0 0.0
      %2537 = vmatpush.msra.mxu0 %v2502
      %2538 = vmatpush.msra.mxu0 %v2497
      %2539 = vmatmul.f32.gmra.mxu0 %v2518
      %v2540 = vpop.f32.mrf.mxu0
      %v2541 = vadd.f32 0.0, %v2540
      %2542 = vmatmul.f32.gmra.mxu0 %v2521
      %v2543 = vpop.f32.mrf.mxu0
      %v2544 = vadd.f32 0.0, %v2543
      %2545 = vdwg.mxu0
      %2546 = vmatpush.msra.mxu0 0.0
      %2547 = vmatpush.msra.mxu0 0.0
      %2548 = vmatpush.msra.mxu0 0.0
      %2549 = vmatpush.msra.mxu0 0.0
      %2550 = vmatpush.msra.mxu0 0.0
      %2551 = vmatpush.msra.mxu0 0.0
      %2552 = vmatpush.msra.mxu0 0.0
      %2553 = vmatpush.msra.mxu0 0.0
      %2554 = vmatpush.msra.mxu0 0.0
      %2555 = vmatpush.msra.mxu0 0.0
      %2556 = vmatpush.msra.mxu0 0.0
      %2557 = vmatpush.msra.mxu0 0.0
      %2558 = vmatpush.msra.mxu0 0.0
      %2559 = vmatpush.msra.mxu0 0.0
      %2560 = vmatpush.msra.mxu0 %v2503
      %2561 = vmatpush.msra.mxu0 %v2498
      %2562 = vmatmul.f32.gmra.mxu0 %v2518
      %v2563 = vpop.f32.mrf.mxu0
      %v2564 = vadd.f32 0.0, %v2563
      %2565 = vmatmul.f32.gmra.mxu0 %v2521
      %v2566 = vpop.f32.mrf.mxu0
      %v2567 = vadd.f32 0.0, %v2566
      %2568 = vdwg.mxu0
      %2569 = vmatpush.msra.mxu0 0.0
      %2570 = vmatpush.msra.mxu0 0.0
      %2571 = vmatpush.msra.mxu0 0.0
      %2572 = vmatpush.msra.mxu0 0.0
      %2573 = vmatpush.msra.mxu0 0.0
      %2574 = vmatpush.msra.mxu0 0.0
      %2575 = vmatpush.msra.mxu0 0.0
      %2576 = vmatpush.msra.mxu0 0.0
      %2577 = vmatpush.msra.mxu0 0.0
      %2578 = vmatpush.msra.mxu0 0.0
      %2579 = vmatpush.msra.mxu0 0.0
      %2580 = vmatpush.msra.mxu0 0.0
      %2581 = vmatpush.msra.mxu0 0.0
      %2582 = vmatpush.msra.mxu0 0.0
      %2583 = vmatpush.msra.mxu0 %v2504
      %2584 = vmatpush.msra.mxu0 %v2499
      %2585 = vmatmul.f32.gmra.mxu0 %v2518
      %v2586 = vpop.f32.mrf.mxu0
      %v2587 = vadd.f32 0.0, %v2586
      %2588 = vmatmul.f32.gmra.mxu0 %v2521
      %v2589 = vpop.f32.mrf.mxu0
      %v2590 = vadd.f32 0.0, %v2589
      %2591 = vdwg.mxu0
      %2592 = vmatpush.msra.mxu0 0.0
      %2593 = vmatpush.msra.mxu0 0.0
      %2594 = vmatpush.msra.mxu0 0.0
      %2595 = vmatpush.msra.mxu0 0.0
      %2596 = vmatpush.msra.mxu0 0.0
      %2597 = vmatpush.msra.mxu0 0.0
      %2598 = vmatpush.msra.mxu0 0.0
      %2599 = vmatpush.msra.mxu0 0.0
      %2600 = vmatpush.msra.mxu0 0.0
      %2601 = vmatpush.msra.mxu0 0.0
      %2602 = vmatpush.msra.mxu0 0.0
      %2603 = vmatpush.msra.mxu0 0.0
      %2604 = vmatpush.msra.mxu0 0.0
      %2605 = vmatpush.msra.mxu0 0.0
      %2606 = vmatpush.msra.mxu0 %v2505
      %2607 = vmatpush.msra.mxu0 %v2500
      %2608 = vmatmul.f32.gmra.mxu0 %v2518
      %v2609 = vpop.f32.mrf.mxu0
      %v2610 = vadd.f32 0.0, %v2609
      %2611 = vmatmul.f32.gmra.mxu0 %v2521
      %v2612 = vpop.f32.mrf.mxu0
      %v2613 = vadd.f32 0.0, %v2612
      %2614 = vdwg.mxu0
      %2615 = vmatpush.msra.mxu0 0.0
      %2616 = vmatpush.msra.mxu0 0.0
      %2617 = vmatpush.msra.mxu0 0.0
      %2618 = vmatpush.msra.mxu0 0.0
      %2619 = vmatpush.msra.mxu0 0.0
      %2620 = vmatpush.msra.mxu0 0.0
      %2621 = vmatpush.msra.mxu0 0.0
      %2622 = vmatpush.msra.mxu0 0.0
      %2623 = vmatpush.msra.mxu0 0.0
      %2624 = vmatpush.msra.mxu0 0.0
      %2625 = vmatpush.msra.mxu0 0.0
      %2626 = vmatpush.msra.mxu0 0.0
      %2627 = vmatpush.msra.mxu0 0.0
      %2628 = vmatpush.msra.mxu0 0.0
      %2629 = vmatpush.msra.mxu0 %v2506
      %2630 = vmatpush.msra.mxu0 %v2501
      %2631 = vmatmul.f32.gmra.mxu0 %v2518
      %v2632 = vpop.f32.mrf.mxu0
      %v2633 = vadd.f32 0.0, %v2632
      %2634 = vmatmul.f32.gmra.mxu0 %v2521
      %v2635 = vpop.f32.mrf.mxu0
      %v2636 = vadd.f32 0.0, %v2635
      %2637 = vdwg.mxu0
      %v2638 = vadd.f32 %v2460, %v2541
      %v2639 = vadd.f32 %v2461, %v2564
      %v2640 = vadd.f32 %v2462, %v2587
      %v2641 = vadd.f32 %v2463, %v2610
      %v2642 = vadd.f32 %v2464, %v2633
      %v2643 = vadd.f32 %v2465, %v2544
      %v2644 = vadd.f32 %v2466, %v2567
      %v2645 = vadd.f32 %v2467, %v2590
      %v2646 = vadd.f32 %v2468, %v2613
      %v2647 = vadd.f32 %v2469, %v2636
      %s2648 = scalar_lea.vmem %s2, 112
      %v2649 = vld [vmem:[%s2648] sm:$0xff]
      %v2650 = vld [vmem:[%s2648 + $0x8] sm:$0xff]
      %2651 = vrot.lane.b32.xlu0 %v1464, 14
      %v2652 = vpop.permute.xlu0 %2651
      %2653 = vrot.lane.b32.xlu0 %v1465, 14
      %v2654 = vpop.permute.xlu0 %2653
      %2655 = vrot.lane.b32.xlu0 %v1466, 14
      %v2656 = vpop.permute.xlu0 %2655
      %2657 = vrot.lane.b32.xlu0 %v1467, 14
      %v2658 = vpop.permute.xlu0 %2657
      %2659 = vrot.lane.b32.xlu0 %v1468, 14
      %v2660 = vpop.permute.xlu0 %2659
      %2661 = vrot.lane.b32.xlu0 %v1469, 14
      %v2662 = vpop.permute.xlu0 %2661
      %2663 = vrot.lane.b32.xlu0 %v1470, 14
      %v2664 = vpop.permute.xlu0 %2663
      %2665 = vrot.lane.b32.xlu0 %v1471, 14
      %v2666 = vpop.permute.xlu0 %2665
      %2667 = vrot.lane.b32.xlu0 %v1472, 14
      %v2668 = vpop.permute.xlu0 %2667
      %2669 = vrot.lane.b32.xlu0 %v1473, 14
      %v2670 = vpop.permute.xlu0 %2669
      %2671 = vrot.lane.b32.xlu0 %v1474, 14
      %v2672 = vpop.permute.xlu0 %2671
      %2673 = vrot.lane.b32.xlu0 %v1475, 14
      %v2674 = vpop.permute.xlu0 %2673
      %vm2675 = vcmask 113664
      %v2676 = vsel %vm2675, %v2652, %v2654
      %v2677 = vsel %vm2675, %v2654, %v2656
      %v2678 = vsel %vm2675, %v2656, %v2658
      %v2679 = vsel %vm2675, %v2658, %v2660
      %v2680 = vsel %vm2675, %v2660, %v2662
      %v2681 = vsel %vm2675, %v2664, %v2666
      %v2682 = vsel %vm2675, %v2666, %v2668
      %v2683 = vsel %vm2675, %v2668, %v2670
      %v2684 = vsel %vm2675, %v2670, %v2672
      %v2685 = vsel %vm2675, %v2672, %v2674
      %v2697 = vsel %vm1529, %v2649, 0
      %v2700 = vsel %vm1529, %v2650, 0
      %2702 = vmatpush.msra.mxu0 0.0
      %2703 = vmatpush.msra.mxu0 0.0
      %2704 = vmatpush.msra.mxu0 0.0
      %2705 = vmatpush.msra.mxu0 0.0
      %2706 = vmatpush.msra.mxu0 0.0
      %2707 = vmatpush.msra.mxu0 0.0
      %2708 = vmatpush.msra.mxu0 0.0
      %2709 = vmatpush.msra.mxu0 0.0
      %2710 = vmatpush.msra.mxu0 0.0
      %2711 = vmatpush.msra.mxu0 0.0
      %2712 = vmatpush.msra.mxu0 0.0
      %2713 = vmatpush.msra.mxu0 0.0
      %2714 = vmatpush.msra.mxu0 0.0
      %2715 = vmatpush.msra.mxu0 0.0
      %2716 = vmatpush.msra.mxu0 %v2681
      %2717 = vmatpush.msra.mxu0 %v2676
      %2718 = vmatmul.f32.gmra.mxu0 %v2697
      %v2719 = vpop.f32.mrf.mxu0
      %v2720 = vadd.f32 0.0, %v2719
      %2721 = vmatmul.f32.gmra.mxu0 %v2700
      %v2722 = vpop.f32.mrf.mxu0
      %v2723 = vadd.f32 0.0, %v2722
      %2724 = vdwg.mxu0
      %2725 = vmatpush.msra.mxu0 0.0
      %2726 = vmatpush.msra.mxu0 0.0
      %2727 = vmatpush.msra.mxu0 0.0
      %2728 = vmatpush.msra.mxu0 0.0
      %2729 = vmatpush.msra.mxu0 0.0
      %2730 = vmatpush.msra.mxu0 0.0
      %2731 = vmatpush.msra.mxu0 0.0
      %2732 = vmatpush.msra.mxu0 0.0
      %2733 = vmatpush.msra.mxu0 0.0
      %2734 = vmatpush.msra.mxu0 0.0
      %2735 = vmatpush.msra.mxu0 0.0
      %2736 = vmatpush.msra.mxu0 0.0
      %2737 = vmatpush.msra.mxu0 0.0
      %2738 = vmatpush.msra.mxu0 0.0
      %2739 = vmatpush.msra.mxu0 %v2682
      %2740 = vmatpush.msra.mxu0 %v2677
      %2741 = vmatmul.f32.gmra.mxu0 %v2697
      %v2742 = vpop.f32.mrf.mxu0
      %v2743 = vadd.f32 0.0, %v2742
      %2744 = vmatmul.f32.gmra.mxu0 %v2700
      %v2745 = vpop.f32.mrf.mxu0
      %v2746 = vadd.f32 0.0, %v2745
      %2747 = vdwg.mxu0
      %2748 = vmatpush.msra.mxu0 0.0
      %2749 = vmatpush.msra.mxu0 0.0
      %2750 = vmatpush.msra.mxu0 0.0
      %2751 = vmatpush.msra.mxu0 0.0
      %2752 = vmatpush.msra.mxu0 0.0
      %2753 = vmatpush.msra.mxu0 0.0
      %2754 = vmatpush.msra.mxu0 0.0
      %2755 = vmatpush.msra.mxu0 0.0
      %2756 = vmatpush.msra.mxu0 0.0
      %2757 = vmatpush.msra.mxu0 0.0
      %2758 = vmatpush.msra.mxu0 0.0
      %2759 = vmatpush.msra.mxu0 0.0
      %2760 = vmatpush.msra.mxu0 0.0
      %2761 = vmatpush.msra.mxu0 0.0
      %2762 = vmatpush.msra.mxu0 %v2683
      %2763 = vmatpush.msra.mxu0 %v2678
      %2764 = vmatmul.f32.gmra.mxu0 %v2697
      %v2765 = vpop.f32.mrf.mxu0
      %v2766 = vadd.f32 0.0, %v2765
      %2767 = vmatmul.f32.gmra.mxu0 %v2700
      %v2768 = vpop.f32.mrf.mxu0
      %v2769 = vadd.f32 0.0, %v2768
      %2770 = vdwg.mxu0
      %2771 = vmatpush.msra.mxu0 0.0
      %2772 = vmatpush.msra.mxu0 0.0
      %2773 = vmatpush.msra.mxu0 0.0
      %2774 = vmatpush.msra.mxu0 0.0
      %2775 = vmatpush.msra.mxu0 0.0
      %2776 = vmatpush.msra.mxu0 0.0
      %2777 = vmatpush.msra.mxu0 0.0
      %2778 = vmatpush.msra.mxu0 0.0
      %2779 = vmatpush.msra.mxu0 0.0
      %2780 = vmatpush.msra.mxu0 0.0
      %2781 = vmatpush.msra.mxu0 0.0
      %2782 = vmatpush.msra.mxu0 0.0
      %2783 = vmatpush.msra.mxu0 0.0
      %2784 = vmatpush.msra.mxu0 0.0
      %2785 = vmatpush.msra.mxu0 %v2684
      %2786 = vmatpush.msra.mxu0 %v2679
      %2787 = vmatmul.f32.gmra.mxu0 %v2697
      %v2788 = vpop.f32.mrf.mxu0
      %v2789 = vadd.f32 0.0, %v2788
      %2790 = vmatmul.f32.gmra.mxu0 %v2700
      %v2791 = vpop.f32.mrf.mxu0
      %v2792 = vadd.f32 0.0, %v2791
      %2793 = vdwg.mxu0
      %2794 = vmatpush.msra.mxu0 0.0
      %2795 = vmatpush.msra.mxu0 0.0
      %2796 = vmatpush.msra.mxu0 0.0
      %2797 = vmatpush.msra.mxu0 0.0
      %2798 = vmatpush.msra.mxu0 0.0
      %2799 = vmatpush.msra.mxu0 0.0
      %2800 = vmatpush.msra.mxu0 0.0
      %2801 = vmatpush.msra.mxu0 0.0
      %2802 = vmatpush.msra.mxu0 0.0
      %2803 = vmatpush.msra.mxu0 0.0
      %2804 = vmatpush.msra.mxu0 0.0
      %2805 = vmatpush.msra.mxu0 0.0
      %2806 = vmatpush.msra.mxu0 0.0
      %2807 = vmatpush.msra.mxu0 0.0
      %2808 = vmatpush.msra.mxu0 %v2685
      %2809 = vmatpush.msra.mxu0 %v2680
      %2810 = vmatmul.f32.gmra.mxu0 %v2697
      %v2811 = vpop.f32.mrf.mxu0
      %v2812 = vadd.f32 0.0, %v2811
      %2813 = vmatmul.f32.gmra.mxu0 %v2700
      %v2814 = vpop.f32.mrf.mxu0
      %v2815 = vadd.f32 0.0, %v2814
      %2816 = vdwg.mxu0
      %v2817 = vadd.f32 %v2638, %v2720
      %v2818 = vadd.f32 %v2639, %v2743
      %v2819 = vadd.f32 %v2640, %v2766
      %v2820 = vadd.f32 %v2641, %v2789
      %v2821 = vadd.f32 %v2642, %v2812
      %v2822 = vadd.f32 %v2643, %v2723
      %v2823 = vadd.f32 %v2644, %v2746
      %v2824 = vadd.f32 %v2645, %v2769
      %v2825 = vadd.f32 %v2646, %v2792
      %v2826 = vadd.f32 %v2647, %v2815
      %s2827 = scalar_lea.vmem %s2, 128
      %v2828 = vld [vmem:[%s2827] sm:$0xff]
      %v2829 = vld [vmem:[%s2827 + $0x8] sm:$0xff]
      %2830 = vrot.lane.b32.xlu0 %v1464, 12
      %v2831 = vpop.permute.xlu0 %2830
      %2832 = vrot.lane.b32.xlu0 %v1465, 12
      %v2833 = vpop.permute.xlu0 %2832
      %2834 = vrot.lane.b32.xlu0 %v1466, 12
      %v2835 = vpop.permute.xlu0 %2834
      %2836 = vrot.lane.b32.xlu0 %v1467, 12
      %v2837 = vpop.permute.xlu0 %2836
      %2838 = vrot.lane.b32.xlu0 %v1468, 12
      %v2839 = vpop.permute.xlu0 %2838
      %2840 = vrot.lane.b32.xlu0 %v1469, 12
      %v2841 = vpop.permute.xlu0 %2840
      %2842 = vrot.lane.b32.xlu0 %v1470, 12
      %v2843 = vpop.permute.xlu0 %2842
      %2844 = vrot.lane.b32.xlu0 %v1471, 12
      %v2845 = vpop.permute.xlu0 %2844
      %2846 = vrot.lane.b32.xlu0 %v1472, 12
      %v2847 = vpop.permute.xlu0 %2846
      %2848 = vrot.lane.b32.xlu0 %v1473, 12
      %v2849 = vpop.permute.xlu0 %2848
      %2850 = vrot.lane.b32.xlu0 %v1474, 12
      %v2851 = vpop.permute.xlu0 %2850
      %2852 = vrot.lane.b32.xlu0 %v1475, 12
      %v2853 = vpop.permute.xlu0 %2852
      %vm2854 = vcmask 97280
      %v2855 = vsel %vm2854, %v2831, %v2833
      %v2856 = vsel %vm2854, %v2833, %v2835
      %v2857 = vsel %vm2854, %v2835, %v2837
      %v2858 = vsel %vm2854, %v2837, %v2839
      %v2859 = vsel %vm2854, %v2839, %v2841
      %v2860 = vsel %vm2854, %v2843, %v2845
      %v2861 = vsel %vm2854, %v2845, %v2847
      %v2862 = vsel %vm2854, %v2847, %v2849
      %v2863 = vsel %vm2854, %v2849, %v2851
      %v2864 = vsel %vm2854, %v2851, %v2853
      %v2876 = vsel %vm1529, %v2828, 0
      %v2879 = vsel %vm1529, %v2829, 0
      %2881 = vmatpush.msra.mxu0 0.0
      %2882 = vmatpush.msra.mxu0 0.0
      %2883 = vmatpush.msra.mxu0 0.0
      %2884 = vmatpush.msra.mxu0 0.0
      %2885 = vmatpush.msra.mxu0 0.0
      %2886 = vmatpush.msra.mxu0 0.0
      %2887 = vmatpush.msra.mxu0 0.0
      %2888 = vmatpush.msra.mxu0 0.0
      %2889 = vmatpush.msra.mxu0 0.0
      %2890 = vmatpush.msra.mxu0 0.0
      %2891 = vmatpush.msra.mxu0 0.0
      %2892 = vmatpush.msra.mxu0 0.0
      %2893 = vmatpush.msra.mxu0 0.0
      %2894 = vmatpush.msra.mxu0 0.0
      %2895 = vmatpush.msra.mxu0 %v2860
      %2896 = vmatpush.msra.mxu0 %v2855
      %2897 = vmatmul.f32.gmra.mxu0 %v2876
      %v2898 = vpop.f32.mrf.mxu0
      %v2899 = vadd.f32 0.0, %v2898
      %2900 = vmatmul.f32.gmra.mxu0 %v2879
      %v2901 = vpop.f32.mrf.mxu0
      %v2902 = vadd.f32 0.0, %v2901
      %2903 = vdwg.mxu0
      %2904 = vmatpush.msra.mxu0 0.0
      %2905 = vmatpush.msra.mxu0 0.0
      %2906 = vmatpush.msra.mxu0 0.0
      %2907 = vmatpush.msra.mxu0 0.0
      %2908 = vmatpush.msra.mxu0 0.0
      %2909 = vmatpush.msra.mxu0 0.0
      %2910 = vmatpush.msra.mxu0 0.0
      %2911 = vmatpush.msra.mxu0 0.0
      %2912 = vmatpush.msra.mxu0 0.0
      %2913 = vmatpush.msra.mxu0 0.0
      %2914 = vmatpush.msra.mxu0 0.0
      %2915 = vmatpush.msra.mxu0 0.0
      %2916 = vmatpush.msra.mxu0 0.0
      %2917 = vmatpush.msra.mxu0 0.0
      %2918 = vmatpush.msra.mxu0 %v2861
      %2919 = vmatpush.msra.mxu0 %v2856
      %2920 = vmatmul.f32.gmra.mxu0 %v2876
      %v2921 = vpop.f32.mrf.mxu0
      %v2922 = vadd.f32 0.0, %v2921
      %2923 = vmatmul.f32.gmra.mxu0 %v2879
      %v2924 = vpop.f32.mrf.mxu0
      %v2925 = vadd.f32 0.0, %v2924
      %2926 = vdwg.mxu0
      %2927 = vmatpush.msra.mxu0 0.0
      %2928 = vmatpush.msra.mxu0 0.0
      %2929 = vmatpush.msra.mxu0 0.0
      %2930 = vmatpush.msra.mxu0 0.0
      %2931 = vmatpush.msra.mxu0 0.0
      %2932 = vmatpush.msra.mxu0 0.0
      %2933 = vmatpush.msra.mxu0 0.0
      %2934 = vmatpush.msra.mxu0 0.0
      %2935 = vmatpush.msra.mxu0 0.0
      %2936 = vmatpush.msra.mxu0 0.0
      %2937 = vmatpush.msra.mxu0 0.0
      %2938 = vmatpush.msra.mxu0 0.0
      %2939 = vmatpush.msra.mxu0 0.0
      %2940 = vmatpush.msra.mxu0 0.0
      %2941 = vmatpush.msra.mxu0 %v2862
      %2942 = vmatpush.msra.mxu0 %v2857
      %2943 = vmatmul.f32.gmra.mxu0 %v2876
      %v2944 = vpop.f32.mrf.mxu0
      %v2945 = vadd.f32 0.0, %v2944
      %2946 = vmatmul.f32.gmra.mxu0 %v2879
      %v2947 = vpop.f32.mrf.mxu0
      %v2948 = vadd.f32 0.0, %v2947
      %2949 = vdwg.mxu0
      %2950 = vmatpush.msra.mxu0 0.0
      %2951 = vmatpush.msra.mxu0 0.0
      %2952 = vmatpush.msra.mxu0 0.0
      %2953 = vmatpush.msra.mxu0 0.0
      %2954 = vmatpush.msra.mxu0 0.0
      %2955 = vmatpush.msra.mxu0 0.0
      %2956 = vmatpush.msra.mxu0 0.0
      %2957 = vmatpush.msra.mxu0 0.0
      %2958 = vmatpush.msra.mxu0 0.0
      %2959 = vmatpush.msra.mxu0 0.0
      %2960 = vmatpush.msra.mxu0 0.0
      %2961 = vmatpush.msra.mxu0 0.0
      %2962 = vmatpush.msra.mxu0 0.0
      %2963 = vmatpush.msra.mxu0 0.0
      %2964 = vmatpush.msra.mxu0 %v2863
      %2965 = vmatpush.msra.mxu0 %v2858
      %2966 = vmatmul.f32.gmra.mxu0 %v2876
      %v2967 = vpop.f32.mrf.mxu0
      %v2968 = vadd.f32 0.0, %v2967
      %2969 = vmatmul.f32.gmra.mxu0 %v2879
      %v2970 = vpop.f32.mrf.mxu0
      %v2971 = vadd.f32 0.0, %v2970
      %2972 = vdwg.mxu0
      %2973 = vmatpush.msra.mxu0 0.0
      %2974 = vmatpush.msra.mxu0 0.0
      %2975 = vmatpush.msra.mxu0 0.0
      %2976 = vmatpush.msra.mxu0 0.0
      %2977 = vmatpush.msra.mxu0 0.0
      %2978 = vmatpush.msra.mxu0 0.0
      %2979 = vmatpush.msra.mxu0 0.0
      %2980 = vmatpush.msra.mxu0 0.0
      %2981 = vmatpush.msra.mxu0 0.0
      %2982 = vmatpush.msra.mxu0 0.0
      %2983 = vmatpush.msra.mxu0 0.0
      %2984 = vmatpush.msra.mxu0 0.0
      %2985 = vmatpush.msra.mxu0 0.0
      %2986 = vmatpush.msra.mxu0 0.0
      %2987 = vmatpush.msra.mxu0 %v2864
      %2988 = vmatpush.msra.mxu0 %v2859
      %2989 = vmatmul.f32.gmra.mxu0 %v2876
      %v2990 = vpop.f32.mrf.mxu0
      %v2991 = vadd.f32 0.0, %v2990
      %2992 = vmatmul.f32.gmra.mxu0 %v2879
      %v2993 = vpop.f32.mrf.mxu0
      %v2994 = vadd.f32 0.0, %v2993
      %2995 = vdwg.mxu0
      %v2996 = vadd.f32 %v2817, %v2899
      %v2997 = vadd.f32 %v2818, %v2922
      %v2998 = vadd.f32 %v2819, %v2945
      %v2999 = vadd.f32 %v2820, %v2968
      %v3000 = vadd.f32 %v2821, %v2991
      %v3001 = vadd.f32 %v2822, %v2902
      %v3002 = vadd.f32 %v2823, %v2925
      %v3003 = vadd.f32 %v2824, %v2948
      %v3004 = vadd.f32 %v2825, %v2971
      %v3005 = vadd.f32 %v2826, %v2994
      %v3006 = vmax.f32 %v2996, 0.0
      %v3007 = vmax.f32 %v2997, 0.0
      %v3008 = vmax.f32 %v2998, 0.0
      %v3009 = vmax.f32 %v2999, 0.0
      %v3010 = vmax.f32 %v3000, 0.0
      %v3011 = vmax.f32 %v3001, 0.0
      %v3012 = vmax.f32 %v3002, 0.0
      %v3013 = vmax.f32 %v3003, 0.0
      %v3014 = vmax.f32 %v3004, 0.0
      %v3015 = vmax.f32 %v3005, 0.0
      %3026 = vrot.lane.b32.xlu0 %v3006, 126
      %v3027 = vpop.permute.xlu0 %3026
      %3028 = vrot.lane.b32.xlu0 %v3007, 126
      %v3029 = vpop.permute.xlu0 %3028
      %3030 = vrot.lane.b32.xlu0 %v3008, 126
      %v3031 = vpop.permute.xlu0 %3030
      %3032 = vrot.lane.b32.xlu0 %v3009, 126
      %v3033 = vpop.permute.xlu0 %3032
      %3034 = vrot.lane.b32.xlu0 %v3010, 126
      %v3035 = vpop.permute.xlu0 %3034
      %3036 = vrot.lane.b32.xlu0 %v3011, 126
      %v3037 = vpop.permute.xlu0 %3036
      %3038 = vrot.lane.b32.xlu0 %v3012, 126
      %v3039 = vpop.permute.xlu0 %3038
      %3040 = vrot.lane.b32.xlu0 %v3013, 126
      %v3041 = vpop.permute.xlu0 %3040
      %3042 = vrot.lane.b32.xlu0 %v3014, 126
      %v3043 = vpop.permute.xlu0 %3042
      %3044 = vrot.lane.b32.xlu0 %v3015, 126
      %v3045 = vpop.permute.xlu0 %3044
      %v3046 = vsel %vm633, %v3027, %v3029
      %v3047 = vsel %vm633, %v3029, %v3031
      %v3048 = vsel %vm633, %v3031, %v3033
      %v3049 = vsel %vm633, %v3033, %v3035
      %v3050 = vsel %vm633, %v3037, %v3039
      %v3051 = vsel %vm633, %v3039, %v3041
      %v3052 = vsel %vm633, %v3041, %v3043
      %v3053 = vsel %vm633, %v3043, %v3045
      %v3064 = vmax.f32 %v3006, %v3046
      %v3065 = vmax.f32 %v3007, %v3047
      %v3066 = vmax.f32 %v3008, %v3048
      %v3067 = vmax.f32 %v3009, %v3049
      %v3068 = vmax.f32 %v3010, %v3035
      %v3069 = vmax.f32 %v3011, %v3050
      %v3070 = vmax.f32 %v3012, %v3051
      %v3071 = vmax.f32 %v3013, %v3052
      %v3072 = vmax.f32 %v3014, %v3053
      %v3073 = vmax.f32 %v3015, %v3045
      %3084 = vrot.lane.b32.xlu0 %v3064, 72
      %v3085 = vpop.permute.xlu0 %3084
      %3086 = vrot.lane.b32.xlu0 %v3065, 72
      %v3087 = vpop.permute.xlu0 %3086
      %3088 = vrot.lane.b32.xlu0 %v3066, 72
      %v3089 = vpop.permute.xlu0 %3088
      %3090 = vrot.lane.b32.xlu0 %v3067, 72
      %v3091 = vpop.permute.xlu0 %3090
      %3092 = vrot.lane.b32.xlu0 %v3068, 72
      %v3093 = vpop.permute.xlu0 %3092
      %3094 = vrot.lane.b32.xlu0 %v3069, 72
      %v3095 = vpop.permute.xlu0 %3094
      %3096 = vrot.lane.b32.xlu0 %v3070, 72
      %v3097 = vpop.permute.xlu0 %3096
      %3098 = vrot.lane.b32.xlu0 %v3071, 72
      %v3099 = vpop.permute.xlu0 %3098
      %3100 = vrot.lane.b32.xlu0 %v3072, 72
      %v3101 = vpop.permute.xlu0 %3100
      %3102 = vrot.lane.b32.xlu0 %v3073, 72
      %v3103 = vpop.permute.xlu0 %3102
      %v3104 = vsel %vm1027, %v3085, %v3087
      %v3105 = vsel %vm1027, %v3087, %v3089
      %v3106 = vsel %vm1027, %v3089, %v3091
      %v3107 = vsel %vm1027, %v3091, %v3093
      %v3108 = vsel %vm1027, %v3095, %v3097
      %v3109 = vsel %vm1027, %v3097, %v3099
      %v3110 = vsel %vm1027, %v3099, %v3101
      %v3111 = vsel %vm1027, %v3101, %v3103
      %v3122 = vmax.f32 %v3064, %v3104
      %v3123 = vmax.f32 %v3065, %v3105
      %v3124 = vmax.f32 %v3066, %v3106
      %v3125 = vmax.f32 %v3067, %v3107
      %v3126 = vmax.f32 %v3068, %v3093
      %v3127 = vmax.f32 %v3069, %v3108
      %v3128 = vmax.f32 %v3070, %v3109
      %v3129 = vmax.f32 %v3071, %v3110
      %v3130 = vmax.f32 %v3072, %v3111
      %v3131 = vmax.f32 %v3073, %v3103
      %v3132 = vld [vmem:[%s7] sm:$0xff]
      %v3133 = vld [vmem:[%s7 + $0x8] sm:$0xff]
      %3135 = vset.pattern.permute.xlu0 0
      %3136 = vperm.xlu0 %3135, %v3132
      %v3137 = vpop.permute.xlu0 %3136
      %3140 = vset.pattern.permute.xlu0 0
      %3141 = vperm.xlu0 %3140, %v3133
      %v3142 = vpop.permute.xlu0 %3141
      %v3144 = vmul.f32 %v3122, %v3137
      %v3145 = vmul.f32 %v3123, %v3137
      %v3146 = vmul.f32 %v3124, %v3137
      %v3147 = vmul.f32 %v3125, %v3137
      %v3148 = vmul.f32 %v3126, %v3137
      %v3149 = vmul.f32 %v3127, %v3142
      %v3150 = vmul.f32 %v3128, %v3142
      %v3151 = vmul.f32 %v3129, %v3142
      %v3152 = vmul.f32 %v3130, %v3142
      %v3153 = vmul.f32 %v3131, %v3142
      %v3154 = vld [vmem:[%s8] sm:$0xff]
      %v3155 = vld [vmem:[%s8 + $0x8] sm:$0xff]
      %3157 = vset.pattern.permute.xlu0 0
      %3158 = vperm.xlu0 %3157, %v3154
      %v3159 = vpop.permute.xlu0 %3158
      %3162 = vset.pattern.permute.xlu0 0
      %3163 = vperm.xlu0 %3162, %v3155
      %v3164 = vpop.permute.xlu0 %3163
      %v3166 = vadd.f32 %v3144, %v3159
      %v3167 = vadd.f32 %v3145, %v3159
      %v3168 = vadd.f32 %v3146, %v3159
      %v3169 = vadd.f32 %v3147, %v3159
      %v3170 = vadd.f32 %v3148, %v3159
      %v3171 = vadd.f32 %v3149, %v3164
      %v3172 = vadd.f32 %v3150, %v3164
      %v3173 = vadd.f32 %v3151, %v3164
      %v3174 = vadd.f32 %v3152, %v3164
      %v3175 = vadd.f32 %v3153, %v3164
      %v3176 = vld [vmem:[%s3] sm:$0xff]
      %v3177 = vld [vmem:[%s3 + $0x8] sm:$0xff]
      %s3178 = scalar_lea.vmem %s3, 16
      %v3179 = vld [vmem:[%s3178] sm:$0xff]
      %v3180 = vld [vmem:[%s3178 + $0x8] sm:$0xff]
      %3187 = vrot.lane.b32.xlu0 %v3166, 124
      %v3188 = vpop.permute.xlu0 %3187
      %3189 = vrot.lane.b32.xlu0 %v3167, 124
      %v3190 = vpop.permute.xlu0 %3189
      %3191 = vrot.lane.b32.xlu0 %v3168, 124
      %v3192 = vpop.permute.xlu0 %3191
      %3193 = vrot.lane.b32.xlu0 %v3171, 124
      %v3194 = vpop.permute.xlu0 %3193
      %3195 = vrot.lane.b32.xlu0 %v3172, 124
      %v3196 = vpop.permute.xlu0 %3195
      %3197 = vrot.lane.b32.xlu0 %v3173, 124
      %v3198 = vpop.permute.xlu0 %3197
      %v3199 = vsel %vm1795, %v3188, %v3190
      %v3200 = vsel %vm1795, %v3190, %v3192
      %v3201 = vsel %vm1795, %v3194, %v3196
      %v3202 = vsel %vm1795, %v3196, %v3198
      %v3210 = vsel %vm1529, %v3179, 0
      %v3213 = vsel %vm1529, %v3180, 0
      %3215 = vmatpush.msra.mxu0 0.0
      %3216 = vmatpush.msra.mxu0 0.0
      %3217 = vmatpush.msra.mxu0 0.0
      %3218 = vmatpush.msra.mxu0 0.0
      %3219 = vmatpush.msra.mxu0 0.0
      %3220 = vmatpush.msra.mxu0 0.0
      %3221 = vmatpush.msra.mxu0 0.0
      %3222 = vmatpush.msra.mxu0 0.0
      %3223 = vmatpush.msra.mxu0 0.0
      %3224 = vmatpush.msra.mxu0 0.0
      %3225 = vmatpush.msra.mxu0 0.0
      %3226 = vmatpush.msra.mxu0 0.0
      %3227 = vmatpush.msra.mxu0 0.0
      %3228 = vmatpush.msra.mxu0 0.0
      %3229 = vmatpush.msra.mxu0 %v3201
      %3230 = vmatpush.msra.mxu0 %v3199
      %3231 = vmatmul.f32.gmra.mxu0 %v3210
      %v3232 = vpop.f32.mrf.mxu0
      %v3233 = vadd.f32 0.0, %v3232
      %3234 = vmatmul.f32.gmra.mxu0 %v3213
      %v3235 = vpop.f32.mrf.mxu0
      %v3236 = vadd.f32 0.0, %v3235
      %3237 = vdwg.mxu0
      %3238 = vmatpush.msra.mxu0 0.0
      %3239 = vmatpush.msra.mxu0 0.0
      %3240 = vmatpush.msra.mxu0 0.0
      %3241 = vmatpush.msra.mxu0 0.0
      %3242 = vmatpush.msra.mxu0 0.0
      %3243 = vmatpush.msra.mxu0 0.0
      %3244 = vmatpush.msra.mxu0 0.0
      %3245 = vmatpush.msra.mxu0 0.0
      %3246 = vmatpush.msra.mxu0 0.0
      %3247 = vmatpush.msra.mxu0 0.0
      %3248 = vmatpush.msra.mxu0 0.0
      %3249 = vmatpush.msra.mxu0 0.0
      %3250 = vmatpush.msra.mxu0 0.0
      %3251 = vmatpush.msra.mxu0 0.0
      %3252 = vmatpush.msra.mxu0 %v3202
      %3253 = vmatpush.msra.mxu0 %v3200
      %3254 = vmatmul.f32.gmra.mxu0 %v3210
      %v3255 = vpop.f32.mrf.mxu0
      %v3256 = vadd.f32 0.0, %v3255
      %3257 = vmatmul.f32.gmra.mxu0 %v3213
      %v3258 = vpop.f32.mrf.mxu0
      %v3259 = vadd.f32 0.0, %v3258
      %3260 = vdwg.mxu0
      %3261 = vmatpush.msra.mxu0 0.0
      %3262 = vmatpush.msra.mxu0 0.0
      %3263 = vmatpush.msra.mxu0 0.0
      %3264 = vmatpush.msra.mxu0 0.0
      %3265 = vmatpush.msra.mxu0 0.0
      %3266 = vmatpush.msra.mxu0 0.0
      %3267 = vmatpush.msra.mxu0 0.0
      %3268 = vmatpush.msra.mxu0 0.0
      %3269 = vmatpush.msra.mxu0 0.0
      %3270 = vmatpush.msra.mxu0 0.0
      %3271 = vmatpush.msra.mxu0 0.0
      %3272 = vmatpush.msra.mxu0 0.0
      %3273 = vmatpush.msra.mxu0 0.0
      %3274 = vmatpush.msra.mxu0 0.0
      %3275 = vmatpush.msra.mxu0 %v3198
      %3276 = vmatpush.msra.mxu0 %v3192
      %3277 = vmatmul.f32.gmra.mxu0 %v3210
      %v3278 = vpop.f32.mrf.mxu0
      %v3279 = vadd.f32 0.0, %v3278
      %3280 = vmatmul.f32.gmra.mxu0 %v3213
      %v3281 = vpop.f32.mrf.mxu0
      %v3282 = vadd.f32 0.0, %v3281
      %3283 = vdwg.mxu0
      %v3285 = vsel %vm1529, %v3176, 0
      %v3288 = vsel %vm1529, %v3177, 0
      %3290 = vmatpush.msra.mxu0 0.0
      %3291 = vmatpush.msra.mxu0 0.0
      %3292 = vmatpush.msra.mxu0 0.0
      %3293 = vmatpush.msra.mxu0 0.0
      %3294 = vmatpush.msra.mxu0 0.0
      %3295 = vmatpush.msra.mxu0 0.0
      %3296 = vmatpush.msra.mxu0 0.0
      %3297 = vmatpush.msra.mxu0 0.0
      %3298 = vmatpush.msra.mxu0 0.0
      %3299 = vmatpush.msra.mxu0 0.0
      %3300 = vmatpush.msra.mxu0 0.0
      %3301 = vmatpush.msra.mxu0 0.0
      %3302 = vmatpush.msra.mxu0 0.0
      %3303 = vmatpush.msra.mxu0 0.0
      %3304 = vmatpush.msra.mxu0 %v3171
      %3305 = vmatpush.msra.mxu0 %v3166
      %3306 = vmatmul.f32.gmra.mxu0 %v3285
      %v3307 = vpop.f32.mrf.mxu0
      %v3308 = vadd.f32 %v3233, %v3307
      %3309 = vmatmul.f32.gmra.mxu0 %v3288
      %v3310 = vpop.f32.mrf.mxu0
      %v3311 = vadd.f32 %v3236, %v3310
      %3312 = vdwg.mxu0
      %3313 = vmatpush.msra.mxu0 0.0
      %3314 = vmatpush.msra.mxu0 0.0
      %3315 = vmatpush.msra.mxu0 0.0
      %3316 = vmatpush.msra.mxu0 0.0
      %3317 = vmatpush.msra.mxu0 0.0
      %3318 = vmatpush.msra.mxu0 0.0
      %3319 = vmatpush.msra.mxu0 0.0
      %3320 = vmatpush.msra.mxu0 0.0
      %3321 = vmatpush.msra.mxu0 0.0
      %3322 = vmatpush.msra.mxu0 0.0
      %3323 = vmatpush.msra.mxu0 0.0
      %3324 = vmatpush.msra.mxu0 0.0
      %3325 = vmatpush.msra.mxu0 0.0
      %3326 = vmatpush.msra.mxu0 0.0
      %3327 = vmatpush.msra.mxu0 %v3172
      %3328 = vmatpush.msra.mxu0 %v3167
      %3329 = vmatmul.f32.gmra.mxu0 %v3285
      %v3330 = vpop.f32.mrf.mxu0
      %v3331 = vadd.f32 %v3256, %v3330
      %3332 = vmatmul.f32.gmra.mxu0 %v3288
      %v3333 = vpop.f32.mrf.mxu0
      %v3334 = vadd.f32 %v3259, %v3333
      %3335 = vdwg.mxu0
      %3336 = vmatpush.msra.mxu0 0.0
      %3337 = vmatpush.msra.mxu0 0.0
      %3338 = vmatpush.msra.mxu0 0.0
      %3339 = vmatpush.msra.mxu0 0.0
      %3340 = vmatpush.msra.mxu0 0.0
      %3341 = vmatpush.msra.mxu0 0.0
      %3342 = vmatpush.msra.mxu0 0.0
      %3343 = vmatpush.msra.mxu0 0.0
      %3344 = vmatpush.msra.mxu0 0.0
      %3345 = vmatpush.msra.mxu0 0.0
      %3346 = vmatpush.msra.mxu0 0.0
      %3347 = vmatpush.msra.mxu0 0.0
      %3348 = vmatpush.msra.mxu0 0.0
      %3349 = vmatpush.msra.mxu0 0.0
      %3350 = vmatpush.msra.mxu0 %v3173
      %3351 = vmatpush.msra.mxu0 %v3168
      %3352 = vmatmul.f32.gmra.mxu0 %v3285
      %v3353 = vpop.f32.mrf.mxu0
      %v3354 = vadd.f32 %v3279, %v3353
      %3355 = vmatmul.f32.gmra.mxu0 %v3288
      %v3356 = vpop.f32.mrf.mxu0
      %v3357 = vadd.f32 %v3282, %v3356
      %3358 = vdwg.mxu0
      %s3359 = scalar_lea.vmem %s3, 32
      %v3360 = vld [vmem:[%s3359] sm:$0xff]
      %v3361 = vld [vmem:[%s3359 + $0x8] sm:$0xff]
      %3362 = vrot.lane.b32.xlu0 %v3166, 120
      %v3363 = vpop.permute.xlu0 %3362
      %3364 = vrot.lane.b32.xlu0 %v3167, 120
      %v3365 = vpop.permute.xlu0 %3364
      %3366 = vrot.lane.b32.xlu0 %v3168, 120
      %v3367 = vpop.permute.xlu0 %3366
      %3368 = vrot.lane.b32.xlu0 %v3171, 120
      %v3369 = vpop.permute.xlu0 %3368
      %3370 = vrot.lane.b32.xlu0 %v3172, 120
      %v3371 = vpop.permute.xlu0 %3370
      %3372 = vrot.lane.b32.xlu0 %v3173, 120
      %v3373 = vpop.permute.xlu0 %3372
      %vm3374 = vcmask 982016
      %v3375 = vsel %vm3374, %v3363, %v3365
      %v3376 = vsel %vm3374, %v3365, %v3367
      %v3377 = vsel %vm3374, %v3369, %v3371
      %v3378 = vsel %vm3374, %v3371, %v3373
      %v3386 = vsel %vm1529, %v3360, 0
      %v3389 = vsel %vm1529, %v3361, 0
      %3391 = vmatpush.msra.mxu0 0.0
      %3392 = vmatpush.msra.mxu0 0.0
      %3393 = vmatpush.msra.mxu0 0.0
      %3394 = vmatpush.msra.mxu0 0.0
      %3395 = vmatpush.msra.mxu0 0.0
      %3396 = vmatpush.msra.mxu0 0.0
      %3397 = vmatpush.msra.mxu0 0.0
      %3398 = vmatpush.msra.mxu0 0.0
      %3399 = vmatpush.msra.mxu0 0.0
      %3400 = vmatpush.msra.mxu0 0.0
      %3401 = vmatpush.msra.mxu0 0.0
      %3402 = vmatpush.msra.mxu0 0.0
      %3403 = vmatpush.msra.mxu0 0.0
      %3404 = vmatpush.msra.mxu0 0.0
      %3405 = vmatpush.msra.mxu0 %v3377
      %3406 = vmatpush.msra.mxu0 %v3375
      %3407 = vmatmul.f32.gmra.mxu0 %v3386
      %v3408 = vpop.f32.mrf.mxu0
      %v3409 = vadd.f32 0.0, %v3408
      %3410 = vmatmul.f32.gmra.mxu0 %v3389
      %v3411 = vpop.f32.mrf.mxu0
      %v3412 = vadd.f32 0.0, %v3411
      %3413 = vdwg.mxu0
      %3414 = vmatpush.msra.mxu0 0.0
      %3415 = vmatpush.msra.mxu0 0.0
      %3416 = vmatpush.msra.mxu0 0.0
      %3417 = vmatpush.msra.mxu0 0.0
      %3418 = vmatpush.msra.mxu0 0.0
      %3419 = vmatpush.msra.mxu0 0.0
      %3420 = vmatpush.msra.mxu0 0.0
      %3421 = vmatpush.msra.mxu0 0.0
      %3422 = vmatpush.msra.mxu0 0.0
      %3423 = vmatpush.msra.mxu0 0.0
      %3424 = vmatpush.msra.mxu0 0.0
      %3425 = vmatpush.msra.mxu0 0.0
      %3426 = vmatpush.msra.mxu0 0.0
      %3427 = vmatpush.msra.mxu0 0.0
      %3428 = vmatpush.msra.mxu0 %v3378
      %3429 = vmatpush.msra.mxu0 %v3376
      %3430 = vmatmul.f32.gmra.mxu0 %v3386
      %v3431 = vpop.f32.mrf.mxu0
      %v3432 = vadd.f32 0.0, %v3431
      %3433 = vmatmul.f32.gmra.mxu0 %v3389
      %v3434 = vpop.f32.mrf.mxu0
      %v3435 = vadd.f32 0.0, %v3434
      %3436 = vdwg.mxu0
      %3437 = vmatpush.msra.mxu0 0.0
      %3438 = vmatpush.msra.mxu0 0.0
      %3439 = vmatpush.msra.mxu0 0.0
      %3440 = vmatpush.msra.mxu0 0.0
      %3441 = vmatpush.msra.mxu0 0.0
      %3442 = vmatpush.msra.mxu0 0.0
      %3443 = vmatpush.msra.mxu0 0.0
      %3444 = vmatpush.msra.mxu0 0.0
      %3445 = vmatpush.msra.mxu0 0.0
      %3446 = vmatpush.msra.mxu0 0.0
      %3447 = vmatpush.msra.mxu0 0.0
      %3448 = vmatpush.msra.mxu0 0.0
      %3449 = vmatpush.msra.mxu0 0.0
      %3450 = vmatpush.msra.mxu0 0.0
      %3451 = vmatpush.msra.mxu0 %v3373
      %3452 = vmatpush.msra.mxu0 %v3367
      %3453 = vmatmul.f32.gmra.mxu0 %v3386
      %v3454 = vpop.f32.mrf.mxu0
      %v3455 = vadd.f32 0.0, %v3454
      %3456 = vmatmul.f32.gmra.mxu0 %v3389
      %v3457 = vpop.f32.mrf.mxu0
      %v3458 = vadd.f32 0.0, %v3457
      %3459 = vdwg.mxu0
      %v3460 = vadd.f32 %v3308, %v3409
      %v3461 = vadd.f32 %v3331, %v3432
      %v3462 = vadd.f32 %v3354, %v3455
      %v3463 = vadd.f32 %v3311, %v3412
      %v3464 = vadd.f32 %v3334, %v3435
      %v3465 = vadd.f32 %v3357, %v3458
      %s3466 = scalar_lea.vmem %s3, 48
      %v3467 = vld [vmem:[%s3466] sm:$0xff]
      %v3468 = vld [vmem:[%s3466 + $0x8] sm:$0xff]
      %3471 = vrot.lane.b32.xlu0 %v3166, 16
      %v3472 = vpop.permute.xlu0 %3471
      %3473 = vrot.lane.b32.xlu0 %v3167, 16
      %v3474 = vpop.permute.xlu0 %3473
      %3475 = vrot.lane.b32.xlu0 %v3168, 16
      %v3476 = vpop.permute.xlu0 %3475
      %3477 = vrot.lane.b32.xlu0 %v3169, 16
      %v3478 = vpop.permute.xlu0 %3477
      %3479 = vrot.lane.b32.xlu0 %v3171, 16
      %v3480 = vpop.permute.xlu0 %3479
      %3481 = vrot.lane.b32.xlu0 %v3172, 16
      %v3482 = vpop.permute.xlu0 %3481
      %3483 = vrot.lane.b32.xlu0 %v3173, 16
      %v3484 = vpop.permute.xlu0 %3483
      %3485 = vrot.lane.b32.xlu0 %v3174, 16
      %v3486 = vpop.permute.xlu0 %3485
      %v3487 = vsel %vm1529, %v3472, %v3474
      %v3488 = vsel %vm1529, %v3474, %v3476
      %v3489 = vsel %vm1529, %v3476, %v3478
      %v3490 = vsel %vm1529, %v3480, %v3482
      %v3491 = vsel %vm1529, %v3482, %v3484
      %v3492 = vsel %vm1529, %v3484, %v3486
      %v3500 = vsel %vm1529, %v3467, 0
      %v3503 = vsel %vm1529, %v3468, 0
      %3505 = vmatpush.msra.mxu0 0.0
      %3506 = vmatpush.msra.mxu0 0.0
      %3507 = vmatpush.msra.mxu0 0.0
      %3508 = vmatpush.msra.mxu0 0.0
      %3509 = vmatpush.msra.mxu0 0.0
      %3510 = vmatpush.msra.mxu0 0.0
      %3511 = vmatpush.msra.mxu0 0.0
      %3512 = vmatpush.msra.mxu0 0.0
      %3513 = vmatpush.msra.mxu0 0.0
      %3514 = vmatpush.msra.mxu0 0.0
      %3515 = vmatpush.msra.mxu0 0.0
      %3516 = vmatpush.msra.mxu0 0.0
      %3517 = vmatpush.msra.mxu0 0.0
      %3518 = vmatpush.msra.mxu0 0.0
      %3519 = vmatpush.msra.mxu0 %v3490
      %3520 = vmatpush.msra.mxu0 %v3487
      %3521 = vmatmul.f32.gmra.mxu0 %v3500
      %v3522 = vpop.f32.mrf.mxu0
      %v3523 = vadd.f32 0.0, %v3522
      %3524 = vmatmul.f32.gmra.mxu0 %v3503
      %v3525 = vpop.f32.mrf.mxu0
      %v3526 = vadd.f32 0.0, %v3525
      %3527 = vdwg.mxu0
      %3528 = vmatpush.msra.mxu0 0.0
      %3529 = vmatpush.msra.mxu0 0.0
      %3530 = vmatpush.msra.mxu0 0.0
      %3531 = vmatpush.msra.mxu0 0.0
      %3532 = vmatpush.msra.mxu0 0.0
      %3533 = vmatpush.msra.mxu0 0.0
      %3534 = vmatpush.msra.mxu0 0.0
      %3535 = vmatpush.msra.mxu0 0.0
      %3536 = vmatpush.msra.mxu0 0.0
      %3537 = vmatpush.msra.mxu0 0.0
      %3538 = vmatpush.msra.mxu0 0.0
      %3539 = vmatpush.msra.mxu0 0.0
      %3540 = vmatpush.msra.mxu0 0.0
      %3541 = vmatpush.msra.mxu0 0.0
      %3542 = vmatpush.msra.mxu0 %v3491
      %3543 = vmatpush.msra.mxu0 %v3488
      %3544 = vmatmul.f32.gmra.mxu0 %v3500
      %v3545 = vpop.f32.mrf.mxu0
      %v3546 = vadd.f32 0.0, %v3545
      %3547 = vmatmul.f32.gmra.mxu0 %v3503
      %v3548 = vpop.f32.mrf.mxu0
      %v3549 = vadd.f32 0.0, %v3548
      %3550 = vdwg.mxu0
      %3551 = vmatpush.msra.mxu0 0.0
      %3552 = vmatpush.msra.mxu0 0.0
      %3553 = vmatpush.msra.mxu0 0.0
      %3554 = vmatpush.msra.mxu0 0.0
      %3555 = vmatpush.msra.mxu0 0.0
      %3556 = vmatpush.msra.mxu0 0.0
      %3557 = vmatpush.msra.mxu0 0.0
      %3558 = vmatpush.msra.mxu0 0.0
      %3559 = vmatpush.msra.mxu0 0.0
      %3560 = vmatpush.msra.mxu0 0.0
      %3561 = vmatpush.msra.mxu0 0.0
      %3562 = vmatpush.msra.mxu0 0.0
      %3563 = vmatpush.msra.mxu0 0.0
      %3564 = vmatpush.msra.mxu0 0.0
      %3565 = vmatpush.msra.mxu0 %v3492
      %3566 = vmatpush.msra.mxu0 %v3489
      %3567 = vmatmul.f32.gmra.mxu0 %v3500
      %v3568 = vpop.f32.mrf.mxu0
      %v3569 = vadd.f32 0.0, %v3568
      %3570 = vmatmul.f32.gmra.mxu0 %v3503
      %v3571 = vpop.f32.mrf.mxu0
      %v3572 = vadd.f32 0.0, %v3571
      %3573 = vdwg.mxu0
      %v3574 = vadd.f32 %v3460, %v3523
      %v3575 = vadd.f32 %v3461, %v3546
      %v3576 = vadd.f32 %v3462, %v3569
      %v3577 = vadd.f32 %v3463, %v3526
      %v3578 = vadd.f32 %v3464, %v3549
      %v3579 = vadd.f32 %v3465, %v3572
      %s3580 = scalar_lea.vmem %s3, 64
      %v3581 = vld [vmem:[%s3580] sm:$0xff]
      %v3582 = vld [vmem:[%s3580 + $0x8] sm:$0xff]
      %3583 = vrot.lane.b32.xlu0 %v3166, 12
      %v3584 = vpop.permute.xlu0 %3583
      %3585 = vrot.lane.b32.xlu0 %v3167, 12
      %v3586 = vpop.permute.xlu0 %3585
      %3587 = vrot.lane.b32.xlu0 %v3168, 12
      %v3588 = vpop.permute.xlu0 %3587
      %3589 = vrot.lane.b32.xlu0 %v3169, 12
      %v3590 = vpop.permute.xlu0 %3589
      %3591 = vrot.lane.b32.xlu0 %v3171, 12
      %v3592 = vpop.permute.xlu0 %3591
      %3593 = vrot.lane.b32.xlu0 %v3172, 12
      %v3594 = vpop.permute.xlu0 %3593
      %3595 = vrot.lane.b32.xlu0 %v3173, 12
      %v3596 = vpop.permute.xlu0 %3595
      %3597 = vrot.lane.b32.xlu0 %v3174, 12
      %v3598 = vpop.permute.xlu0 %3597
      %v3599 = vsel %vm2854, %v3584, %v3586
      %v3600 = vsel %vm2854, %v3586, %v3588
      %v3601 = vsel %vm2854, %v3588, %v3590
      %v3602 = vsel %vm2854, %v3592, %v3594
      %v3603 = vsel %vm2854, %v3594, %v3596
      %v3604 = vsel %vm2854, %v3596, %v3598
      %v3612 = vsel %vm1529, %v3581, 0
      %v3615 = vsel %vm1529, %v3582, 0
      %3617 = vmatpush.msra.mxu0 0.0
      %3618 = vmatpush.msra.mxu0 0.0
      %3619 = vmatpush.msra.mxu0 0.0
      %3620 = vmatpush.msra.mxu0 0.0
      %3621 = vmatpush.msra.mxu0 0.0
      %3622 = vmatpush.msra.mxu0 0.0
      %3623 = vmatpush.msra.mxu0 0.0
      %3624 = vmatpush.msra.mxu0 0.0
      %3625 = vmatpush.msra.mxu0 0.0
      %3626 = vmatpush.msra.mxu0 0.0
      %3627 = vmatpush.msra.mxu0 0.0
      %3628 = vmatpush.msra.mxu0 0.0
      %3629 = vmatpush.msra.mxu0 0.0
      %3630 = vmatpush.msra.mxu0 0.0
      %3631 = vmatpush.msra.mxu0 %v3602
      %3632 = vmatpush.msra.mxu0 %v3599
      %3633 = vmatmul.f32.gmra.mxu0 %v3612
      %v3634 = vpop.f32.mrf.mxu0
      %v3635 = vadd.f32 0.0, %v3634
      %3636 = vmatmul.f32.gmra.mxu0 %v3615
      %v3637 = vpop.f32.mrf.mxu0
      %v3638 = vadd.f32 0.0, %v3637
      %3639 = vdwg.mxu0
      %3640 = vmatpush.msra.mxu0 0.0
      %3641 = vmatpush.msra.mxu0 0.0
      %3642 = vmatpush.msra.mxu0 0.0
      %3643 = vmatpush.msra.mxu0 0.0
      %3644 = vmatpush.msra.mxu0 0.0
      %3645 = vmatpush.msra.mxu0 0.0
      %3646 = vmatpush.msra.mxu0 0.0
      %3647 = vmatpush.msra.mxu0 0.0
      %3648 = vmatpush.msra.mxu0 0.0
      %3649 = vmatpush.msra.mxu0 0.0
      %3650 = vmatpush.msra.mxu0 0.0
      %3651 = vmatpush.msra.mxu0 0.0
      %3652 = vmatpush.msra.mxu0 0.0
      %3653 = vmatpush.msra.mxu0 0.0
      %3654 = vmatpush.msra.mxu0 %v3603
      %3655 = vmatpush.msra.mxu0 %v3600
      %3656 = vmatmul.f32.gmra.mxu0 %v3612
      %v3657 = vpop.f32.mrf.mxu0
      %v3658 = vadd.f32 0.0, %v3657
      %3659 = vmatmul.f32.gmra.mxu0 %v3615
      %v3660 = vpop.f32.mrf.mxu0
      %v3661 = vadd.f32 0.0, %v3660
      %3662 = vdwg.mxu0
      %3663 = vmatpush.msra.mxu0 0.0
      %3664 = vmatpush.msra.mxu0 0.0
      %3665 = vmatpush.msra.mxu0 0.0
      %3666 = vmatpush.msra.mxu0 0.0
      %3667 = vmatpush.msra.mxu0 0.0
      %3668 = vmatpush.msra.mxu0 0.0
      %3669 = vmatpush.msra.mxu0 0.0
      %3670 = vmatpush.msra.mxu0 0.0
      %3671 = vmatpush.msra.mxu0 0.0
      %3672 = vmatpush.msra.mxu0 0.0
      %3673 = vmatpush.msra.mxu0 0.0
      %3674 = vmatpush.msra.mxu0 0.0
      %3675 = vmatpush.msra.mxu0 0.0
      %3676 = vmatpush.msra.mxu0 0.0
      %3677 = vmatpush.msra.mxu0 %v3604
      %3678 = vmatpush.msra.mxu0 %v3601
      %3679 = vmatmul.f32.gmra.mxu0 %v3612
      %v3680 = vpop.f32.mrf.mxu0
      %v3681 = vadd.f32 0.0, %v3680
      %3682 = vmatmul.f32.gmra.mxu0 %v3615
      %v3683 = vpop.f32.mrf.mxu0
      %v3684 = vadd.f32 0.0, %v3683
      %3685 = vdwg.mxu0
      %v3686 = vadd.f32 %v3574, %v3635
      %v3687 = vadd.f32 %v3575, %v3658
      %v3688 = vadd.f32 %v3576, %v3681
      %v3689 = vadd.f32 %v3577, %v3638
      %v3690 = vadd.f32 %v3578, %v3661
      %v3691 = vadd.f32 %v3579, %v3684
      %s3692 = scalar_lea.vmem %s3, 80
      %v3693 = vld [vmem:[%s3692] sm:$0xff]
      %v3694 = vld [vmem:[%s3692 + $0x8] sm:$0xff]
      %3695 = vrot.lane.b32.xlu0 %v3166, 8
      %v3696 = vpop.permute.xlu0 %3695
      %3697 = vrot.lane.b32.xlu0 %v3167, 8
      %v3698 = vpop.permute.xlu0 %3697
      %3699 = vrot.lane.b32.xlu0 %v3168, 8
      %v3700 = vpop.permute.xlu0 %3699
      %3701 = vrot.lane.b32.xlu0 %v3169, 8
      %v3702 = vpop.permute.xlu0 %3701
      %3703 = vrot.lane.b32.xlu0 %v3171, 8
      %v3704 = vpop.permute.xlu0 %3703
      %3705 = vrot.lane.b32.xlu0 %v3172, 8
      %v3706 = vpop.permute.xlu0 %3705
      %3707 = vrot.lane.b32.xlu0 %v3173, 8
      %v3708 = vpop.permute.xlu0 %3707
      %3709 = vrot.lane.b32.xlu0 %v3174, 8
      %v3710 = vpop.permute.xlu0 %3709
      %vm3711 = vcmask 64512
      %v3712 = vsel %vm3711, %v3696, %v3698
      %v3713 = vsel %vm3711, %v3698, %v3700
      %v3714 = vsel %vm3711, %v3700, %v3702
      %v3715 = vsel %vm3711, %v3704, %v3706
      %v3716 = vsel %vm3711, %v3706, %v3708
      %v3717 = vsel %vm3711, %v3708, %v3710
      %v3725 = vsel %vm1529, %v3693, 0
      %v3728 = vsel %vm1529, %v3694, 0
      %3730 = vmatpush.msra.mxu0 0.0
      %3731 = vmatpush.msra.mxu0 0.0
      %3732 = vmatpush.msra.mxu0 0.0
      %3733 = vmatpush.msra.mxu0 0.0
      %3734 = vmatpush.msra.mxu0 0.0
      %3735 = vmatpush.msra.mxu0 0.0
      %3736 = vmatpush.msra.mxu0 0.0
      %3737 = vmatpush.msra.mxu0 0.0
      %3738 = vmatpush.msra.mxu0 0.0
      %3739 = vmatpush.msra.mxu0 0.0
      %3740 = vmatpush.msra.mxu0 0.0
      %3741 = vmatpush.msra.mxu0 0.0
      %3742 = vmatpush.msra.mxu0 0.0
      %3743 = vmatpush.msra.mxu0 0.0
      %3744 = vmatpush.msra.mxu0 %v3715
      %3745 = vmatpush.msra.mxu0 %v3712
      %3746 = vmatmul.f32.gmra.mxu0 %v3725
      %v3747 = vpop.f32.mrf.mxu0
      %v3748 = vadd.f32 0.0, %v3747
      %3749 = vmatmul.f32.gmra.mxu0 %v3728
      %v3750 = vpop.f32.mrf.mxu0
      %v3751 = vadd.f32 0.0, %v3750
      %3752 = vdwg.mxu0
      %3753 = vmatpush.msra.mxu0 0.0
      %3754 = vmatpush.msra.mxu0 0.0
      %3755 = vmatpush.msra.mxu0 0.0
      %3756 = vmatpush.msra.mxu0 0.0
      %3757 = vmatpush.msra.mxu0 0.0
      %3758 = vmatpush.msra.mxu0 0.0
      %3759 = vmatpush.msra.mxu0 0.0
      %3760 = vmatpush.msra.mxu0 0.0
      %3761 = vmatpush.msra.mxu0 0.0
      %3762 = vmatpush.msra.mxu0 0.0
      %3763 = vmatpush.msra.mxu0 0.0
      %3764 = vmatpush.msra.mxu0 0.0
      %3765 = vmatpush.msra.mxu0 0.0
      %3766 = vmatpush.msra.mxu0 0.0
      %3767 = vmatpush.msra.mxu0 %v3716
      %3768 = vmatpush.msra.mxu0 %v3713
      %3769 = vmatmul.f32.gmra.mxu0 %v3725
      %v3770 = vpop.f32.mrf.mxu0
      %v3771 = vadd.f32 0.0, %v3770
      %3772 = vmatmul.f32.gmra.mxu0 %v3728
      %v3773 = vpop.f32.mrf.mxu0
      %v3774 = vadd.f32 0.0, %v3773
      %3775 = vdwg.mxu0
      %3776 = vmatpush.msra.mxu0 0.0
      %3777 = vmatpush.msra.mxu0 0.0
      %3778 = vmatpush.msra.mxu0 0.0
      %3779 = vmatpush.msra.mxu0 0.0
      %3780 = vmatpush.msra.mxu0 0.0
      %3781 = vmatpush.msra.mxu0 0.0
      %3782 = vmatpush.msra.mxu0 0.0
      %3783 = vmatpush.msra.mxu0 0.0
      %3784 = vmatpush.msra.mxu0 0.0
      %3785 = vmatpush.msra.mxu0 0.0
      %3786 = vmatpush.msra.mxu0 0.0
      %3787 = vmatpush.msra.mxu0 0.0
      %3788 = vmatpush.msra.mxu0 0.0
      %3789 = vmatpush.msra.mxu0 0.0
      %3790 = vmatpush.msra.mxu0 %v3717
      %3791 = vmatpush.msra.mxu0 %v3714
      %3792 = vmatmul.f32.gmra.mxu0 %v3725
      %v3793 = vpop.f32.mrf.mxu0
      %v3794 = vadd.f32 0.0, %v3793
      %3795 = vmatmul.f32.gmra.mxu0 %v3728
      %v3796 = vpop.f32.mrf.mxu0
      %v3797 = vadd.f32 0.0, %v3796
      %3798 = vdwg.mxu0
      %v3799 = vadd.f32 %v3686, %v3748
      %v3800 = vadd.f32 %v3687, %v3771
      %v3801 = vadd.f32 %v3688, %v3794
      %v3802 = vadd.f32 %v3689, %v3751
      %v3803 = vadd.f32 %v3690, %v3774
      %v3804 = vadd.f32 %v3691, %v3797
      %s3805 = scalar_lea.vmem %s3, 96
      %v3806 = vld [vmem:[%s3805] sm:$0xff]
      %v3807 = vld [vmem:[%s3805 + $0x8] sm:$0xff]
      %3810 = vrot.lane.b32.xlu0 %v3167, 32
      %v3811 = vpop.permute.xlu0 %3810
      %3812 = vrot.lane.b32.xlu0 %v3168, 32
      %v3813 = vpop.permute.xlu0 %3812
      %3814 = vrot.lane.b32.xlu0 %v3169, 32
      %v3815 = vpop.permute.xlu0 %3814
      %3816 = vrot.lane.b32.xlu0 %v3170, 32
      %v3817 = vpop.permute.xlu0 %3816
      %3818 = vrot.lane.b32.xlu0 %v3172, 32
      %v3819 = vpop.permute.xlu0 %3818
      %3820 = vrot.lane.b32.xlu0 %v3173, 32
      %v3821 = vpop.permute.xlu0 %3820
      %3822 = vrot.lane.b32.xlu0 %v3174, 32
      %v3823 = vpop.permute.xlu0 %3822
      %3824 = vrot.lane.b32.xlu0 %v3175, 32
      %v3825 = vpop.permute.xlu0 %3824
      %vm3826 = vcmask 261120
      %v3827 = vsel %vm3826, %v3811, %v3813
      %v3828 = vsel %vm3826, %v3813, %v3815
      %v3829 = vsel %vm3826, %v3815, %v3817
      %v3830 = vsel %vm3826, %v3819, %v3821
      %v3831 = vsel %vm3826, %v3821, %v3823
      %v3832 = vsel %vm3826, %v3823, %v3825
      %v3840 = vsel %vm1529, %v3806, 0
      %v3843 = vsel %vm1529, %v3807, 0
      %3845 = vmatpush.msra.mxu0 0.0
      %3846 = vmatpush.msra.mxu0 0.0
      %3847 = vmatpush.msra.mxu0 0.0
      %3848 = vmatpush.msra.mxu0 0.0
      %3849 = vmatpush.msra.mxu0 0.0
      %3850 = vmatpush.msra.mxu0 0.0
      %3851 = vmatpush.msra.mxu0 0.0
      %3852 = vmatpush.msra.mxu0 0.0
      %3853 = vmatpush.msra.mxu0 0.0
      %3854 = vmatpush.msra.mxu0 0.0
      %3855 = vmatpush.msra.mxu0 0.0
      %3856 = vmatpush.msra.mxu0 0.0
      %3857 = vmatpush.msra.mxu0 0.0
      %3858 = vmatpush.msra.mxu0 0.0
      %3859 = vmatpush.msra.mxu0 %v3830
      %3860 = vmatpush.msra.mxu0 %v3827
      %3861 = vmatmul.f32.gmra.mxu0 %v3840
      %v3862 = vpop.f32.mrf.mxu0
      %v3863 = vadd.f32 0.0, %v3862
      %3864 = vmatmul.f32.gmra.mxu0 %v3843
      %v3865 = vpop.f32.mrf.mxu0
      %v3866 = vadd.f32 0.0, %v3865
      %3867 = vdwg.mxu0
      %3868 = vmatpush.msra.mxu0 0.0
      %3869 = vmatpush.msra.mxu0 0.0
      %3870 = vmatpush.msra.mxu0 0.0
      %3871 = vmatpush.msra.mxu0 0.0
      %3872 = vmatpush.msra.mxu0 0.0
      %3873 = vmatpush.msra.mxu0 0.0
      %3874 = vmatpush.msra.mxu0 0.0
      %3875 = vmatpush.msra.mxu0 0.0
      %3876 = vmatpush.msra.mxu0 0.0
      %3877 = vmatpush.msra.mxu0 0.0
      %3878 = vmatpush.msra.mxu0 0.0
      %3879 = vmatpush.msra.mxu0 0.0
      %3880 = vmatpush.msra.mxu0 0.0
      %3881 = vmatpush.msra.mxu0 0.0
      %3882 = vmatpush.msra.mxu0 %v3831
      %3883 = vmatpush.msra.mxu0 %v3828
      %3884 = vmatmul.f32.gmra.mxu0 %v3840
      %v3885 = vpop.f32.mrf.mxu0
      %v3886 = vadd.f32 0.0, %v3885
      %3887 = vmatmul.f32.gmra.mxu0 %v3843
      %v3888 = vpop.f32.mrf.mxu0
      %v3889 = vadd.f32 0.0, %v3888
      %3890 = vdwg.mxu0
      %3891 = vmatpush.msra.mxu0 0.0
      %3892 = vmatpush.msra.mxu0 0.0
      %3893 = vmatpush.msra.mxu0 0.0
      %3894 = vmatpush.msra.mxu0 0.0
      %3895 = vmatpush.msra.mxu0 0.0
      %3896 = vmatpush.msra.mxu0 0.0
      %3897 = vmatpush.msra.mxu0 0.0
      %3898 = vmatpush.msra.mxu0 0.0
      %3899 = vmatpush.msra.mxu0 0.0
      %3900 = vmatpush.msra.mxu0 0.0
      %3901 = vmatpush.msra.mxu0 0.0
      %3902 = vmatpush.msra.mxu0 0.0
      %3903 = vmatpush.msra.mxu0 0.0
      %3904 = vmatpush.msra.mxu0 0.0
      %3905 = vmatpush.msra.mxu0 %v3832
      %3906 = vmatpush.msra.mxu0 %v3829
      %3907 = vmatmul.f32.gmra.mxu0 %v3840
      %v3908 = vpop.f32.mrf.mxu0
      %v3909 = vadd.f32 0.0, %v3908
      %3910 = vmatmul.f32.gmra.mxu0 %v3843
      %v3911 = vpop.f32.mrf.mxu0
      %v3912 = vadd.f32 0.0, %v3911
      %3913 = vdwg.mxu0
      %v3914 = vadd.f32 %v3799, %v3863
      %v3915 = vadd.f32 %v3800, %v3886
      %v3916 = vadd.f32 %v3801, %v3909
      %v3917 = vadd.f32 %v3802, %v3866
      %v3918 = vadd.f32 %v3803, %v3889
      %v3919 = vadd.f32 %v3804, %v3912
      %s3920 = scalar_lea.vmem %s3, 112
      %v3921 = vld [vmem:[%s3920] sm:$0xff]
      %v3922 = vld [vmem:[%s3920 + $0x8] sm:$0xff]
      %3923 = vrot.lane.b32.xlu0 %v3167, 28
      %v3924 = vpop.permute.xlu0 %3923
      %3925 = vrot.lane.b32.xlu0 %v3168, 28
      %v3926 = vpop.permute.xlu0 %3925
      %3927 = vrot.lane.b32.xlu0 %v3169, 28
      %v3928 = vpop.permute.xlu0 %3927
      %3929 = vrot.lane.b32.xlu0 %v3170, 28
      %v3930 = vpop.permute.xlu0 %3929
      %3931 = vrot.lane.b32.xlu0 %v3172, 28
      %v3932 = vpop.permute.xlu0 %3931
      %3933 = vrot.lane.b32.xlu0 %v3173, 28
      %v3934 = vpop.permute.xlu0 %3933
      %3935 = vrot.lane.b32.xlu0 %v3174, 28
      %v3936 = vpop.permute.xlu0 %3935
      %3937 = vrot.lane.b32.xlu0 %v3175, 28
      %v3938 = vpop.permute.xlu0 %3937
      %vm3939 = vcmask 228352
      %v3940 = vsel %vm3939, %v3924, %v3926
      %v3941 = vsel %vm3939, %v3926, %v3928
      %v3942 = vsel %vm3939, %v3928, %v3930
      %v3943 = vsel %vm3939, %v3932, %v3934
      %v3944 = vsel %vm3939, %v3934, %v3936
      %v3945 = vsel %vm3939, %v3936, %v3938
      %v3953 = vsel %vm1529, %v3921, 0
      %v3956 = vsel %vm1529, %v3922, 0
      %3958 = vmatpush.msra.mxu0 0.0
      %3959 = vmatpush.msra.mxu0 0.0
      %3960 = vmatpush.msra.mxu0 0.0
      %3961 = vmatpush.msra.mxu0 0.0
      %3962 = vmatpush.msra.mxu0 0.0
      %3963 = vmatpush.msra.mxu0 0.0
      %3964 = vmatpush.msra.mxu0 0.0
      %3965 = vmatpush.msra.mxu0 0.0
      %3966 = vmatpush.msra.mxu0 0.0
      %3967 = vmatpush.msra.mxu0 0.0
      %3968 = vmatpush.msra.mxu0 0.0
      %3969 = vmatpush.msra.mxu0 0.0
      %3970 = vmatpush.msra.mxu0 0.0
      %3971 = vmatpush.msra.mxu0 0.0
      %3972 = vmatpush.msra.mxu0 %v3943
      %3973 = vmatpush.msra.mxu0 %v3940
      %3974 = vmatmul.f32.gmra.mxu0 %v3953
      %v3975 = vpop.f32.mrf.mxu0
      %v3976 = vadd.f32 0.0, %v3975
      %3977 = vmatmul.f32.gmra.mxu0 %v3956
      %v3978 = vpop.f32.mrf.mxu0
      %v3979 = vadd.f32 0.0, %v3978
      %3980 = vdwg.mxu0
      %3981 = vmatpush.msra.mxu0 0.0
      %3982 = vmatpush.msra.mxu0 0.0
      %3983 = vmatpush.msra.mxu0 0.0
      %3984 = vmatpush.msra.mxu0 0.0
      %3985 = vmatpush.msra.mxu0 0.0
      %3986 = vmatpush.msra.mxu0 0.0
      %3987 = vmatpush.msra.mxu0 0.0
      %3988 = vmatpush.msra.mxu0 0.0
      %3989 = vmatpush.msra.mxu0 0.0
      %3990 = vmatpush.msra.mxu0 0.0
      %3991 = vmatpush.msra.mxu0 0.0
      %3992 = vmatpush.msra.mxu0 0.0
      %3993 = vmatpush.msra.mxu0 0.0
      %3994 = vmatpush.msra.mxu0 0.0
      %3995 = vmatpush.msra.mxu0 %v3944
      %3996 = vmatpush.msra.mxu0 %v3941
      %3997 = vmatmul.f32.gmra.mxu0 %v3953
      %v3998 = vpop.f32.mrf.mxu0
      %v3999 = vadd.f32 0.0, %v3998
      %4000 = vmatmul.f32.gmra.mxu0 %v3956
      %v4001 = vpop.f32.mrf.mxu0
      %v4002 = vadd.f32 0.0, %v4001
      %4003 = vdwg.mxu0
      %4004 = vmatpush.msra.mxu0 0.0
      %4005 = vmatpush.msra.mxu0 0.0
      %4006 = vmatpush.msra.mxu0 0.0
      %4007 = vmatpush.msra.mxu0 0.0
      %4008 = vmatpush.msra.mxu0 0.0
      %4009 = vmatpush.msra.mxu0 0.0
      %4010 = vmatpush.msra.mxu0 0.0
      %4011 = vmatpush.msra.mxu0 0.0
      %4012 = vmatpush.msra.mxu0 0.0
      %4013 = vmatpush.msra.mxu0 0.0
      %4014 = vmatpush.msra.mxu0 0.0
      %4015 = vmatpush.msra.mxu0 0.0
      %4016 = vmatpush.msra.mxu0 0.0
      %4017 = vmatpush.msra.mxu0 0.0
      %4018 = vmatpush.msra.mxu0 %v3945
      %4019 = vmatpush.msra.mxu0 %v3942
      %4020 = vmatmul.f32.gmra.mxu0 %v3953
      %v4021 = vpop.f32.mrf.mxu0
      %v4022 = vadd.f32 0.0, %v4021
      %4023 = vmatmul.f32.gmra.mxu0 %v3956
      %v4024 = vpop.f32.mrf.mxu0
      %v4025 = vadd.f32 0.0, %v4024
      %4026 = vdwg.mxu0
      %v4027 = vadd.f32 %v3914, %v3976
      %v4028 = vadd.f32 %v3915, %v3999
      %v4029 = vadd.f32 %v3916, %v4022
      %v4030 = vadd.f32 %v3917, %v3979
      %v4031 = vadd.f32 %v3918, %v4002
      %v4032 = vadd.f32 %v3919, %v4025
      %s4033 = scalar_lea.vmem %s3, 128
      %v4034 = vld [vmem:[%s4033] sm:$0xff]
      %v4035 = vld [vmem:[%s4033 + $0x8] sm:$0xff]
      %4036 = vrot.lane.b32.xlu0 %v3167, 24
      %v4037 = vpop.permute.xlu0 %4036
      %4038 = vrot.lane.b32.xlu0 %v3168, 24
      %v4039 = vpop.permute.xlu0 %4038
      %4040 = vrot.lane.b32.xlu0 %v3169, 24
      %v4041 = vpop.permute.xlu0 %4040
      %4042 = vrot.lane.b32.xlu0 %v3170, 24
      %v4043 = vpop.permute.xlu0 %4042
      %4044 = vrot.lane.b32.xlu0 %v3172, 24
      %v4045 = vpop.permute.xlu0 %4044
      %4046 = vrot.lane.b32.xlu0 %v3173, 24
      %v4047 = vpop.permute.xlu0 %4046
      %4048 = vrot.lane.b32.xlu0 %v3174, 24
      %v4049 = vpop.permute.xlu0 %4048
      %4050 = vrot.lane.b32.xlu0 %v3175, 24
      %v4051 = vpop.permute.xlu0 %4050
      %vm4052 = vcmask 195584
      %v4053 = vsel %vm4052, %v4037, %v4039
      %v4054 = vsel %vm4052, %v4039, %v4041
      %v4055 = vsel %vm4052, %v4041, %v4043
      %v4056 = vsel %vm4052, %v4045, %v4047
      %v4057 = vsel %vm4052, %v4047, %v4049
      %v4058 = vsel %vm4052, %v4049, %v4051
      %v4066 = vsel %vm1529, %v4034, 0
      %v4069 = vsel %vm1529, %v4035, 0
      %4071 = vmatpush.msra.mxu0 0.0
      %4072 = vmatpush.msra.mxu0 0.0
      %4073 = vmatpush.msra.mxu0 0.0
      %4074 = vmatpush.msra.mxu0 0.0
      %4075 = vmatpush.msra.mxu0 0.0
      %4076 = vmatpush.msra.mxu0 0.0
      %4077 = vmatpush.msra.mxu0 0.0
      %4078 = vmatpush.msra.mxu0 0.0
      %4079 = vmatpush.msra.mxu0 0.0
      %4080 = vmatpush.msra.mxu0 0.0
      %4081 = vmatpush.msra.mxu0 0.0
      %4082 = vmatpush.msra.mxu0 0.0
      %4083 = vmatpush.msra.mxu0 0.0
      %4084 = vmatpush.msra.mxu0 0.0
      %4085 = vmatpush.msra.mxu0 %v4056
      %4086 = vmatpush.msra.mxu0 %v4053
      %4087 = vmatmul.f32.gmra.mxu0 %v4066
      %v4088 = vpop.f32.mrf.mxu0
      %v4089 = vadd.f32 0.0, %v4088
      %4090 = vmatmul.f32.gmra.mxu0 %v4069
      %v4091 = vpop.f32.mrf.mxu0
      %v4092 = vadd.f32 0.0, %v4091
      %4093 = vdwg.mxu0
      %4094 = vmatpush.msra.mxu0 0.0
      %4095 = vmatpush.msra.mxu0 0.0
      %4096 = vmatpush.msra.mxu0 0.0
      %4097 = vmatpush.msra.mxu0 0.0
      %4098 = vmatpush.msra.mxu0 0.0
      %4099 = vmatpush.msra.mxu0 0.0
      %4100 = vmatpush.msra.mxu0 0.0
      %4101 = vmatpush.msra.mxu0 0.0
      %4102 = vmatpush.msra.mxu0 0.0
      %4103 = vmatpush.msra.mxu0 0.0
      %4104 = vmatpush.msra.mxu0 0.0
      %4105 = vmatpush.msra.mxu0 0.0
      %4106 = vmatpush.msra.mxu0 0.0
      %4107 = vmatpush.msra.mxu0 0.0
      %4108 = vmatpush.msra.mxu0 %v4057
      %4109 = vmatpush.msra.mxu0 %v4054
      %4110 = vmatmul.f32.gmra.mxu0 %v4066
      %v4111 = vpop.f32.mrf.mxu0
      %v4112 = vadd.f32 0.0, %v4111
      %4113 = vmatmul.f32.gmra.mxu0 %v4069
      %v4114 = vpop.f32.mrf.mxu0
      %v4115 = vadd.f32 0.0, %v4114
      %4116 = vdwg.mxu0
      %4117 = vmatpush.msra.mxu0 0.0
      %4118 = vmatpush.msra.mxu0 0.0
      %4119 = vmatpush.msra.mxu0 0.0
      %4120 = vmatpush.msra.mxu0 0.0
      %4121 = vmatpush.msra.mxu0 0.0
      %4122 = vmatpush.msra.mxu0 0.0
      %4123 = vmatpush.msra.mxu0 0.0
      %4124 = vmatpush.msra.mxu0 0.0
      %4125 = vmatpush.msra.mxu0 0.0
      %4126 = vmatpush.msra.mxu0 0.0
      %4127 = vmatpush.msra.mxu0 0.0
      %4128 = vmatpush.msra.mxu0 0.0
      %4129 = vmatpush.msra.mxu0 0.0
      %4130 = vmatpush.msra.mxu0 0.0
      %4131 = vmatpush.msra.mxu0 %v4058
      %4132 = vmatpush.msra.mxu0 %v4055
      %4133 = vmatmul.f32.gmra.mxu0 %v4066
      %v4134 = vpop.f32.mrf.mxu0
      %v4135 = vadd.f32 0.0, %v4134
      %4136 = vmatmul.f32.gmra.mxu0 %v4069
      %v4137 = vpop.f32.mrf.mxu0
      %v4138 = vadd.f32 0.0, %v4137
      %4139 = vdwg.mxu0
      %v4140 = vadd.f32 %v4027, %v4089
      %v4141 = vadd.f32 %v4028, %v4112
      %v4142 = vadd.f32 %v4029, %v4135
      %v4143 = vadd.f32 %v4030, %v4092
      %v4144 = vadd.f32 %v4031, %v4115
      %v4145 = vadd.f32 %v4032, %v4138
      %v4146 = vmax.f32 %v4140, 0.0
      %v4147 = vmax.f32 %v4141, 0.0
      %v4148 = vmax.f32 %v4142, 0.0
      %v4149 = vmax.f32 %v4143, 0.0
      %v4150 = vmax.f32 %v4144, 0.0
      %v4151 = vmax.f32 %v4145, 0.0
      %v4152 = vld [vmem:[%s4] sm:$0xff]
      %v4153 = vld [vmem:[%s4 + $0x8] sm:$0xff]
      %s4154 = scalar_lea.vmem %s4, 16
      %v4155 = vld [vmem:[%s4154] sm:$0xff]
      %v4156 = vld [vmem:[%s4154 + $0x8] sm:$0xff]
      %4159 = vrot.lane.b32.xlu0 %v4146, 124
      %v4160 = vpop.permute.xlu0 %4159
      %4161 = vrot.lane.b32.xlu0 %v4149, 124
      %v4162 = vpop.permute.xlu0 %4161
      %v4166 = vsel %vm1529, %v4155, 0
      %v4169 = vsel %vm1529, %v4156, 0
      %4171 = vmatpush.msra.mxu0 0.0
      %4172 = vmatpush.msra.mxu0 0.0
      %4173 = vmatpush.msra.mxu0 0.0
      %4174 = vmatpush.msra.mxu0 0.0
      %4175 = vmatpush.msra.mxu0 0.0
      %4176 = vmatpush.msra.mxu0 0.0
      %4177 = vmatpush.msra.mxu0 0.0
      %4178 = vmatpush.msra.mxu0 0.0
      %4179 = vmatpush.msra.mxu0 0.0
      %4180 = vmatpush.msra.mxu0 0.0
      %4181 = vmatpush.msra.mxu0 0.0
      %4182 = vmatpush.msra.mxu0 0.0
      %4183 = vmatpush.msra.mxu0 0.0
      %4184 = vmatpush.msra.mxu0 0.0
      %4185 = vmatpush.msra.mxu0 %v4162
      %4186 = vmatpush.msra.mxu0 %v4160
      %4187 = vmatmul.f32.gmra.mxu0 %v4166
      %v4188 = vpop.f32.mrf.mxu0
      %v4189 = vadd.f32 0.0, %v4188
      %4190 = vmatmul.f32.gmra.mxu0 %v4169
      %v4191 = vpop.f32.mrf.mxu0
      %v4192 = vadd.f32 0.0, %v4191
      %4193 = vdwg.mxu0
      %v4195 = vsel %vm1529, %v4152, 0
      %v4198 = vsel %vm1529, %v4153, 0
      %4200 = vmatpush.msra.mxu0 0.0
      %4201 = vmatpush.msra.mxu0 0.0
      %4202 = vmatpush.msra.mxu0 0.0
      %4203 = vmatpush.msra.mxu0 0.0
      %4204 = vmatpush.msra.mxu0 0.0
      %4205 = vmatpush.msra.mxu0 0.0
      %4206 = vmatpush.msra.mxu0 0.0
      %4207 = vmatpush.msra.mxu0 0.0
      %4208 = vmatpush.msra.mxu0 0.0
      %4209 = vmatpush.msra.mxu0 0.0
      %4210 = vmatpush.msra.mxu0 0.0
      %4211 = vmatpush.msra.mxu0 0.0
      %4212 = vmatpush.msra.mxu0 0.0
      %4213 = vmatpush.msra.mxu0 0.0
      %4214 = vmatpush.msra.mxu0 %v4149
      %4215 = vmatpush.msra.mxu0 %v4146
      %4216 = vmatmul.f32.gmra.mxu0 %v4195
      %v4217 = vpop.f32.mrf.mxu0
      %v4218 = vadd.f32 %v4189, %v4217
      %4219 = vmatmul.f32.gmra.mxu0 %v4198
      %v4220 = vpop.f32.mrf.mxu0
      %v4221 = vadd.f32 %v4192, %v4220
      %4222 = vdwg.mxu0
      %s4223 = scalar_lea.vmem %s4, 32
      %v4224 = vld [vmem:[%s4223] sm:$0xff]
      %v4225 = vld [vmem:[%s4223 + $0x8] sm:$0xff]
      %4226 = vrot.lane.b32.xlu0 %v4146, 120
      %v4227 = vpop.permute.xlu0 %4226
      %4228 = vrot.lane.b32.xlu0 %v4149, 120
      %v4229 = vpop.permute.xlu0 %4228
      %v4233 = vsel %vm1529, %v4224, 0
      %v4236 = vsel %vm1529, %v4225, 0
      %4238 = vmatpush.msra.mxu0 0.0
      %4239 = vmatpush.msra.mxu0 0.0
      %4240 = vmatpush.msra.mxu0 0.0
      %4241 = vmatpush.msra.mxu0 0.0
      %4242 = vmatpush.msra.mxu0 0.0
      %4243 = vmatpush.msra.mxu0 0.0
      %4244 = vmatpush.msra.mxu0 0.0
      %4245 = vmatpush.msra.mxu0 0.0
      %4246 = vmatpush.msra.mxu0 0.0
      %4247 = vmatpush.msra.mxu0 0.0
      %4248 = vmatpush.msra.mxu0 0.0
      %4249 = vmatpush.msra.mxu0 0.0
      %4250 = vmatpush.msra.mxu0 0.0
      %4251 = vmatpush.msra.mxu0 0.0
      %4252 = vmatpush.msra.mxu0 %v4229
      %4253 = vmatpush.msra.mxu0 %v4227
      %4254 = vmatmul.f32.gmra.mxu0 %v4233
      %v4255 = vpop.f32.mrf.mxu0
      %v4256 = vadd.f32 0.0, %v4255
      %4257 = vmatmul.f32.gmra.mxu0 %v4236
      %v4258 = vpop.f32.mrf.mxu0
      %v4259 = vadd.f32 0.0, %v4258
      %4260 = vdwg.mxu0
      %v4261 = vadd.f32 %v4218, %v4256
      %v4262 = vadd.f32 %v4221, %v4259
      %s4263 = scalar_lea.vmem %s4, 48
      %v4264 = vld [vmem:[%s4263] sm:$0xff]
      %v4265 = vld [vmem:[%s4263 + $0x8] sm:$0xff]
      %4268 = vrot.lane.b32.xlu0 %v4146, 16
      %v4269 = vpop.permute.xlu0 %4268
      %4270 = vrot.lane.b32.xlu0 %v4147, 16
      %v4271 = vpop.permute.xlu0 %4270
      %4272 = vrot.lane.b32.xlu0 %v4149, 16
      %v4273 = vpop.permute.xlu0 %4272
      %4274 = vrot.lane.b32.xlu0 %v4150, 16
      %v4275 = vpop.permute.xlu0 %4274
      %v4276 = vsel %vm1529, %v4269, %v4271
      %v4277 = vsel %vm1529, %v4273, %v4275
      %v4281 = vsel %vm1529, %v4264, 0
      %v4284 = vsel %vm1529, %v4265, 0
      %4286 = vmatpush.msra.mxu0 0.0
      %4287 = vmatpush.msra.mxu0 0.0
      %4288 = vmatpush.msra.mxu0 0.0
      %4289 = vmatpush.msra.mxu0 0.0
      %4290 = vmatpush.msra.mxu0 0.0
      %4291 = vmatpush.msra.mxu0 0.0
      %4292 = vmatpush.msra.mxu0 0.0
      %4293 = vmatpush.msra.mxu0 0.0
      %4294 = vmatpush.msra.mxu0 0.0
      %4295 = vmatpush.msra.mxu0 0.0
      %4296 = vmatpush.msra.mxu0 0.0
      %4297 = vmatpush.msra.mxu0 0.0
      %4298 = vmatpush.msra.mxu0 0.0
      %4299 = vmatpush.msra.mxu0 0.0
      %4300 = vmatpush.msra.mxu0 %v4277
      %4301 = vmatpush.msra.mxu0 %v4276
      %4302 = vmatmul.f32.gmra.mxu0 %v4281
      %v4303 = vpop.f32.mrf.mxu0
      %v4304 = vadd.f32 0.0, %v4303
      %4305 = vmatmul.f32.gmra.mxu0 %v4284
      %v4306 = vpop.f32.mrf.mxu0
      %v4307 = vadd.f32 0.0, %v4306
      %4308 = vdwg.mxu0
      %v4309 = vadd.f32 %v4261, %v4304
      %v4310 = vadd.f32 %v4262, %v4307
      %s4311 = scalar_lea.vmem %s4, 64
      %v4312 = vld [vmem:[%s4311] sm:$0xff]
      %v4313 = vld [vmem:[%s4311 + $0x8] sm:$0xff]
      %4314 = vrot.lane.b32.xlu0 %v4146, 12
      %v4315 = vpop.permute.xlu0 %4314
      %4316 = vrot.lane.b32.xlu0 %v4147, 12
      %v4317 = vpop.permute.xlu0 %4316
      %4318 = vrot.lane.b32.xlu0 %v4149, 12
      %v4319 = vpop.permute.xlu0 %4318
      %4320 = vrot.lane.b32.xlu0 %v4150, 12
      %v4321 = vpop.permute.xlu0 %4320
      %v4322 = vsel %vm2854, %v4315, %v4317
      %v4323 = vsel %vm2854, %v4319, %v4321
      %v4327 = vsel %vm1529, %v4312, 0
      %v4330 = vsel %vm1529, %v4313, 0
      %4332 = vmatpush.msra.mxu0 0.0
      %4333 = vmatpush.msra.mxu0 0.0
      %4334 = vmatpush.msra.mxu0 0.0
      %4335 = vmatpush.msra.mxu0 0.0
      %4336 = vmatpush.msra.mxu0 0.0
      %4337 = vmatpush.msra.mxu0 0.0
      %4338 = vmatpush.msra.mxu0 0.0
      %4339 = vmatpush.msra.mxu0 0.0
      %4340 = vmatpush.msra.mxu0 0.0
      %4341 = vmatpush.msra.mxu0 0.0
      %4342 = vmatpush.msra.mxu0 0.0
      %4343 = vmatpush.msra.mxu0 0.0
      %4344 = vmatpush.msra.mxu0 0.0
      %4345 = vmatpush.msra.mxu0 0.0
      %4346 = vmatpush.msra.mxu0 %v4323
      %4347 = vmatpush.msra.mxu0 %v4322
      %4348 = vmatmul.f32.gmra.mxu0 %v4327
      %v4349 = vpop.f32.mrf.mxu0
      %v4350 = vadd.f32 0.0, %v4349
      %4351 = vmatmul.f32.gmra.mxu0 %v4330
      %v4352 = vpop.f32.mrf.mxu0
      %v4353 = vadd.f32 0.0, %v4352
      %4354 = vdwg.mxu0
      %v4355 = vadd.f32 %v4309, %v4350
      %v4356 = vadd.f32 %v4310, %v4353
      %s4357 = scalar_lea.vmem %s4, 80
      %v4358 = vld [vmem:[%s4357] sm:$0xff]
      %v4359 = vld [vmem:[%s4357 + $0x8] sm:$0xff]
      %4360 = vrot.lane.b32.xlu0 %v4146, 8
      %v4361 = vpop.permute.xlu0 %4360
      %4362 = vrot.lane.b32.xlu0 %v4147, 8
      %v4363 = vpop.permute.xlu0 %4362
      %4364 = vrot.lane.b32.xlu0 %v4149, 8
      %v4365 = vpop.permute.xlu0 %4364
      %4366 = vrot.lane.b32.xlu0 %v4150, 8
      %v4367 = vpop.permute.xlu0 %4366
      %v4368 = vsel %vm3711, %v4361, %v4363
      %v4369 = vsel %vm3711, %v4365, %v4367
      %v4373 = vsel %vm1529, %v4358, 0
      %v4376 = vsel %vm1529, %v4359, 0
      %4378 = vmatpush.msra.mxu0 0.0
      %4379 = vmatpush.msra.mxu0 0.0
      %4380 = vmatpush.msra.mxu0 0.0
      %4381 = vmatpush.msra.mxu0 0.0
      %4382 = vmatpush.msra.mxu0 0.0
      %4383 = vmatpush.msra.mxu0 0.0
      %4384 = vmatpush.msra.mxu0 0.0
      %4385 = vmatpush.msra.mxu0 0.0
      %4386 = vmatpush.msra.mxu0 0.0
      %4387 = vmatpush.msra.mxu0 0.0
      %4388 = vmatpush.msra.mxu0 0.0
      %4389 = vmatpush.msra.mxu0 0.0
      %4390 = vmatpush.msra.mxu0 0.0
      %4391 = vmatpush.msra.mxu0 0.0
      %4392 = vmatpush.msra.mxu0 %v4369
      %4393 = vmatpush.msra.mxu0 %v4368
      %4394 = vmatmul.f32.gmra.mxu0 %v4373
      %v4395 = vpop.f32.mrf.mxu0
      %v4396 = vadd.f32 0.0, %v4395
      %4397 = vmatmul.f32.gmra.mxu0 %v4376
      %v4398 = vpop.f32.mrf.mxu0
      %v4399 = vadd.f32 0.0, %v4398
      %4400 = vdwg.mxu0
      %v4401 = vadd.f32 %v4355, %v4396
      %v4402 = vadd.f32 %v4356, %v4399
      %s4403 = scalar_lea.vmem %s4, 96
      %v4404 = vld [vmem:[%s4403] sm:$0xff]
      %v4405 = vld [vmem:[%s4403 + $0x8] sm:$0xff]
      %4408 = vrot.lane.b32.xlu0 %v4147, 32
      %v4409 = vpop.permute.xlu0 %4408
      %4410 = vrot.lane.b32.xlu0 %v4148, 32
      %v4411 = vpop.permute.xlu0 %4410
      %4412 = vrot.lane.b32.xlu0 %v4150, 32
      %v4413 = vpop.permute.xlu0 %4412
      %4414 = vrot.lane.b32.xlu0 %v4151, 32
      %v4415 = vpop.permute.xlu0 %4414
      %v4416 = vsel %vm3826, %v4409, %v4411
      %v4417 = vsel %vm3826, %v4413, %v4415
      %v4421 = vsel %vm1529, %v4404, 0
      %v4424 = vsel %vm1529, %v4405, 0
      %4426 = vmatpush.msra.mxu0 0.0
      %4427 = vmatpush.msra.mxu0 0.0
      %4428 = vmatpush.msra.mxu0 0.0
      %4429 = vmatpush.msra.mxu0 0.0
      %4430 = vmatpush.msra.mxu0 0.0
      %4431 = vmatpush.msra.mxu0 0.0
      %4432 = vmatpush.msra.mxu0 0.0
      %4433 = vmatpush.msra.mxu0 0.0
      %4434 = vmatpush.msra.mxu0 0.0
      %4435 = vmatpush.msra.mxu0 0.0
      %4436 = vmatpush.msra.mxu0 0.0
      %4437 = vmatpush.msra.mxu0 0.0
      %4438 = vmatpush.msra.mxu0 0.0
      %4439 = vmatpush.msra.mxu0 0.0
      %4440 = vmatpush.msra.mxu0 %v4417
      %4441 = vmatpush.msra.mxu0 %v4416
      %4442 = vmatmul.f32.gmra.mxu0 %v4421
      %v4443 = vpop.f32.mrf.mxu0
      %v4444 = vadd.f32 0.0, %v4443
      %4445 = vmatmul.f32.gmra.mxu0 %v4424
      %v4446 = vpop.f32.mrf.mxu0
      %v4447 = vadd.f32 0.0, %v4446
      %4448 = vdwg.mxu0
      %v4449 = vadd.f32 %v4401, %v4444
      %v4450 = vadd.f32 %v4402, %v4447
      %s4451 = scalar_lea.vmem %s4, 112
      %v4452 = vld [vmem:[%s4451] sm:$0xff]
      %v4453 = vld [vmem:[%s4451 + $0x8] sm:$0xff]
      %4454 = vrot.lane.b32.xlu0 %v4147, 28
      %v4455 = vpop.permute.xlu0 %4454
      %4456 = vrot.lane.b32.xlu0 %v4148, 28
      %v4457 = vpop.permute.xlu0 %4456
      %4458 = vrot.lane.b32.xlu0 %v4150, 28
      %v4459 = vpop.permute.xlu0 %4458
      %4460 = vrot.lane.b32.xlu0 %v4151, 28
      %v4461 = vpop.permute.xlu0 %4460
      %v4462 = vsel %vm3939, %v4455, %v4457
      %v4463 = vsel %vm3939, %v4459, %v4461
      %v4467 = vsel %vm1529, %v4452, 0
      %v4470 = vsel %vm1529, %v4453, 0
      %4472 = vmatpush.msra.mxu0 0.0
      %4473 = vmatpush.msra.mxu0 0.0
      %4474 = vmatpush.msra.mxu0 0.0
      %4475 = vmatpush.msra.mxu0 0.0
      %4476 = vmatpush.msra.mxu0 0.0
      %4477 = vmatpush.msra.mxu0 0.0
      %4478 = vmatpush.msra.mxu0 0.0
      %4479 = vmatpush.msra.mxu0 0.0
      %4480 = vmatpush.msra.mxu0 0.0
      %4481 = vmatpush.msra.mxu0 0.0
      %4482 = vmatpush.msra.mxu0 0.0
      %4483 = vmatpush.msra.mxu0 0.0
      %4484 = vmatpush.msra.mxu0 0.0
      %4485 = vmatpush.msra.mxu0 0.0
      %4486 = vmatpush.msra.mxu0 %v4463
      %4487 = vmatpush.msra.mxu0 %v4462
      %4488 = vmatmul.f32.gmra.mxu0 %v4467
      %v4489 = vpop.f32.mrf.mxu0
      %v4490 = vadd.f32 0.0, %v4489
      %4491 = vmatmul.f32.gmra.mxu0 %v4470
      %v4492 = vpop.f32.mrf.mxu0
      %v4493 = vadd.f32 0.0, %v4492
      %4494 = vdwg.mxu0
      %v4495 = vadd.f32 %v4449, %v4490
      %v4496 = vadd.f32 %v4450, %v4493
      %s4497 = scalar_lea.vmem %s4, 128
      %v4498 = vld [vmem:[%s4497] sm:$0xff]
      %v4499 = vld [vmem:[%s4497 + $0x8] sm:$0xff]
      %4500 = vrot.lane.b32.xlu0 %v4147, 24
      %v4501 = vpop.permute.xlu0 %4500
      %4502 = vrot.lane.b32.xlu0 %v4148, 24
      %v4503 = vpop.permute.xlu0 %4502
      %4504 = vrot.lane.b32.xlu0 %v4150, 24
      %v4505 = vpop.permute.xlu0 %4504
      %4506 = vrot.lane.b32.xlu0 %v4151, 24
      %v4507 = vpop.permute.xlu0 %4506
      %v4508 = vsel %vm4052, %v4501, %v4503
      %v4509 = vsel %vm4052, %v4505, %v4507
      %v4513 = vsel %vm1529, %v4498, 0
      %v4516 = vsel %vm1529, %v4499, 0
      %4518 = vmatpush.msra.mxu0 0.0
      %4519 = vmatpush.msra.mxu0 0.0
      %4520 = vmatpush.msra.mxu0 0.0
      %4521 = vmatpush.msra.mxu0 0.0
      %4522 = vmatpush.msra.mxu0 0.0
      %4523 = vmatpush.msra.mxu0 0.0
      %4524 = vmatpush.msra.mxu0 0.0
      %4525 = vmatpush.msra.mxu0 0.0
      %4526 = vmatpush.msra.mxu0 0.0
      %4527 = vmatpush.msra.mxu0 0.0
      %4528 = vmatpush.msra.mxu0 0.0
      %4529 = vmatpush.msra.mxu0 0.0
      %4530 = vmatpush.msra.mxu0 0.0
      %4531 = vmatpush.msra.mxu0 0.0
      %4532 = vmatpush.msra.mxu0 %v4509
      %4533 = vmatpush.msra.mxu0 %v4508
      %4534 = vmatmul.f32.gmra.mxu0 %v4513
      %v4535 = vpop.f32.mrf.mxu0
      %v4536 = vadd.f32 0.0, %v4535
      %4537 = vmatmul.f32.gmra.mxu0 %v4516
      %v4538 = vpop.f32.mrf.mxu0
      %v4539 = vadd.f32 0.0, %v4538
      %4540 = vdwg.mxu0
      %v4541 = vadd.f32 %v4495, %v4536
      %v4542 = vadd.f32 %v4496, %v4539
      %v4543 = vmax.f32 %v4541, 0.0
      %v4544 = vmax.f32 %v4542, 0.0
      %v4545 = vld [vmem:[%s9] sm:$0xff]
      %v4546 = vld [vmem:[%s9 + $0x8] sm:$0xff]
      %4548 = vset.pattern.permute.xlu0 0
      %4549 = vperm.xlu0 %4548, %v4545
      %v4550 = vpop.permute.xlu0 %4549
      %4553 = vset.pattern.permute.xlu0 0
      %4554 = vperm.xlu0 %4553, %v4546
      %v4555 = vpop.permute.xlu0 %4554
      %v4557 = vmul.f32 %v4543, %v4550
      %v4558 = vmul.f32 %v4544, %v4555
      %v4559 = vld [vmem:[%s10] sm:$0xff]
      %v4560 = vld [vmem:[%s10 + $0x8] sm:$0xff]
      %4562 = vset.pattern.permute.xlu0 0
      %4563 = vperm.xlu0 %4562, %v4559
      %v4564 = vpop.permute.xlu0 %4563
      %4567 = vset.pattern.permute.xlu0 0
      %4568 = vperm.xlu0 %4567, %v4560
      %v4569 = vpop.permute.xlu0 %4568
      %v4571 = vadd.f32 %v4557, %v4564
      %v4572 = vadd.f32 %v4558, %v4569
      %v4573 = vld [vmem:[%s11] sm:$0xff]
      %v4574 = vld [vmem:[%s11 + $0x8] sm:$0x3]
      %v4576 = vsel %vm1529, %v4573, 0
      %v4579 = vsel %vm1529, %v4574, 0
      %4581 = vmatpush.msra.mxu0 0.0
      %4582 = vmatpush.msra.mxu0 0.0
      %4583 = vmatpush.msra.mxu0 0.0
      %4584 = vmatpush.msra.mxu0 0.0
      %4585 = vmatpush.msra.mxu0 0.0
      %4586 = vmatpush.msra.mxu0 0.0
      %4587 = vmatpush.msra.mxu0 0.0
      %4588 = vmatpush.msra.mxu0 0.0
      %4589 = vmatpush.msra.mxu0 0.0
      %4590 = vmatpush.msra.mxu0 0.0
      %4591 = vmatpush.msra.mxu0 0.0
      %4592 = vmatpush.msra.mxu0 0.0
      %4593 = vmatpush.msra.mxu0 0.0
      %4594 = vmatpush.msra.mxu0 0.0
      %4595 = vmatpush.msra.mxu0 %v4572
      %4596 = vmatpush.msra.mxu0 %v4571
      %4597 = vmatmul.f32.gmra.mxu0 %v4576
      %v4598 = vpop.f32.mrf.mxu0
      %v4599 = vadd.f32 0.0, %v4598
      %4600 = vmatmul.f32.gmra.mxu0 %v4579
      %v4601 = vpop.f32.mrf.mxu0
      %v4602 = vadd.f32 0.0, %v4601
      %4603 = vdwg.mxu0
      %v4604 = vld [vmem:[%s12] sm:$0xff]
      %v4605 = vld [vmem:[%s12 + $0x8] sm:$0x3]
      %v4606 = vadd.f32 %v4599, %v4604
      %v4607 = vadd.f32 %v4602, %v4605
      %v4608 = vmax.f32 %v4606, 0.0
      %v4609 = vmax.f32 %v4607, 0.0
      %vm4610 = vcmask 7168
      %v4611 = vsel %vm4610, %v4608, -inf
      %vm4612 = vcmask 1024
      %v4613 = vsel %vm4612, %v4609, -inf
      %v4614 = vmax.f32 %v4611, %v4613
      %v4615 = vrot.slane %v4614, 4
      %v4616 = vmax.f32 %v4614, %v4615
      %v4617 = vrot.slane %v4616, 2
      %v4618 = vmax.f32 %v4616, %v4617
      %v4619 = vrot.slane %v4618, 1
      %v4620 = vmax.f32 %v4618, %v4619
      %v4621 = vsub.f32 %v4608, %v4620
      %v4622 = vsub.f32 %v4609, %v4620
      %v4623 = vmul.f32 %v4621, 1.442695
      %v4624 = vpow.pop %v4623
      %v4625 = vmul.f32 %v4622, 1.442695
      %v4626 = vpow.pop %v4625
      %v4627 = vsel %vm4610, %v4624, 0.0
      %v4628 = vsel %vm4612, %v4626, 0.0
      %v4629 = vadd.f32 %v4627, %v4628
      %v4630 = vrot.slane %v4629, 4
      %v4631 = vadd.f32 %v4629, %v4630
      %v4632 = vrot.slane %v4631, 2
      %v4633 = vadd.f32 %v4631, %v4632
      %v4634 = vrot.slane %v4633, 1
      %v4635 = vadd.f32 %v4633, %v4634
      %v4636 = vlog2.pop %v4635
      %v4637 = vmul.f32 %v4636, 0.6931472
      %v4638 = vadd.f32 %v4637, %v4620
      %v4639 = vsub.f32 %v4608, %v4638
      %v4640 = vsub.f32 %v4609, %v4638
      %4641 = vst.msk [vmem:[%s437] sm:$0xff] %vm4610, %v4639
      %4642 = vst.msk [vmem:[%s437 + $0x8] sm:$0x3] %vm4612, %v4640
      %p4643 = scmp.lt.s32.totalorder %s24, 1
      %s4644 = scalar_select %p4643, %s24, 1
      %s4645 = smul.addr %s4644, 2
      %s4646 = smul.addr %s4645, 8
      %s4647 = scalar_lea.vmem %s13, %s4646
      // Predicated region
      $region73: #{model_forward.1} parent=71 // pred_check
        %p4648 = pneg %p320
      $region74: #{model_forward.1} parent=71 // pred_check_branch
        %4650 = sbr.rel (%p4648) target = $region76
      $region75: #{model_forward.1} parent=71 // pred_region
        _
      $region76: #{model_forward.1} parent=71 // pred_fallthru
        _
    $region72: #{model_forward.1} parent=5 // pred_fallthru
      _
    %p4651 = scmp.le.s32.totalorder 2, %s19
    // Predicated region
    $region77: #{model_forward.1} parent=5 // pred_check
      %p4652 = pneg %p4651
    $region78: #{model_forward.1} parent=5 // pred_check_branch
      %4654 = sbr.rel (%p4652) target = $region80
    $region79: #{model_forward.1} parent=5 // pred_region
      %s4655 = ssub.s32 %s19, 2
      // Predicated region
      $region81: #{model_forward.1} parent=79 // pred_check
        %p4656 = pneg %p326
      $region82: #{model_forward.1} parent=79 // pred_check_branch
        %4658 = sbr.rel (%p4656) target = $region84
      $region83: #{model_forward.1} parent=79 // pred_region
        %p4659 = scmp.lt.s32.totalorder %s25, 1
        %s4660 = scalar_select %p4659, %s25, 1
        %s4661 = smul.addr %s4660, 2
        %s4662 = smul.addr %s4661, 8
        %s4663 = scalar_lea.vmem %s13, %s4662
      $region84: #{model_forward.1} parent=79 // pred_fallthru
        _
    $region80: #{model_forward.1} parent=5 // pred_fallthru
      _
  $region6: #{model_forward.1} parent=0 // loop_footer
    %s23 = sadd.s32 1, %s19
  $region7: #{model_forward.1} parent=0 // loop_footer_branch
    %18 = sbr.rel target = $region3
  $region8: #{model_forward.1} parent=0 // loop_exit
    _

</llo_original>
